<compile_context>
chip_gen: v7x
topology: tpu7x:2x2x1
jax: 0.10.0
libtpu: 0.0.40
codegen_flags: <defaults>
</compile_context>

<pallas_src>
import jax
import jax.numpy as jnp
from jax.experimental import pallas as pl
from jax.experimental.pallas import tpu as pltpu

EPS = 1e-5  # nn.InstanceNorm2d default eps


def _reflect_pad(pad_ref, a, H, W):
    """Write ReflectionPad2d(1) of `a` (H, W, C) into pad_ref (H+2, W+2, C).

    Every border value is computed from the value `a` (no pad_ref read-back,
    so padding does not serialize against the subsequent fold loads)."""
    ab = a.astype(pad_ref.dtype)
    # interior
    pad_ref[1:H + 1, 1:W + 1, :] = ab
    # mirrored top / bottom rows (reflection excludes the edge itself)
    pad_ref[0:1, 1:W + 1, :] = ab[1:2]
    pad_ref[H + 1:H + 2, 1:W + 1, :] = ab[H - 2:H - 1]
    # mirrored left / right columns
    pad_ref[1:H + 1, 0:1, :] = ab[:, 1:2]
    pad_ref[1:H + 1, W + 1:W + 2, :] = ab[:, W - 2:W - 1]
    # corners
    pad_ref[0:1, 0:1, :] = ab[1:2, 1:2]
    pad_ref[0:1, W + 1:W + 2, :] = ab[1:2, W - 2:W - 1]
    pad_ref[H + 1:H + 2, 0:1, :] = ab[H - 2:H - 1, 1:2]
    pad_ref[H + 1:H + 2, W + 1:W + 2, :] = ab[H - 2:H - 1, W - 2:W - 1]


def _fold_dx(b_ref, a_ref, H, W, C):
    """Fold the 3 horizontal taps into channels (bf16 im2col along W):
        b_ref[r, w, dx*C:(dx+1)*C] = a_ref[r, w+dx, :]

    Destination stores span the full sublane (W) range (only the lane offset
    changes), so they are always aligned; the only shifted accesses left are
    these 3 reads of the f32 pad scratch per conv (was 6 misaligned window
    slices + relayout reshapes before)."""
    for dx in range(3):
        b_ref[:, :, dx * C:(dx + 1) * C] = (
            a_ref[:, dx:dx + W, :].astype(b_ref.dtype))


def _conv3x3(acc_ref, b_ref, w_ref, H, W, C):
    """3x3 VALID conv from the dx-folded scratch: 3 MXU matmuls with K = 3C.

    b_ref: (H+2, W, 3C) bf16; w_ref: (3, 3C, C) bf16, indexed (dy, dx*C+ci, co).
    Accumulates f32 into acc_ref (H*W, C). No conv bias: the affine-free
    InstanceNorm that follows removes any per-channel constant exactly."""
    for dy in range(3):
        # leading-dim offset only; with W % 8 == 0 the (H, W, 3C) -> (H*W, 3C)
        # collapse is layout-preserving (correct for any W).
        lhs = b_ref[dy:dy + H, :, :].reshape(H * W, 3 * C)
        p = jnp.dot(lhs, w_ref[dy, :, :], preferred_element_type=jnp.float32)
        if dy == 0:
            acc_ref[...] = p
        else:
            acc_ref[...] += p


def _instance_norm(h, n_pix):
    """Affine-free per-channel instance norm on (n_pix, C); fused 1-pass stats."""
    inv_n = 1.0 / n_pix
    s1 = jnp.sum(h, axis=0, keepdims=True)
    s2 = jnp.sum(h * h, axis=0, keepdims=True)
    mean = s1 * inv_n
    var = jnp.maximum(s2 * inv_n - mean * mean, 0.0)
    return (h - mean) * jax.lax.rsqrt(var + EPS)


def resnet_block_kernel(x_ref, w1_ref, w2_ref, o_ref, pad_a, pad_b, acc):
    # One image of the batch per grid step.
    H, W, C = x_ref.shape
    n_pix = H * W

    # ---- conv1 -> InstanceNorm -> ReLU --------------------------------------
    _reflect_pad(pad_a, x_ref[...], H, W)
    _fold_dx(pad_b, pad_a, H, W, C)
    _conv3x3(acc, pad_b, w1_ref, H, W, C)
    h = jnp.maximum(_instance_norm(acc[...], n_pix), 0.0)

    # ---- reflect-pad + fold the intermediate into the SAME scratches --------
    _reflect_pad(pad_a, h.reshape(H, W, C), H, W)
    _fold_dx(pad_b, pad_a, H, W, C)

    # ---- conv2 -> InstanceNorm -> residual -----------------------------------
    _conv3x3(acc, pad_b, w2_ref, H, W, C)
    h2 = _instance_norm(acc[...], n_pix)
    out = x_ref[...].astype(jnp.float32) + h2.reshape(H, W, C)
    o_ref[...] = out.astype(o_ref.dtype)


def _vmem_capacity_bytes():
    try:
        return int(pltpu.get_tpu_info().vmem_capacity_bytes)
    except Exception:
        return 64 * 1024 * 1024  # conservative fallback: v7x per-TC VMEM


def resnet_block(x_nhwc, w1, b1, w2, b2):
    """x_nhwc: (N, H, W, C); w*: (3,3,C,C) HWIO; b*: (C,).

    b1/b2 are accepted for API parity with nn.Conv2d(bias=True) but are NOT
    sent to the kernel: with affine-free InstanceNorm immediately after each
    conv, a per-channel constant bias is cancelled exactly by the mean
    subtraction, so the output is mathematically identical."""
    del b1, b2
    N, H, W, C = x_nhwc.shape
    # Fold (kx, Ci) -> K = 3C so each dy is a single deep matmul on the MXU.
    w1f = w1.reshape(3, 3 * C, C).astype(jnp.bfloat16)
    w2f = w2.reshape(3, 3 * C, C).astype(jnp.bfloat16)

    # Scoped-VMEM budget, derived per TPU generation, keeping >=25% headroom.
    img_f32 = H * W * C * 4
    est = (4 * img_f32                       # x / out blocks, double-buffered
           + 4 * img_f32                     # f32 conv accumulator + IN temps
           + (H + 2) * (W + 2) * C * 4       # f32 reflect-pad scratch
           + (H + 2) * W * 3 * C * 2         # bf16 dx-folded im2col scratch
           + 2 * 2 * 3 * 3 * C * C * 2)      # two bf16 weights, double-buffered
    cap = _vmem_capacity_bytes()
    vmem_limit = int(min(max(2 * est, 16 * 1024 * 1024), (cap * 3) // 4))

    return pl.pallas_call(
        resnet_block_kernel,
        out_shape=jax.ShapeDtypeStruct((N, H, W, C), x_nhwc.dtype),
        grid=(N,),
        in_specs=[
            pl.BlockSpec((None, H, W, C), lambda n: (n, 0, 0, 0)),
            pl.BlockSpec((3, 3 * C, C), lambda n: (0, 0, 0)),
            pl.BlockSpec((3, 3 * C, C), lambda n: (0, 0, 0)),
        ],
        out_specs=pl.BlockSpec((None, H, W, C), lambda n: (n, 0, 0, 0)),
        scratch_shapes=[
            pltpu.VMEM((H + 2, W + 2, C), jnp.float32),    # reflect-padded image
            pltpu.VMEM((H + 2, W, 3 * C), jnp.bfloat16),   # dx-folded MXU operand
            pltpu.VMEM((H * W, C), jnp.float32),           # conv accumulator
        ],
        compiler_params=pltpu.CompilerParams(
            dimension_semantics=("parallel",),
            vmem_limit_bytes=vmem_limit),
    )(x_nhwc, w1f, w2f)


# ---------------- pure-JAX f32 reference (for correctness check) ----------------
def _instance_norm_ref(h):
    mean = h.mean(axis=(1, 2), keepdims=True)
    var = ((h - mean) ** 2).mean(axis=(1, 2), keepdims=True)
    return (h - mean) / jnp.sqrt(var + EPS)


def resnet_block_ref(x_nhwc, w1, b1, w2, b2):
    dn = ("NHWC", "HWIO", "NHWC")
    h = jnp.pad(x_nhwc, ((0, 0), (1, 1), (1, 1), (0, 0)), mode="reflect")
    h = jax.lax.conv_general_dilated(h, w1, (1, 1), "VALID",
                                     dimension_numbers=dn) + b1.reshape(1, 1, 1, -1)
    h = jnp.maximum(_instance_norm_ref(h), 0.0)
    h = jnp.pad(h, ((0, 0), (1, 1), (1, 1), (0, 0)), mode="reflect")
    h = jax.lax.conv_general_dilated(h, w2, (1, 1), "VALID",
                                     dimension_numbers=dn) + b2.reshape(1, 1, 1, -1)
    return x_nhwc + _instance_norm_ref(h)


if __name__ == "__main__":
    key = jax.random.PRNGKey(0)
    N, C, H, W = 2, 4, 16, 16  # PyTorch-style NCHW shape for the module input
    k1, k2, k3, k4, k5 = jax.random.split(key, 5)

    x_nchw = jax.random.normal(k1, (N, C, H, W), jnp.float32)
    x = jnp.transpose(x_nchw, (0, 2, 3, 1))  # -> NHWC

    # Conv2d(dim, dim, kernel_size=3, bias=True) params, PyTorch-style uniform init.
    fan_in = C * 3 * 3
    bound = float(1.0 / (fan_in ** 0.5))
    w1 = jax.random.uniform(k2, (3, 3, C, C), jnp.float32, -bound, bound)
    b1 = jax.random.uniform(k3, (C,), jnp.float32, -bound, bound)
    w2 = jax.random.uniform(k4, (3, 3, C, C), jnp.float32, -bound, bound)
    b2 = jax.random.uniform(k5, (C,), jnp.float32, -bound, bound)

    out = jax.block_until_ready(resnet_block(x, w1, b1, w2, b2))
    ref = resnet_block_ref(x, w1, b1, w2, b2)

    assert out.shape == (N, H, W, C)
    # Kernel uses bf16 MXU operands (f32 accumulation / norm math); reference
    # is pure f32, so the tolerance covers bf16 conv rounding. Any logic bug
    # (padding, fold, norm, residual) would produce O(0.5+) errors.
    assert jnp.allclose(out, ref, atol=6e-2, rtol=6e-2), (
        float(jnp.max(jnp.abs(out - ref))))
    print("KERNEL_OK")
</pallas_src>

<mosaic_0001>
module attributes {stable_mosaic.version = 11 : i64} {
  func.func @resnet_block_kernel(%arg0: i32, %arg1: memref<1x16x16x4xf32, #tpu.memory_space<vmem>>, %arg2: memref<3x12x4xbf16, #tpu.memory_space<vmem>>, %arg3: memref<3x12x4xbf16, #tpu.memory_space<vmem>>, %arg4: memref<1x16x16x4xf32, #tpu.memory_space<vmem>>, %arg5: memref<18x18x4xf32, #tpu.memory_space<vmem>>, %arg6: memref<18x16x12xbf16, #tpu.memory_space<vmem>>, %arg7: memref<256x4xf32, #tpu.memory_space<vmem>>) attributes {dimension_semantics = [#tpu.dimension_semantics<parallel>], iteration_bounds = array<i64: 2>, scalar_prefetch = 0 : i64, scratch_operands = 3 : i64, tpu.core_type = #tpu.core_type<tc>, window_params = [{transform_indices = @transform_0, window_bounds = array<i64: 1, 16, 16, 4>}, {pipeline_mode = #tpu.pipeline_mode<synchronous>, transform_indices = @transform_1, window_bounds = array<i64: 3, 12, 4>}, {pipeline_mode = #tpu.pipeline_mode<synchronous>, transform_indices = @transform_2, window_bounds = array<i64: 3, 12, 4>}, {transform_indices = @transform_3, window_bounds = array<i64: 1, 16, 16, 4>}]} {
    %c0 = arith.constant 0 : index
    %c0_0 = arith.constant 0 : index
    %c0_1 = arith.constant 0 : index
    %c0_2 = arith.constant 0 : index
    %0 = vector.load %arg1[%c0, %c0_0, %c0_1, %c0_2] : memref<1x16x16x4xf32, #tpu.memory_space<vmem>>, vector<1x16x16x4xf32>
    %1 = vector.shape_cast %0 : vector<1x16x16x4xf32> to vector<16x16x4xf32>
    %c1 = arith.constant 1 : index
    %c1_3 = arith.constant 1 : index
    %c0_4 = arith.constant 0 : index
    %2 = vector.load %arg5[%c1, %c1_3, %c0_4] : memref<18x18x4xf32, #tpu.memory_space<vmem>>, vector<16x16x4xf32>
    tpu.vector_store %arg5[%c1, %c1_3, %c0_4], %1 {strides = array<i32>} : memref<18x18x4xf32, #tpu.memory_space<vmem>>, vector<16x16x4xf32>,
    %3 = vector.extract_strided_slice %1 {offsets = [1, 0, 0], sizes = [1, 16, 4], strides = [1, 1, 1]} : vector<16x16x4xf32> to vector<1x16x4xf32>
    %c0_5 = arith.constant 0 : index
    %c1_6 = arith.constant 1 : index
    %c0_7 = arith.constant 0 : index
    %4 = vector.load %arg5[%c0_5, %c1_6, %c0_7] : memref<18x18x4xf32, #tpu.memory_space<vmem>>, vector<1x16x4xf32>
    tpu.vector_store %arg5[%c0_5, %c1_6, %c0_7], %3 {strides = array<i32>} : memref<18x18x4xf32, #tpu.memory_space<vmem>>, vector<1x16x4xf32>,
    %5 = vector.extract_strided_slice %1 {offsets = [14, 0, 0], sizes = [1, 16, 4], strides = [1, 1, 1]} : vector<16x16x4xf32> to vector<1x16x4xf32>
    %c17 = arith.constant 17 : index
    %c1_8 = arith.constant 1 : index
    %c0_9 = arith.constant 0 : index
    %6 = vector.load %arg5[%c17, %c1_8, %c0_9] : memref<18x18x4xf32, #tpu.memory_space<vmem>>, vector<1x16x4xf32>
    tpu.vector_store %arg5[%c17, %c1_8, %c0_9], %5 {strides = array<i32>} : memref<18x18x4xf32, #tpu.memory_space<vmem>>, vector<1x16x4xf32>,
    %7 = vector.extract_strided_slice %1 {offsets = [0, 1, 0], sizes = [16, 1, 4], strides = [1, 1, 1]} : vector<16x16x4xf32> to vector<16x1x4xf32>
    %c1_10 = arith.constant 1 : index
    %c0_11 = arith.constant 0 : index
    %c0_12 = arith.constant 0 : index
    %8 = vector.load %arg5[%c1_10, %c0_11, %c0_12] : memref<18x18x4xf32, #tpu.memory_space<vmem>>, vector<16x1x4xf32>
    tpu.vector_store %arg5[%c1_10, %c0_11, %c0_12], %7 {strides = array<i32>} : memref<18x18x4xf32, #tpu.memory_space<vmem>>, vector<16x1x4xf32>,
    %9 = vector.extract_strided_slice %1 {offsets = [0, 14, 0], sizes = [16, 1, 4], strides = [1, 1, 1]} : vector<16x16x4xf32> to vector<16x1x4xf32>
    %c1_13 = arith.constant 1 : index
    %c17_14 = arith.constant 17 : index
    %c0_15 = arith.constant 0 : index
    %10 = vector.load %arg5[%c1_13, %c17_14, %c0_15] : memref<18x18x4xf32, #tpu.memory_space<vmem>>, vector<16x1x4xf32>
    tpu.vector_store %arg5[%c1_13, %c17_14, %c0_15], %9 {strides = array<i32>} : memref<18x18x4xf32, #tpu.memory_space<vmem>>, vector<16x1x4xf32>,
    %11 = vector.extract_strided_slice %1 {offsets = [1, 1, 0], sizes = [1, 1, 4], strides = [1, 1, 1]} : vector<16x16x4xf32> to vector<1x1x4xf32>
    %c0_16 = arith.constant 0 : index
    %c0_17 = arith.constant 0 : index
    %c0_18 = arith.constant 0 : index
    %12 = vector.load %arg5[%c0_16, %c0_17, %c0_18] : memref<18x18x4xf32, #tpu.memory_space<vmem>>, vector<1x1x4xf32>
    tpu.vector_store %arg5[%c0_16, %c0_17, %c0_18], %11 {strides = array<i32>} : memref<18x18x4xf32, #tpu.memory_space<vmem>>, vector<1x1x4xf32>,
    %13 = vector.extract_strided_slice %1 {offsets = [1, 14, 0], sizes = [1, 1, 4], strides = [1, 1, 1]} : vector<16x16x4xf32> to vector<1x1x4xf32>
    %c0_19 = arith.constant 0 : index
    %c17_20 = arith.constant 17 : index
    %c0_21 = arith.constant 0 : index
    %14 = vector.load %arg5[%c0_19, %c17_20, %c0_21] : memref<18x18x4xf32, #tpu.memory_space<vmem>>, vector<1x1x4xf32>
    tpu.vector_store %arg5[%c0_19, %c17_20, %c0_21], %13 {strides = array<i32>} : memref<18x18x4xf32, #tpu.memory_space<vmem>>, vector<1x1x4xf32>,
    %15 = vector.extract_strided_slice %1 {offsets = [14, 1, 0], sizes = [1, 1, 4], strides = [1, 1, 1]} : vector<16x16x4xf32> to vector<1x1x4xf32>
    %c17_22 = arith.constant 17 : index
    %c0_23 = arith.constant 0 : index
    %c0_24 = arith.constant 0 : index
    %16 = vector.load %arg5[%c17_22, %c0_23, %c0_24] : memref<18x18x4xf32, #tpu.memory_space<vmem>>, vector<1x1x4xf32>
    tpu.vector_store %arg5[%c17_22, %c0_23, %c0_24], %15 {strides = array<i32>} : memref<18x18x4xf32, #tpu.memory_space<vmem>>, vector<1x1x4xf32>,
    %17 = vector.extract_strided_slice %1 {offsets = [14, 14, 0], sizes = [1, 1, 4], strides = [1, 1, 1]} : vector<16x16x4xf32> to vector<1x1x4xf32>
    %c17_25 = arith.constant 17 : index
    %c17_26 = arith.constant 17 : index
    %c0_27 = arith.constant 0 : index
    %18 = vector.load %arg5[%c17_25, %c17_26, %c0_27] : memref<18x18x4xf32, #tpu.memory_space<vmem>>, vector<1x1x4xf32>
    tpu.vector_store %arg5[%c17_25, %c17_26, %c0_27], %17 {strides = array<i32>} : memref<18x18x4xf32, #tpu.memory_space<vmem>>, vector<1x1x4xf32>,
    %c0_28 = arith.constant 0 : index
    %c0_29 = arith.constant 0 : index
    %c0_30 = arith.constant 0 : index
    %19 = vector.load %arg5[%c0_28, %c0_29, %c0_30] : memref<18x18x4xf32, #tpu.memory_space<vmem>>, vector<18x16x4xf32>
    %20 = arith.truncf %19 : vector<18x16x4xf32> to vector<18x16x4xbf16>
    %c0_31 = arith.constant 0 : index
    %c0_32 = arith.constant 0 : index
    %c0_33 = arith.constant 0 : index
    %21 = vector.load %arg6[%c0_31, %c0_32, %c0_33] : memref<18x16x12xbf16, #tpu.memory_space<vmem>>, vector<18x16x4xbf16>
    tpu.vector_store %arg6[%c0_31, %c0_32, %c0_33], %20 {strides = array<i32>} : memref<18x16x12xbf16, #tpu.memory_space<vmem>>, vector<18x16x4xbf16>,
    %c0_34 = arith.constant 0 : index
    %c1_35 = arith.constant 1 : index
    %c0_36 = arith.constant 0 : index
    %22 = vector.load %arg5[%c0_34, %c1_35, %c0_36] : memref<18x18x4xf32, #tpu.memory_space<vmem>>, vector<18x16x4xf32>
    %23 = arith.truncf %22 : vector<18x16x4xf32> to vector<18x16x4xbf16>
    %c0_37 = arith.constant 0 : index
    %c0_38 = arith.constant 0 : index
    %c4 = arith.constant 4 : index
    %24 = vector.load %arg6[%c0_37, %c0_38, %c4] : memref<18x16x12xbf16, #tpu.memory_space<vmem>>, vector<18x16x4xbf16>
    tpu.vector_store %arg6[%c0_37, %c0_38, %c4], %23 {strides = array<i32>} : memref<18x16x12xbf16, #tpu.memory_space<vmem>>, vector<18x16x4xbf16>,
    %c0_39 = arith.constant 0 : index
    %c2 = arith.constant 2 : index
    %c0_40 = arith.constant 0 : index
    %25 = vector.load %arg5[%c0_39, %c2, %c0_40] : memref<18x18x4xf32, #tpu.memory_space<vmem>>, vector<18x16x4xf32>
    %26 = arith.truncf %25 : vector<18x16x4xf32> to vector<18x16x4xbf16>
    %c0_41 = arith.constant 0 : index
    %c0_42 = arith.constant 0 : index
    %c8 = arith.constant 8 : index
    %27 = vector.load %arg6[%c0_41, %c0_42, %c8] : memref<18x16x12xbf16, #tpu.memory_space<vmem>>, vector<18x16x4xbf16>
    tpu.vector_store %arg6[%c0_41, %c0_42, %c8], %26 {strides = array<i32>} : memref<18x16x12xbf16, #tpu.memory_space<vmem>>, vector<18x16x4xbf16>,
    %c0_43 = arith.constant 0 : index
    %c0_44 = arith.constant 0 : index
    %c0_45 = arith.constant 0 : index
    %28 = vector.load %arg6[%c0_43, %c0_44, %c0_45] : memref<18x16x12xbf16, #tpu.memory_space<vmem>>, vector<16x16x12xbf16>
    %29 = vector.shape_cast %28 : vector<16x16x12xbf16> to vector<256x12xbf16>
    %c0_46 = arith.constant 0 : index
    %c0_47 = arith.constant 0 : index
    %c0_48 = arith.constant 0 : index
    %30 = vector.load %arg2[%c0_46, %c0_47, %c0_48] : memref<3x12x4xbf16, #tpu.memory_space<vmem>>, vector<1x12x4xbf16>
    %31 = vector.shape_cast %30 : vector<1x12x4xbf16> to vector<12x4xbf16>
    %cst = arith.constant dense<0.000000e+00> : vector<256x4xf32>
    %32 = tpu.matmul %29, %31, %cst {dimension_numbers = #tpu.dot_dimension_numbers<[1], [0], [0], [1], [0, 0, 1, 1], [], []>} : vector<256x12xbf16>, vector<12x4xbf16>, vector<256x4xf32> -> vector<256x4xf32>
    %c0_49 = arith.constant 0 : index
    %c0_50 = arith.constant 0 : index
    %33 = vector.load %arg7[%c0_49, %c0_50] : memref<256x4xf32, #tpu.memory_space<vmem>>, vector<256x4xf32>
    tpu.vector_store %arg7[%c0_49, %c0_50], %32 {strides = array<i32>} : memref<256x4xf32, #tpu.memory_space<vmem>>, vector<256x4xf32>,
    %c1_51 = arith.constant 1 : index
    %c0_52 = arith.constant 0 : index
    %c0_53 = arith.constant 0 : index
    %34 = vector.load %arg6[%c1_51, %c0_52, %c0_53] : memref<18x16x12xbf16, #tpu.memory_space<vmem>>, vector<16x16x12xbf16>
    %35 = vector.shape_cast %34 : vector<16x16x12xbf16> to vector<256x12xbf16>
    %c1_54 = arith.constant 1 : index
    %c0_55 = arith.constant 0 : index
    %c0_56 = arith.constant 0 : index
    %36 = vector.load %arg2[%c1_54, %c0_55, %c0_56] : memref<3x12x4xbf16, #tpu.memory_space<vmem>>, vector<1x12x4xbf16>
    %37 = vector.shape_cast %36 : vector<1x12x4xbf16> to vector<12x4xbf16>
    %cst_57 = arith.constant dense<0.000000e+00> : vector<256x4xf32>
    %38 = tpu.matmul %35, %37, %cst_57 {dimension_numbers = #tpu.dot_dimension_numbers<[1], [0], [0], [1], [0, 0, 1, 1], [], []>} : vector<256x12xbf16>, vector<12x4xbf16>, vector<256x4xf32> -> vector<256x4xf32>
    %c0_58 = arith.constant 0 : index
    %c0_59 = arith.constant 0 : index
    %39 = vector.load %arg7[%c0_58, %c0_59] : memref<256x4xf32, #tpu.memory_space<vmem>>, vector<256x4xf32>
    %40 = arith.addf %39, %38 : vector<256x4xf32>
    %c0_60 = arith.constant 0 : index
    %c0_61 = arith.constant 0 : index
    %41 = vector.load %arg7[%c0_60, %c0_61] : memref<256x4xf32, #tpu.memory_space<vmem>>, vector<256x4xf32>
    tpu.vector_store %arg7[%c0_60, %c0_61], %40 {strides = array<i32>} : memref<256x4xf32, #tpu.memory_space<vmem>>, vector<256x4xf32>,
    %c2_62 = arith.constant 2 : index
    %c0_63 = arith.constant 0 : index
    %c0_64 = arith.constant 0 : index
    %42 = vector.load %arg6[%c2_62, %c0_63, %c0_64] : memref<18x16x12xbf16, #tpu.memory_space<vmem>>, vector<16x16x12xbf16>
    %43 = vector.shape_cast %42 : vector<16x16x12xbf16> to vector<256x12xbf16>
    %c2_65 = arith.constant 2 : index
    %c0_66 = arith.constant 0 : index
    %c0_67 = arith.constant 0 : index
    %44 = vector.load %arg2[%c2_65, %c0_66, %c0_67] : memref<3x12x4xbf16, #tpu.memory_space<vmem>>, vector<1x12x4xbf16>
    %45 = vector.shape_cast %44 : vector<1x12x4xbf16> to vector<12x4xbf16>
    %cst_68 = arith.constant dense<0.000000e+00> : vector<256x4xf32>
    %46 = tpu.matmul %43, %45, %cst_68 {dimension_numbers = #tpu.dot_dimension_numbers<[1], [0], [0], [1], [0, 0, 1, 1], [], []>} : vector<256x12xbf16>, vector<12x4xbf16>, vector<256x4xf32> -> vector<256x4xf32>
    %c0_69 = arith.constant 0 : index
    %c0_70 = arith.constant 0 : index
    %47 = vector.load %arg7[%c0_69, %c0_70] : memref<256x4xf32, #tpu.memory_space<vmem>>, vector<256x4xf32>
    %48 = arith.addf %47, %46 : vector<256x4xf32>
    %c0_71 = arith.constant 0 : index
    %c0_72 = arith.constant 0 : index
    %49 = vector.load %arg7[%c0_71, %c0_72] : memref<256x4xf32, #tpu.memory_space<vmem>>, vector<256x4xf32>
    tpu.vector_store %arg7[%c0_71, %c0_72], %48 {strides = array<i32>} : memref<256x4xf32, #tpu.memory_space<vmem>>, vector<256x4xf32>,
    %c0_73 = arith.constant 0 : index
    %c0_74 = arith.constant 0 : index
    %50 = vector.load %arg7[%c0_73, %c0_74] : memref<256x4xf32, #tpu.memory_space<vmem>>, vector<256x4xf32>
    %cst_75 = arith.constant dense<0.000000e+00> : vector<4xf32>
    %51 = vector.multi_reduction <add>, %50, %cst_75 [0] : vector<256x4xf32> to vector<4xf32>
    %52 = vector.shape_cast %51 : vector<4xf32> to vector<1x4xf32>
    %53 = arith.mulf %50, %50 : vector<256x4xf32>
    %cst_76 = arith.constant dense<0.000000e+00> : vector<4xf32>
    %54 = vector.multi_reduction <add>, %53, %cst_76 [0] : vector<256x4xf32> to vector<4xf32>
    %55 = vector.shape_cast %54 : vector<4xf32> to vector<1x4xf32>
    %cst_77 = arith.constant 3.906250e-03 : f32
    %56 = vector.broadcast %cst_77 : f32 to vector<1x4xf32>
    %57 = arith.mulf %52, %56 : vector<1x4xf32>
    %cst_78 = arith.constant 3.906250e-03 : f32
    %58 = vector.broadcast %cst_78 : f32 to vector<1x4xf32>
    %59 = arith.mulf %55, %58 : vector<1x4xf32>
    %60 = arith.mulf %57, %57 : vector<1x4xf32>
    %61 = arith.subf %59, %60 : vector<1x4xf32>
    %cst_79 = arith.constant 0.000000e+00 : f32
    %62 = vector.broadcast %cst_79 : f32 to vector<1x4xf32>
    %63 = arith.maximumf %61, %62 : vector<1x4xf32>
    %64 = vector.broadcast %57 : vector<1x4xf32> to vector<256x4xf32>
    %65 = arith.subf %50, %64 : vector<256x4xf32>
    %cst_80 = arith.constant 9.99999974E-6 : f32
    %66 = vector.broadcast %cst_80 : f32 to vector<1x4xf32>
    %67 = arith.addf %63, %66 : vector<1x4xf32>
    %68 = math.rsqrt %67 : vector<1x4xf32>
    %69 = vector.broadcast %68 : vector<1x4xf32> to vector<256x4xf32>
    %70 = arith.mulf %65, %69 : vector<256x4xf32>
    %cst_81 = arith.constant 0.000000e+00 : f32
    %71 = vector.broadcast %cst_81 : f32 to vector<256x4xf32>
    %72 = arith.maximumf %70, %71 : vector<256x4xf32>
    %73 = vector.shape_cast %72 : vector<256x4xf32> to vector<16x16x4xf32>
    %c1_82 = arith.constant 1 : index
    %c1_83 = arith.constant 1 : index
    %c0_84 = arith.constant 0 : index
    %74 = vector.load %arg5[%c1_82, %c1_83, %c0_84] : memref<18x18x4xf32, #tpu.memory_space<vmem>>, vector<16x16x4xf32>
    tpu.vector_store %arg5[%c1_82, %c1_83, %c0_84], %73 {strides = array<i32>} : memref<18x18x4xf32, #tpu.memory_space<vmem>>, vector<16x16x4xf32>,
    %75 = vector.extract_strided_slice %73 {offsets = [1, 0, 0], sizes = [1, 16, 4], strides = [1, 1, 1]} : vector<16x16x4xf32> to vector<1x16x4xf32>
    %c0_85 = arith.constant 0 : index
    %c1_86 = arith.constant 1 : index
    %c0_87 = arith.constant 0 : index
    %76 = vector.load %arg5[%c0_85, %c1_86, %c0_87] : memref<18x18x4xf32, #tpu.memory_space<vmem>>, vector<1x16x4xf32>
    tpu.vector_store %arg5[%c0_85, %c1_86, %c0_87], %75 {strides = array<i32>} : memref<18x18x4xf32, #tpu.memory_space<vmem>>, vector<1x16x4xf32>,
    %77 = vector.extract_strided_slice %73 {offsets = [14, 0, 0], sizes = [1, 16, 4], strides = [1, 1, 1]} : vector<16x16x4xf32> to vector<1x16x4xf32>
    %c17_88 = arith.constant 17 : index
    %c1_89 = arith.constant 1 : index
    %c0_90 = arith.constant 0 : index
    %78 = vector.load %arg5[%c17_88, %c1_89, %c0_90] : memref<18x18x4xf32, #tpu.memory_space<vmem>>, vector<1x16x4xf32>
    tpu.vector_store %arg5[%c17_88, %c1_89, %c0_90], %77 {strides = array<i32>} : memref<18x18x4xf32, #tpu.memory_space<vmem>>, vector<1x16x4xf32>,
    %79 = vector.extract_strided_slice %73 {offsets = [0, 1, 0], sizes = [16, 1, 4], strides = [1, 1, 1]} : vector<16x16x4xf32> to vector<16x1x4xf32>
    %c1_91 = arith.constant 1 : index
    %c0_92 = arith.constant 0 : index
    %c0_93 = arith.constant 0 : index
    %80 = vector.load %arg5[%c1_91, %c0_92, %c0_93] : memref<18x18x4xf32, #tpu.memory_space<vmem>>, vector<16x1x4xf32>
    tpu.vector_store %arg5[%c1_91, %c0_92, %c0_93], %79 {strides = array<i32>} : memref<18x18x4xf32, #tpu.memory_space<vmem>>, vector<16x1x4xf32>,
    %81 = vector.extract_strided_slice %73 {offsets = [0, 14, 0], sizes = [16, 1, 4], strides = [1, 1, 1]} : vector<16x16x4xf32> to vector<16x1x4xf32>
    %c1_94 = arith.constant 1 : index
    %c17_95 = arith.constant 17 : index
    %c0_96 = arith.constant 0 : index
    %82 = vector.load %arg5[%c1_94, %c17_95, %c0_96] : memref<18x18x4xf32, #tpu.memory_space<vmem>>, vector<16x1x4xf32>
    tpu.vector_store %arg5[%c1_94, %c17_95, %c0_96], %81 {strides = array<i32>} : memref<18x18x4xf32, #tpu.memory_space<vmem>>, vector<16x1x4xf32>,
    %83 = vector.extract_strided_slice %73 {offsets = [1, 1, 0], sizes = [1, 1, 4], strides = [1, 1, 1]} : vector<16x16x4xf32> to vector<1x1x4xf32>
    %c0_97 = arith.constant 0 : index
    %c0_98 = arith.constant 0 : index
    %c0_99 = arith.constant 0 : index
    %84 = vector.load %arg5[%c0_97, %c0_98, %c0_99] : memref<18x18x4xf32, #tpu.memory_space<vmem>>, vector<1x1x4xf32>
    tpu.vector_store %arg5[%c0_97, %c0_98, %c0_99], %83 {strides = array<i32>} : memref<18x18x4xf32, #tpu.memory_space<vmem>>, vector<1x1x4xf32>,
    %85 = vector.extract_strided_slice %73 {offsets = [1, 14, 0], sizes = [1, 1, 4], strides = [1, 1, 1]} : vector<16x16x4xf32> to vector<1x1x4xf32>
    %c0_100 = arith.constant 0 : index
    %c17_101 = arith.constant 17 : index
    %c0_102 = arith.constant 0 : index
    %86 = vector.load %arg5[%c0_100, %c17_101, %c0_102] : memref<18x18x4xf32, #tpu.memory_space<vmem>>, vector<1x1x4xf32>
    tpu.vector_store %arg5[%c0_100, %c17_101, %c0_102], %85 {strides = array<i32>} : memref<18x18x4xf32, #tpu.memory_space<vmem>>, vector<1x1x4xf32>,
    %87 = vector.extract_strided_slice %73 {offsets = [14, 1, 0], sizes = [1, 1, 4], strides = [1, 1, 1]} : vector<16x16x4xf32> to vector<1x1x4xf32>
    %c17_103 = arith.constant 17 : index
    %c0_104 = arith.constant 0 : index
    %c0_105 = arith.constant 0 : index
    %88 = vector.load %arg5[%c17_103, %c0_104, %c0_105] : memref<18x18x4xf32, #tpu.memory_space<vmem>>, vector<1x1x4xf32>
    tpu.vector_store %arg5[%c17_103, %c0_104, %c0_105], %87 {strides = array<i32>} : memref<18x18x4xf32, #tpu.memory_space<vmem>>, vector<1x1x4xf32>,
    %89 = vector.extract_strided_slice %73 {offsets = [14, 14, 0], sizes = [1, 1, 4], strides = [1, 1, 1]} : vector<16x16x4xf32> to vector<1x1x4xf32>
    %c17_106 = arith.constant 17 : index
    %c17_107 = arith.constant 17 : index
    %c0_108 = arith.constant 0 : index
    %90 = vector.load %arg5[%c17_106, %c17_107, %c0_108] : memref<18x18x4xf32, #tpu.memory_space<vmem>>, vector<1x1x4xf32>
    tpu.vector_store %arg5[%c17_106, %c17_107, %c0_108], %89 {strides = array<i32>} : memref<18x18x4xf32, #tpu.memory_space<vmem>>, vector<1x1x4xf32>,
    %c0_109 = arith.constant 0 : index
    %c0_110 = arith.constant 0 : index
    %c0_111 = arith.constant 0 : index
    %91 = vector.load %arg5[%c0_109, %c0_110, %c0_111] : memref<18x18x4xf32, #tpu.memory_space<vmem>>, vector<18x16x4xf32>
    %92 = arith.truncf %91 : vector<18x16x4xf32> to vector<18x16x4xbf16>
    %c0_112 = arith.constant 0 : index
    %c0_113 = arith.constant 0 : index
    %c0_114 = arith.constant 0 : index
    %93 = vector.load %arg6[%c0_112, %c0_113, %c0_114] : memref<18x16x12xbf16, #tpu.memory_space<vmem>>, vector<18x16x4xbf16>
    tpu.vector_store %arg6[%c0_112, %c0_113, %c0_114], %92 {strides = array<i32>} : memref<18x16x12xbf16, #tpu.memory_space<vmem>>, vector<18x16x4xbf16>,
    %c0_115 = arith.constant 0 : index
    %c1_116 = arith.constant 1 : index
    %c0_117 = arith.constant 0 : index
    %94 = vector.load %arg5[%c0_115, %c1_116, %c0_117] : memref<18x18x4xf32, #tpu.memory_space<vmem>>, vector<18x16x4xf32>
    %95 = arith.truncf %94 : vector<18x16x4xf32> to vector<18x16x4xbf16>
    %c0_118 = arith.constant 0 : index
    %c0_119 = arith.constant 0 : index
    %c4_120 = arith.constant 4 : index
    %96 = vector.load %arg6[%c0_118, %c0_119, %c4_120] : memref<18x16x12xbf16, #tpu.memory_space<vmem>>, vector<18x16x4xbf16>
    tpu.vector_store %arg6[%c0_118, %c0_119, %c4_120], %95 {strides = array<i32>} : memref<18x16x12xbf16, #tpu.memory_space<vmem>>, vector<18x16x4xbf16>,
    %c0_121 = arith.constant 0 : index
    %c2_122 = arith.constant 2 : index
    %c0_123 = arith.constant 0 : index
    %97 = vector.load %arg5[%c0_121, %c2_122, %c0_123] : memref<18x18x4xf32, #tpu.memory_space<vmem>>, vector<18x16x4xf32>
    %98 = arith.truncf %97 : vector<18x16x4xf32> to vector<18x16x4xbf16>
    %c0_124 = arith.constant 0 : index
    %c0_125 = arith.constant 0 : index
    %c8_126 = arith.constant 8 : index
    %99 = vector.load %arg6[%c0_124, %c0_125, %c8_126] : memref<18x16x12xbf16, #tpu.memory_space<vmem>>, vector<18x16x4xbf16>
    tpu.vector_store %arg6[%c0_124, %c0_125, %c8_126], %98 {strides = array<i32>} : memref<18x16x12xbf16, #tpu.memory_space<vmem>>, vector<18x16x4xbf16>,
    %c0_127 = arith.constant 0 : index
    %c0_128 = arith.constant 0 : index
    %c0_129 = arith.constant 0 : index
    %100 = vector.load %arg6[%c0_127, %c0_128, %c0_129] : memref<18x16x12xbf16, #tpu.memory_space<vmem>>, vector<16x16x12xbf16>
    %101 = vector.shape_cast %100 : vector<16x16x12xbf16> to vector<256x12xbf16>
    %c0_130 = arith.constant 0 : index
    %c0_131 = arith.constant 0 : index
    %c0_132 = arith.constant 0 : index
    %102 = vector.load %arg3[%c0_130, %c0_131, %c0_132] : memref<3x12x4xbf16, #tpu.memory_space<vmem>>, vector<1x12x4xbf16>
    %103 = vector.shape_cast %102 : vector<1x12x4xbf16> to vector<12x4xbf16>
    %cst_133 = arith.constant dense<0.000000e+00> : vector<256x4xf32>
    %104 = tpu.matmul %101, %103, %cst_133 {dimension_numbers = #tpu.dot_dimension_numbers<[1], [0], [0], [1], [0, 0, 1, 1], [], []>} : vector<256x12xbf16>, vector<12x4xbf16>, vector<256x4xf32> -> vector<256x4xf32>
    %c0_134 = arith.constant 0 : index
    %c0_135 = arith.constant 0 : index
    %105 = vector.load %arg7[%c0_134, %c0_135] : memref<256x4xf32, #tpu.memory_space<vmem>>, vector<256x4xf32>
    tpu.vector_store %arg7[%c0_134, %c0_135], %104 {strides = array<i32>} : memref<256x4xf32, #tpu.memory_space<vmem>>, vector<256x4xf32>,
    %c1_136 = arith.constant 1 : index
    %c0_137 = arith.constant 0 : index
    %c0_138 = arith.constant 0 : index
    %106 = vector.load %arg6[%c1_136, %c0_137, %c0_138] : memref<18x16x12xbf16, #tpu.memory_space<vmem>>, vector<16x16x12xbf16>
    %107 = vector.shape_cast %106 : vector<16x16x12xbf16> to vector<256x12xbf16>
    %c1_139 = arith.constant 1 : index
    %c0_140 = arith.constant 0 : index
    %c0_141 = arith.constant 0 : index
    %108 = vector.load %arg3[%c1_139, %c0_140, %c0_141] : memref<3x12x4xbf16, #tpu.memory_space<vmem>>, vector<1x12x4xbf16>
    %109 = vector.shape_cast %108 : vector<1x12x4xbf16> to vector<12x4xbf16>
    %cst_142 = arith.constant dense<0.000000e+00> : vector<256x4xf32>
    %110 = tpu.matmul %107, %109, %cst_142 {dimension_numbers = #tpu.dot_dimension_numbers<[1], [0], [0], [1], [0, 0, 1, 1], [], []>} : vector<256x12xbf16>, vector<12x4xbf16>, vector<256x4xf32> -> vector<256x4xf32>
    %c0_143 = arith.constant 0 : index
    %c0_144 = arith.constant 0 : index
    %111 = vector.load %arg7[%c0_143, %c0_144] : memref<256x4xf32, #tpu.memory_space<vmem>>, vector<256x4xf32>
    %112 = arith.addf %111, %110 : vector<256x4xf32>
    %c0_145 = arith.constant 0 : index
    %c0_146 = arith.constant 0 : index
    %113 = vector.load %arg7[%c0_145, %c0_146] : memref<256x4xf32, #tpu.memory_space<vmem>>, vector<256x4xf32>
    tpu.vector_store %arg7[%c0_145, %c0_146], %112 {strides = array<i32>} : memref<256x4xf32, #tpu.memory_space<vmem>>, vector<256x4xf32>,
    %c2_147 = arith.constant 2 : index
    %c0_148 = arith.constant 0 : index
    %c0_149 = arith.constant 0 : index
    %114 = vector.load %arg6[%c2_147, %c0_148, %c0_149] : memref<18x16x12xbf16, #tpu.memory_space<vmem>>, vector<16x16x12xbf16>
    %115 = vector.shape_cast %114 : vector<16x16x12xbf16> to vector<256x12xbf16>
    %c2_150 = arith.constant 2 : index
    %c0_151 = arith.constant 0 : index
    %c0_152 = arith.constant 0 : index
    %116 = vector.load %arg3[%c2_150, %c0_151, %c0_152] : memref<3x12x4xbf16, #tpu.memory_space<vmem>>, vector<1x12x4xbf16>
    %117 = vector.shape_cast %116 : vector<1x12x4xbf16> to vector<12x4xbf16>
    %cst_153 = arith.constant dense<0.000000e+00> : vector<256x4xf32>
    %118 = tpu.matmul %115, %117, %cst_153 {dimension_numbers = #tpu.dot_dimension_numbers<[1], [0], [0], [1], [0, 0, 1, 1], [], []>} : vector<256x12xbf16>, vector<12x4xbf16>, vector<256x4xf32> -> vector<256x4xf32>
    %c0_154 = arith.constant 0 : index
    %c0_155 = arith.constant 0 : index
    %119 = vector.load %arg7[%c0_154, %c0_155] : memref<256x4xf32, #tpu.memory_space<vmem>>, vector<256x4xf32>
    %120 = arith.addf %119, %118 : vector<256x4xf32>
    %c0_156 = arith.constant 0 : index
    %c0_157 = arith.constant 0 : index
    %121 = vector.load %arg7[%c0_156, %c0_157] : memref<256x4xf32, #tpu.memory_space<vmem>>, vector<256x4xf32>
    tpu.vector_store %arg7[%c0_156, %c0_157], %120 {strides = array<i32>} : memref<256x4xf32, #tpu.memory_space<vmem>>, vector<256x4xf32>,
    %c0_158 = arith.constant 0 : index
    %c0_159 = arith.constant 0 : index
    %122 = vector.load %arg7[%c0_158, %c0_159] : memref<256x4xf32, #tpu.memory_space<vmem>>, vector<256x4xf32>
    %cst_160 = arith.constant dense<0.000000e+00> : vector<4xf32>
    %123 = vector.multi_reduction <add>, %122, %cst_160 [0] : vector<256x4xf32> to vector<4xf32>
    %124 = vector.shape_cast %123 : vector<4xf32> to vector<1x4xf32>
    %125 = arith.mulf %122, %122 : vector<256x4xf32>
    %cst_161 = arith.constant dense<0.000000e+00> : vector<4xf32>
    %126 = vector.multi_reduction <add>, %125, %cst_161 [0] : vector<256x4xf32> to vector<4xf32>
    %127 = vector.shape_cast %126 : vector<4xf32> to vector<1x4xf32>
    %cst_162 = arith.constant 3.906250e-03 : f32
    %128 = vector.broadcast %cst_162 : f32 to vector<1x4xf32>
    %129 = arith.mulf %124, %128 : vector<1x4xf32>
    %cst_163 = arith.constant 3.906250e-03 : f32
    %130 = vector.broadcast %cst_163 : f32 to vector<1x4xf32>
    %131 = arith.mulf %127, %130 : vector<1x4xf32>
    %132 = arith.mulf %129, %129 : vector<1x4xf32>
    %133 = arith.subf %131, %132 : vector<1x4xf32>
    %cst_164 = arith.constant 0.000000e+00 : f32
    %134 = vector.broadcast %cst_164 : f32 to vector<1x4xf32>
    %135 = arith.maximumf %133, %134 : vector<1x4xf32>
    %136 = vector.broadcast %129 : vector<1x4xf32> to vector<256x4xf32>
    %137 = arith.subf %122, %136 : vector<256x4xf32>
    %cst_165 = arith.constant 9.99999974E-6 : f32
    %138 = vector.broadcast %cst_165 : f32 to vector<1x4xf32>
    %139 = arith.addf %135, %138 : vector<1x4xf32>
    %140 = math.rsqrt %139 : vector<1x4xf32>
    %141 = vector.broadcast %140 : vector<1x4xf32> to vector<256x4xf32>
    %142 = arith.mulf %137, %141 : vector<256x4xf32>
    %c0_166 = arith.constant 0 : index
    %c0_167 = arith.constant 0 : index
    %c0_168 = arith.constant 0 : index
    %c0_169 = arith.constant 0 : index
    %143 = vector.load %arg1[%c0_166, %c0_167, %c0_168, %c0_169] : memref<1x16x16x4xf32, #tpu.memory_space<vmem>>, vector<1x16x16x4xf32>
    %144 = vector.shape_cast %143 : vector<1x16x16x4xf32> to vector<16x16x4xf32>
    %145 = vector.shape_cast %142 : vector<256x4xf32> to vector<16x16x4xf32>
    %146 = arith.addf %144, %145 : vector<16x16x4xf32>
    %c0_170 = arith.constant 0 : index
    %c0_171 = arith.constant 0 : index
    %c0_172 = arith.constant 0 : index
    %c0_173 = arith.constant 0 : index
    %147 = vector.load %arg4[%c0_170, %c0_171, %c0_172, %c0_173] : memref<1x16x16x4xf32, #tpu.memory_space<vmem>>, vector<1x16x16x4xf32>
    %148 = vector.shape_cast %147 : vector<1x16x16x4xf32> to vector<16x16x4xf32>
    %149 = vector.shape_cast %146 : vector<16x16x4xf32> to vector<1x16x16x4xf32>
    tpu.vector_store %arg4[%c0_170, %c0_171, %c0_172, %c0_173], %149 {strides = array<i32>} : memref<1x16x16x4xf32, #tpu.memory_space<vmem>>, vector<1x16x16x4xf32>,
    return
  }
  func.func @transform_0(%arg0: i32) -> (i32, i32, i32, i32) {
    %c0_i32 = arith.constant 0 : i32
    %c0_i32_0 = arith.constant 0 : i32
    %c0_i32_1 = arith.constant 0 : i32
    %c0_i32_2 = arith.constant 0 : i32
    return %arg0, %c0_i32, %c0_i32_0, %c0_i32_1 : i32, i32, i32, i32
  }
  func.func @transform_1(%arg0: i32) -> (i32, i32, i32) {
    %c0_i32 = arith.constant 0 : i32
    %c0_i32_0 = arith.constant 0 : i32
    %c0_i32_1 = arith.constant 0 : i32
    %c0_i32_2 = arith.constant 0 : i32
    return %c0_i32, %c0_i32_0, %c0_i32_1 : i32, i32, i32
  }
  func.func @transform_2(%arg0: i32) -> (i32, i32, i32) {
    %c0_i32 = arith.constant 0 : i32
    %c0_i32_0 = arith.constant 0 : i32
    %c0_i32_1 = arith.constant 0 : i32
    %c0_i32_2 = arith.constant 0 : i32
    return %c0_i32, %c0_i32_0, %c0_i32_1 : i32, i32, i32
  }
  func.func @transform_3(%arg0: i32) -> (i32, i32, i32, i32) {
    %c0_i32 = arith.constant 0 : i32
    %c0_i32_0 = arith.constant 0 : i32
    %c0_i32_1 = arith.constant 0 : i32
    %c0_i32_2 = arith.constant 0 : i32
    return %arg0, %c0_i32, %c0_i32_0, %c0_i32_1 : i32, i32, i32, i32
  }
}

</mosaic_0001>

<llo_original>
// kernel: tpu_custom_call.1
$region0: #{tpu_custom_call.1}
  #allocation0 [shape = 'u32[]', space=smem, size = 0x4, offset = 0x4, fixed_abs, tag = 'smem constant byte address 0x4 - core index']
  #allocation1 [shape = 'u32[144,128]{1,0:T(1,128)}', space=vmem, size = 0x12000, scoped, tag = 'internal scratch']
  #allocation2 [shape = 'f32[18,18,4]{2,1,0:T(8,128)}', space=vmem, size = 0x36000, scoped, tag = 'scratch operand']
  #allocation3 [shape = 'bf16[18,16,12]{2,1,0:T(16,128)(2,1)}', space=vmem, size = 0x12000, scoped, tag = 'scratch operand']
  #allocation4 [shape = 'f32[256,4]{1,0:T(8,128)}', space=vmem, size = 0x20000, scoped, tag = 'scratch operand']
  %s0 = inlined_call_operand.vmem [shape: f32[2,16,16,4], index: 0, kind: input, shape index: {}]
  %s1 = inlined_call_operand.vmem [shape: bf16[3,12,4], index: 1, kind: input, shape index: {}]
  %s2 = inlined_call_operand.vmem [shape: bf16[3,12,4], index: 2, kind: input, shape index: {}]
  %s3 = inlined_call_operand.vmem [shape: f32[2,16,16,4], index: 3, kind: output, shape index: {}]
  %s4 = sld [smem:[#allocation0]]
  $region45: #{tpu_custom_call.1} parent=0
    _
  %s6 = ssub.s32 1, %s4
  %s7 = scalar_select 0, %s6, %s4
  loop: start=0, step=1, limit=4
  $region2: #{tpu_custom_call.1} parent=0 // loop_pre_header
    _
  $region3: #{tpu_custom_call.1} parent=0 // loop_header
    %s9 = sphi 0, %s13
    %p10 = scmp.ge.s32.totalorder %s9, 4
    %s19 = sphi 0, %s21
    %s22 = sphi 0, %s19
    %s23 = sphi 0, %s22
    %s39 = sphi 0, %s23
    %s43 = sphi 0, %s43
    %s45 = sphi 0, %s43
    %s46 = sphi 0, %s45
    %s60 = sphi 0, %s46
    %s64 = sphi 0, %s64
    %s66 = sphi 0, %s64
    %s67 = sphi 0, %s66
    %s81 = sphi 0, %s67
    %s87 = sphi 0, %s89
    %s90 = sphi 0, %s87
    %s91 = sphi 0, %s90
    %s107 = sphi 0, %s91
  $region4: #{tpu_custom_call.1} parent=0 // loop_header_branch
    %12 = sbr.rel (%p10) target = $region8
  $region5: #{tpu_custom_call.1} parent=0 // loop_body
    %s14 = ssub.s32 %s9, 1
    %s15 = ssub.s32 %s9, 2
    %s16 = sadd.s32 %s9, 1
    %s17 = ssub.s32 %s9, %s16
    %p18 = scmp.eq.s32.totalorder %s17, 0
    %s20 = sadd.s32 %s19, 1
    %s21 = scalar_select %p18, %s19, %s20
    %p24 = pneg %p18
    %p25 = scmp.eq.s32.totalorder %s9, 1
    %p26 = por %p24, %p25
    %p27 = scmp.ne.s32.totalorder %s19, %s22
    %p28 = scmp.eq.s32.totalorder %s9, 0
    %p29 = por %p27, %p28
    %p30 = scmp.ne.s32.totalorder %s19, %s22
    %p31 = scmp.eq.s32.totalorder %s14, 1
    %p32 = por %p30, %p31
    %p33 = scmp.ne.s32.totalorder %s22, %s23
    %p34 = scmp.eq.s32.totalorder %s14, 0
    %p35 = por %p33, %p34
    %p36 = scmp.ne.s32.totalorder %s22, %s23
    %p37 = scmp.eq.s32.totalorder %s15, 1
    %p38 = por %p36, %p37
    %p40 = scmp.ne.s32.totalorder %s23, %s39
    %p41 = scmp.eq.s32.totalorder %s15, 0
    %p42 = por %p40, %p41
    %s44 = sadd.s32 %s43, 1
    %p47 = scmp.eq.s32.totalorder %s9, 1
    %p48 = scmp.ne.s32.totalorder %s43, %s45
    %p49 = scmp.eq.s32.totalorder %s9, 0
    %p50 = por %p48, %p49
    %p51 = scmp.ne.s32.totalorder %s43, %s45
    %p52 = scmp.eq.s32.totalorder %s14, 1
    %p53 = por %p51, %p52
    %p54 = scmp.ne.s32.totalorder %s45, %s46
    %p55 = scmp.eq.s32.totalorder %s14, 0
    %p56 = por %p54, %p55
    %p57 = scmp.ne.s32.totalorder %s45, %s46
    %p58 = scmp.eq.s32.totalorder %s15, 1
    %p59 = por %p57, %p58
    %p61 = scmp.ne.s32.totalorder %s46, %s60
    %p62 = scmp.eq.s32.totalorder %s15, 0
    %p63 = por %p61, %p62
    %s65 = sadd.s32 %s64, 1
    %p68 = scmp.eq.s32.totalorder %s9, 1
    %p69 = scmp.ne.s32.totalorder %s64, %s66
    %p70 = scmp.eq.s32.totalorder %s9, 0
    %p71 = por %p69, %p70
    %p72 = scmp.ne.s32.totalorder %s64, %s66
    %p73 = scmp.eq.s32.totalorder %s14, 1
    %p74 = por %p72, %p73
    %p75 = scmp.ne.s32.totalorder %s66, %s67
    %p76 = scmp.eq.s32.totalorder %s14, 0
    %p77 = por %p75, %p76
    %p78 = scmp.ne.s32.totalorder %s66, %s67
    %p79 = scmp.eq.s32.totalorder %s15, 1
    %p80 = por %p78, %p79
    %p82 = scmp.ne.s32.totalorder %s67, %s81
    %p83 = scmp.eq.s32.totalorder %s15, 0
    %p84 = por %p82, %p83
    %s85 = ssub.s32 %s9, %s16
    %p86 = scmp.eq.s32.totalorder %s85, 0
    %s88 = sadd.s32 %s87, 1
    %s89 = scalar_select %p86, %s87, %s88
    %p92 = pneg %p86
    %p93 = scmp.eq.s32.totalorder %s9, 1
    %p94 = por %p92, %p93
    %p95 = scmp.ne.s32.totalorder %s87, %s90
    %p96 = scmp.eq.s32.totalorder %s9, 0
    %p97 = por %p95, %p96
    %p98 = scmp.ne.s32.totalorder %s87, %s90
    %p99 = scmp.eq.s32.totalorder %s14, 1
    %p100 = por %p98, %p99
    %p101 = scmp.ne.s32.totalorder %s90, %s91
    %p102 = scmp.eq.s32.totalorder %s14, 0
    %p103 = por %p101, %p102
    %p104 = scmp.ne.s32.totalorder %s90, %s91
    %p105 = scmp.eq.s32.totalorder %s15, 1
    %p106 = por %p104, %p105
    %p108 = scmp.ne.s32.totalorder %s91, %s107
    %p109 = scmp.eq.s32.totalorder %s15, 0
    %p110 = por %p108, %p109
    %p111 = scmp.le.s32.totalorder 1, %s9
    %p112 = scmp.lt.s32.totalorder %s9, 3
    %p113 = pnand %p111, %p112
    %p114 = pneg %p113
    // Predicated region
    $region9: #{tpu_custom_call.1} parent=5 // pred_check
      _
    $region10: #{tpu_custom_call.1} parent=5 // pred_check_branch
      %116 = sbr.rel (%p113) target = $region12
    $region11: #{tpu_custom_call.1} parent=5 // pred_region
      %s117 = ssub.s32 %s9, 1
      // Predicated region
      $region13: #{tpu_custom_call.1} parent=11 // pred_check
        %p118 = pneg %p56
      $region14: #{tpu_custom_call.1} parent=11 // pred_check_branch
        %120 = sbr.rel (%p118) target = $region16
      $region15: #{tpu_custom_call.1} parent=11 // pred_region
        _
      $region16: #{tpu_custom_call.1} parent=11 // pred_fallthru
        _
      // Predicated region
      $region17: #{tpu_custom_call.1} parent=11 // pred_check
        %p121 = pneg %p77
      $region18: #{tpu_custom_call.1} parent=11 // pred_check_branch
        %123 = sbr.rel (%p121) target = $region20
      $region19: #{tpu_custom_call.1} parent=11 // pred_region
        _
      $region20: #{tpu_custom_call.1} parent=11 // pred_fallthru
        _
    $region12: #{tpu_custom_call.1} parent=5 // pred_fallthru
      _
    %p124 = scmp.lt.s32.totalorder %s9, 2
    // Predicated region
    $region21: #{tpu_custom_call.1} parent=5 // pred_check
      %p125 = pneg %p124
    $region22: #{tpu_custom_call.1} parent=5 // pred_check_branch
      %127 = sbr.rel (%p125) target = $region24
    $region23: #{tpu_custom_call.1} parent=5 // pred_region
      // Predicated region
      $region25: #{tpu_custom_call.1} parent=23 // pred_check
        %p128 = pneg %p29
      $region26: #{tpu_custom_call.1} parent=23 // pred_check_branch
        %130 = sbr.rel (%p128) target = $region28
      $region27: #{tpu_custom_call.1} parent=23 // pred_region
        %p131 = scmp.lt.s32.totalorder %s9, 1
        %s132 = scalar_select %p131, %s9, 1
        %s133 = smul.addr %s132, 32
        %s134 = smul.addr %s133, 8
        %s135 = scalar_lea.vmem %s0, %s134
      $region28: #{tpu_custom_call.1} parent=23 // pred_fallthru
        _
    $region24: #{tpu_custom_call.1} parent=5 // pred_fallthru
      _
    %p136 = scmp.le.s32.totalorder 1, %s9
    %p137 = scmp.lt.s32.totalorder %s9, 3
    %p138 = pnand %p136, %p137
    %p139 = pneg %p138
    // Predicated region
    $region29: #{tpu_custom_call.1} parent=5 // pred_check
      _
    $region30: #{tpu_custom_call.1} parent=5 // pred_check_branch
      %141 = sbr.rel (%p138) target = $region32
    $region31: #{tpu_custom_call.1} parent=5 // pred_region
      %s142 = ssub.s32 %s9, 1
      %p143 = scmp.lt.s32.totalorder %s14, 1
      %s144 = scalar_select %p143, %s14, 1
      %s145 = smul.addr %s144, 32
      %s146 = smul.addr %s145, 8
      %s147 = scalar_lea.vmem %s0, %s146
      %p148 = pneg %p35
      %p149 = pneg %p32
      %p150 = pneg %p56
      %p151 = pneg %p53
      %p152 = pneg %p77
      %p153 = pneg %p74
      %p154 = pneg %p103
      %p155 = pneg %p100
      %p156 = scmp.lt.s32.totalorder %s14, 1
      %s157 = scalar_select %p156, %s14, 1
      %s158 = smul.addr %s157, 32
      %s159 = smul.addr %s158, 8
      %s160 = scalar_lea.vmem %s3, %s159
      %p161 = scmp.lt.s32.totalorder %s14, 1
      %s162 = scalar_select %p161, %s14, 1
      %s163 = smul.addr %s162, 32
      %s164 = smul.addr %s163, 8
      %s165 = scalar_lea.vmem %s0, %s164
      %p166 = scmp.lt.s32.totalorder %s14, 1
      %s167 = scalar_select %p166, %s14, 1
      %s168 = smul.addr %s167, 32
      %s169 = smul.addr %s168, 8
      %s170 = scalar_lea.vmem %s3, %s169
      %v172 = vld [vmem:[%s165] sm:$0xff]
      %v173 = vld [vmem:[%s165 + $0x8] sm:$0xff]
      %v174 = vld [vmem:[%s165 + $0x10] sm:$0xff]
      %v175 = vld [vmem:[%s165 + $0x18] sm:$0xff]
      %v176 = vld [vmem:[%s165 + $0x20] sm:$0xff]
      %v177 = vld [vmem:[%s165 + $0x28] sm:$0xff]
      %v178 = vld [vmem:[%s165 + $0x30] sm:$0xff]
      %v179 = vld [vmem:[%s165 + $0x38] sm:$0xff]
      %v180 = vld [vmem:[%s165 + $0x40] sm:$0xff]
      %v181 = vld [vmem:[%s165 + $0x48] sm:$0xff]
      %v182 = vld [vmem:[%s165 + $0x50] sm:$0xff]
      %v183 = vld [vmem:[%s165 + $0x58] sm:$0xff]
      %v184 = vld [vmem:[%s165 + $0x60] sm:$0xff]
      %v185 = vld [vmem:[%s165 + $0x68] sm:$0xff]
      %v186 = vld [vmem:[%s165 + $0x70] sm:$0xff]
      %v187 = vld [vmem:[%s165 + $0x78] sm:$0xff]
      %v188 = vld [vmem:[%s165 + $0x80] sm:$0xff]
      %v189 = vld [vmem:[%s165 + $0x88] sm:$0xff]
      %v190 = vld [vmem:[%s165 + $0x90] sm:$0xff]
      %v191 = vld [vmem:[%s165 + $0x98] sm:$0xff]
      %v192 = vld [vmem:[%s165 + $0xa0] sm:$0xff]
      %v193 = vld [vmem:[%s165 + $0xa8] sm:$0xff]
      %v194 = vld [vmem:[%s165 + $0xb0] sm:$0xff]
      %v195 = vld [vmem:[%s165 + $0xb8] sm:$0xff]
      %v196 = vld [vmem:[%s165 + $0xc0] sm:$0xff]
      %v197 = vld [vmem:[%s165 + $0xc8] sm:$0xff]
      %v198 = vld [vmem:[%s165 + $0xd0] sm:$0xff]
      %v199 = vld [vmem:[%s165 + $0xd8] sm:$0xff]
      %v200 = vld [vmem:[%s165 + $0xe0] sm:$0xff]
      %v201 = vld [vmem:[%s165 + $0xe8] sm:$0xff]
      %v202 = vld [vmem:[%s165 + $0xf0] sm:$0xff]
      %v203 = vld [vmem:[%s165 + $0xf8] sm:$0xff]
      %s204 = scalar_lea.vmem [#allocation2], 24
      %vm205 = vcmask 31744
      %206 = vst.msk [vmem:[%s204 + $0x1] sm:$0xff] %vm205, %v172
      %207 = vst.msk [vmem:[%s204 + $0x9] sm:$0xff] %vm205, %v173
      %208 = vst.msk [vmem:[%s204 + $0x19] sm:$0xff] %vm205, %v174
      %209 = vst.msk [vmem:[%s204 + $0x21] sm:$0xff] %vm205, %v175
      %210 = vst.msk [vmem:[%s204 + $0x31] sm:$0xff] %vm205, %v176
      %211 = vst.msk [vmem:[%s204 + $0x39] sm:$0xff] %vm205, %v177
      %212 = vst.msk [vmem:[%s204 + $0x49] sm:$0xff] %vm205, %v178
      %213 = vst.msk [vmem:[%s204 + $0x51] sm:$0xff] %vm205, %v179
      %214 = vst.msk [vmem:[%s204 + $0x61] sm:$0xff] %vm205, %v180
      %215 = vst.msk [vmem:[%s204 + $0x69] sm:$0xff] %vm205, %v181
      %216 = vst.msk [vmem:[%s204 + $0x79] sm:$0xff] %vm205, %v182
      %217 = vst.msk [vmem:[%s204 + $0x81] sm:$0xff] %vm205, %v183
      %218 = vst.msk [vmem:[%s204 + $0x91] sm:$0xff] %vm205, %v184
      %219 = vst.msk [vmem:[%s204 + $0x99] sm:$0xff] %vm205, %v185
      %220 = vst.msk [vmem:[%s204 + $0xa9] sm:$0xff] %vm205, %v186
      %221 = vst.msk [vmem:[%s204 + $0xb1] sm:$0xff] %vm205, %v187
      %222 = vst.msk [vmem:[%s204 + $0xc1] sm:$0xff] %vm205, %v188
      %223 = vst.msk [vmem:[%s204 + $0xc9] sm:$0xff] %vm205, %v189
      %224 = vst.msk [vmem:[%s204 + $0xd9] sm:$0xff] %vm205, %v190
      %225 = vst.msk [vmem:[%s204 + $0xe1] sm:$0xff] %vm205, %v191
      %226 = vst.msk [vmem:[%s204 + $0xf1] sm:$0xff] %vm205, %v192
      %227 = vst.msk [vmem:[%s204 + $0xf9] sm:$0xff] %vm205, %v193
      %228 = vst.msk [vmem:[%s204 + $0x109] sm:$0xff] %vm205, %v194
      %229 = vst.msk [vmem:[%s204 + $0x111] sm:$0xff] %vm205, %v195
      %230 = vst.msk [vmem:[%s204 + $0x121] sm:$0xff] %vm205, %v196
      %231 = vst.msk [vmem:[%s204 + $0x129] sm:$0xff] %vm205, %v197
      %232 = vst.msk [vmem:[%s204 + $0x139] sm:$0xff] %vm205, %v198
      %233 = vst.msk [vmem:[%s204 + $0x141] sm:$0xff] %vm205, %v199
      %234 = vst.msk [vmem:[%s204 + $0x151] sm:$0xff] %vm205, %v200
      %235 = vst.msk [vmem:[%s204 + $0x159] sm:$0xff] %vm205, %v201
      %236 = vst.msk [vmem:[%s204 + $0x169] sm:$0xff] %vm205, %v202
      %237 = vst.msk [vmem:[%s204 + $0x171] sm:$0xff] %vm205, %v203
      %238 = vst.msk [vmem:[#allocation2 + $0x1] sm:$0xff] %vm205, %v174
      %239 = vst.msk [vmem:[#allocation2 + $0x9] sm:$0xff] %vm205, %v175
      %s240 = scalar_lea.vmem [#allocation2], 408
      %241 = vst.msk [vmem:[%s240 + $0x1] sm:$0xff] %vm205, %v200
      %242 = vst.msk [vmem:[%s240 + $0x9] sm:$0xff] %vm205, %v201
      %vm243 = vcmask 25601
      %244 = vst.msk [vmem:[%s204 - $0x1] sm:$0x2] %vm243, %v172
      %245 = vst.msk [vmem:[%s204 + $0x17] sm:$0x2] %vm243, %v174
      %246 = vst.msk [vmem:[%s204 + $0x2f] sm:$0x2] %vm243, %v176
      %247 = vst.msk [vmem:[%s204 + $0x47] sm:$0x2] %vm243, %v178
      %248 = vst.msk [vmem:[%s204 + $0x5f] sm:$0x2] %vm243, %v180
      %249 = vst.msk [vmem:[%s204 + $0x77] sm:$0x2] %vm243, %v182
      %250 = vst.msk [vmem:[%s204 + $0x8f] sm:$0x2] %vm243, %v184
      %251 = vst.msk [vmem:[%s204 + $0xa7] sm:$0x2] %vm243, %v186
      %252 = vst.msk [vmem:[%s204 + $0xbf] sm:$0x2] %vm243, %v188
      %253 = vst.msk [vmem:[%s204 + $0xd7] sm:$0x2] %vm243, %v190
      %254 = vst.msk [vmem:[%s204 + $0xef] sm:$0x2] %vm243, %v192
      %255 = vst.msk [vmem:[%s204 + $0x107] sm:$0x2] %vm243, %v194
      %256 = vst.msk [vmem:[%s204 + $0x11f] sm:$0x2] %vm243, %v196
      %257 = vst.msk [vmem:[%s204 + $0x137] sm:$0x2] %vm243, %v198
      %258 = vst.msk [vmem:[%s204 + $0x14f] sm:$0x2] %vm243, %v200
      %259 = vst.msk [vmem:[%s204 + $0x167] sm:$0x2] %vm243, %v202
      %vm260 = vcmask 30726
      %261 = vst.msk [vmem:[%s204 + $0xb] sm:$0x40] %vm260, %v173
      %262 = vst.msk [vmem:[%s204 + $0x23] sm:$0x40] %vm260, %v175
      %263 = vst.msk [vmem:[%s204 + $0x3b] sm:$0x40] %vm260, %v177
      %264 = vst.msk [vmem:[%s204 + $0x53] sm:$0x40] %vm260, %v179
      %265 = vst.msk [vmem:[%s204 + $0x6b] sm:$0x40] %vm260, %v181
      %266 = vst.msk [vmem:[%s204 + $0x83] sm:$0x40] %vm260, %v183
      %267 = vst.msk [vmem:[%s204 + $0x9b] sm:$0x40] %vm260, %v185
      %268 = vst.msk [vmem:[%s204 + $0xb3] sm:$0x40] %vm260, %v187
      %269 = vst.msk [vmem:[%s204 + $0xcb] sm:$0x40] %vm260, %v189
      %270 = vst.msk [vmem:[%s204 + $0xe3] sm:$0x40] %vm260, %v191
      %271 = vst.msk [vmem:[%s204 + $0xfb] sm:$0x40] %vm260, %v193
      %272 = vst.msk [vmem:[%s204 + $0x113] sm:$0x40] %vm260, %v195
      %273 = vst.msk [vmem:[%s204 + $0x12b] sm:$0x40] %vm260, %v197
      %274 = vst.msk [vmem:[%s204 + $0x143] sm:$0x40] %vm260, %v199
      %275 = vst.msk [vmem:[%s204 + $0x15b] sm:$0x40] %vm260, %v201
      %276 = vst.msk [vmem:[%s204 + $0x173] sm:$0x40] %vm260, %v203
      %277 = vst.msk [vmem:[#allocation2 - $0x1] sm:$0x2] %vm243, %v174
      %278 = vst.msk [vmem:[#allocation2 + $0xb] sm:$0x40] %vm260, %v175
      %279 = vst.msk [vmem:[%s240 - $0x1] sm:$0x2] %vm243, %v200
      %280 = vst.msk [vmem:[%s240 + $0xb] sm:$0x40] %vm260, %v201
      %v281 = vld [vmem:[#allocation2] sm:$0xff]
      %v282 = vld [vmem:[#allocation2 + $0x8] sm:$0xff]
      %v283 = vld [vmem:[#allocation2 + $0x18] sm:$0xff]
      %v284 = vld [vmem:[#allocation2 + $0x20] sm:$0xff]
      %v285 = vld [vmem:[#allocation2 + $0x30] sm:$0xff]
      %v286 = vld [vmem:[#allocation2 + $0x38] sm:$0xff]
      %v287 = vld [vmem:[#allocation2 + $0x48] sm:$0xff]
      %v288 = vld [vmem:[#allocation2 + $0x50] sm:$0xff]
      %v289 = vld [vmem:[#allocation2 + $0x60] sm:$0xff]
      %v290 = vld [vmem:[#allocation2 + $0x68] sm:$0xff]
      %v291 = vld [vmem:[#allocation2 + $0x78] sm:$0xff]
      %v292 = vld [vmem:[#allocation2 + $0x80] sm:$0xff]
      %v293 = vld [vmem:[#allocation2 + $0x90] sm:$0xff]
      %v294 = vld [vmem:[#allocation2 + $0x98] sm:$0xff]
      %v295 = vld [vmem:[#allocation2 + $0xa8] sm:$0xff]
      %v296 = vld [vmem:[#allocation2 + $0xb0] sm:$0xff]
      %v297 = vld [vmem:[#allocation2 + $0xc0] sm:$0xff]
      %v298 = vld [vmem:[#allocation2 + $0xc8] sm:$0xff]
      %v299 = vld [vmem:[#allocation2 + $0xd8] sm:$0xff]
      %v300 = vld [vmem:[#allocation2 + $0xe0] sm:$0xff]
      %v301 = vld [vmem:[#allocation2 + $0xf0] sm:$0xff]
      %v302 = vld [vmem:[#allocation2 + $0xf8] sm:$0xff]
      %v303 = vld [vmem:[#allocation2 + $0x108] sm:$0xff]
      %v304 = vld [vmem:[#allocation2 + $0x110] sm:$0xff]
      %v305 = vld [vmem:[#allocation2 + $0x120] sm:$0xff]
      %v306 = vld [vmem:[#allocation2 + $0x128] sm:$0xff]
      %v307 = vld [vmem:[#allocation2 + $0x138] sm:$0xff]
      %v308 = vld [vmem:[#allocation2 + $0x140] sm:$0xff]
      %v309 = vld [vmem:[#allocation2 + $0x150] sm:$0xff]
      %v310 = vld [vmem:[#allocation2 + $0x158] sm:$0xff]
      %v311 = vld [vmem:[#allocation2 + $0x168] sm:$0xff]
      %v312 = vld [vmem:[#allocation2 + $0x170] sm:$0xff]
      %v313 = vld [vmem:[#allocation2 + $0x180] sm:$0xff]
      %v314 = vld [vmem:[#allocation2 + $0x188] sm:$0xff]
      %v315 = vld [vmem:[#allocation2 + $0x198] sm:$0xff]
      %v316 = vld [vmem:[#allocation2 + $0x1a0] sm:$0xff]
      %v317 = vpack.c.bf16 %v282, %v281
      %v318 = vpack.c.bf16 %v284, %v283
      %v319 = vpack.c.bf16 %v286, %v285
      %v320 = vpack.c.bf16 %v288, %v287
      %v321 = vpack.c.bf16 %v290, %v289
      %v322 = vpack.c.bf16 %v292, %v291
      %v323 = vpack.c.bf16 %v294, %v293
      %v324 = vpack.c.bf16 %v296, %v295
      %v325 = vpack.c.bf16 %v298, %v297
      %v326 = vpack.c.bf16 %v300, %v299
      %v327 = vpack.c.bf16 %v302, %v301
      %v328 = vpack.c.bf16 %v304, %v303
      %v329 = vpack.c.bf16 %v306, %v305
      %v330 = vpack.c.bf16 %v308, %v307
      %v331 = vpack.c.bf16 %v310, %v309
      %v332 = vpack.c.bf16 %v312, %v311
      %v333 = vpack.c.bf16 %v314, %v313
      %v334 = vpack.c.bf16 %v316, %v315
      %335 = vst.msk [vmem:[#allocation3] sm:$0xff] %vm205, %v317
      %336 = vst.msk [vmem:[#allocation3 + $0x8] sm:$0xff] %vm205, %v318
      %337 = vst.msk [vmem:[#allocation3 + $0x10] sm:$0xff] %vm205, %v319
      %338 = vst.msk [vmem:[#allocation3 + $0x18] sm:$0xff] %vm205, %v320
      %339 = vst.msk [vmem:[#allocation3 + $0x20] sm:$0xff] %vm205, %v321
      %340 = vst.msk [vmem:[#allocation3 + $0x28] sm:$0xff] %vm205, %v322
      %341 = vst.msk [vmem:[#allocation3 + $0x30] sm:$0xff] %vm205, %v323
      %342 = vst.msk [vmem:[#allocation3 + $0x38] sm:$0xff] %vm205, %v324
      %343 = vst.msk [vmem:[#allocation3 + $0x40] sm:$0xff] %vm205, %v325
      %344 = vst.msk [vmem:[#allocation3 + $0x48] sm:$0xff] %vm205, %v326
      %345 = vst.msk [vmem:[#allocation3 + $0x50] sm:$0xff] %vm205, %v327
      %346 = vst.msk [vmem:[#allocation3 + $0x58] sm:$0xff] %vm205, %v328
      %347 = vst.msk [vmem:[#allocation3 + $0x60] sm:$0xff] %vm205, %v329
      %348 = vst.msk [vmem:[#allocation3 + $0x68] sm:$0xff] %vm205, %v330
      %349 = vst.msk [vmem:[#allocation3 + $0x70] sm:$0xff] %vm205, %v331
      %350 = vst.msk [vmem:[#allocation3 + $0x78] sm:$0xff] %vm205, %v332
      %351 = vst.msk [vmem:[#allocation3 + $0x80] sm:$0xff] %vm205, %v333
      %352 = vst.msk [vmem:[#allocation3 + $0x88] sm:$0xff] %vm205, %v334
      %v353 = vld [vmem:[#allocation2 + $0x1] sm:$0xff]
      %v354 = vld [vmem:[#allocation2 + $0x9] sm:$0xff]
      %v355 = vld [vmem:[#allocation2 + $0x19] sm:$0xff]
      %v356 = vld [vmem:[#allocation2 + $0x21] sm:$0xff]
      %v357 = vld [vmem:[#allocation2 + $0x31] sm:$0xff]
      %v358 = vld [vmem:[#allocation2 + $0x39] sm:$0xff]
      %v359 = vld [vmem:[#allocation2 + $0x49] sm:$0xff]
      %v360 = vld [vmem:[#allocation2 + $0x51] sm:$0xff]
      %v361 = vld [vmem:[#allocation2 + $0x61] sm:$0xff]
      %v362 = vld [vmem:[#allocation2 + $0x69] sm:$0xff]
      %v363 = vld [vmem:[#allocation2 + $0x79] sm:$0xff]
      %v364 = vld [vmem:[#allocation2 + $0x81] sm:$0xff]
      %v365 = vld [vmem:[#allocation2 + $0x91] sm:$0xff]
      %v366 = vld [vmem:[#allocation2 + $0x99] sm:$0xff]
      %v367 = vld [vmem:[#allocation2 + $0xa9] sm:$0xff]
      %v368 = vld [vmem:[#allocation2 + $0xb1] sm:$0xff]
      %v369 = vld [vmem:[#allocation2 + $0xc1] sm:$0xff]
      %v370 = vld [vmem:[#allocation2 + $0xc9] sm:$0xff]
      %v371 = vld [vmem:[#allocation2 + $0xd9] sm:$0xff]
      %v372 = vld [vmem:[#allocation2 + $0xe1] sm:$0xff]
      %v373 = vld [vmem:[#allocation2 + $0xf1] sm:$0xff]
      %v374 = vld [vmem:[#allocation2 + $0xf9] sm:$0xff]
      %v375 = vld [vmem:[#allocation2 + $0x109] sm:$0xff]
      %v376 = vld [vmem:[#allocation2 + $0x111] sm:$0xff]
      %v377 = vld [vmem:[#allocation2 + $0x121] sm:$0xff]
      %v378 = vld [vmem:[#allocation2 + $0x129] sm:$0xff]
      %v379 = vld [vmem:[#allocation2 + $0x139] sm:$0xff]
      %v380 = vld [vmem:[#allocation2 + $0x141] sm:$0xff]
      %v381 = vld [vmem:[#allocation2 + $0x151] sm:$0xff]
      %v382 = vld [vmem:[#allocation2 + $0x159] sm:$0xff]
      %v383 = vld [vmem:[#allocation2 + $0x169] sm:$0xff]
      %v384 = vld [vmem:[#allocation2 + $0x171] sm:$0xff]
      %v385 = vld [vmem:[#allocation2 + $0x181] sm:$0xff]
      %v386 = vld [vmem:[#allocation2 + $0x189] sm:$0xff]
      %v387 = vld [vmem:[#allocation2 + $0x199] sm:$0xff]
      %v388 = vld [vmem:[#allocation2 + $0x1a1] sm:$0xff]
      %v389 = vpack.c.bf16 %v354, %v353
      %v390 = vpack.c.bf16 %v356, %v355
      %v391 = vpack.c.bf16 %v358, %v357
      %v392 = vpack.c.bf16 %v360, %v359
      %v393 = vpack.c.bf16 %v362, %v361
      %v394 = vpack.c.bf16 %v364, %v363
      %v395 = vpack.c.bf16 %v366, %v365
      %v396 = vpack.c.bf16 %v368, %v367
      %v397 = vpack.c.bf16 %v370, %v369
      %v398 = vpack.c.bf16 %v372, %v371
      %v399 = vpack.c.bf16 %v374, %v373
      %v400 = vpack.c.bf16 %v376, %v375
      %v401 = vpack.c.bf16 %v378, %v377
      %v402 = vpack.c.bf16 %v380, %v379
      %v403 = vpack.c.bf16 %v382, %v381
      %v404 = vpack.c.bf16 %v384, %v383
      %v405 = vpack.c.bf16 %v386, %v385
      %v406 = vpack.c.bf16 %v388, %v387
      %425 = vrot.lane.b32.xlu0 %v389, 4
      %v426 = vpop.permute.xlu0 %425
      %427 = vrot.lane.b32.xlu0 %v390, 4
      %v428 = vpop.permute.xlu0 %427
      %429 = vrot.lane.b32.xlu0 %v391, 4
      %v430 = vpop.permute.xlu0 %429
      %431 = vrot.lane.b32.xlu0 %v392, 4
      %v432 = vpop.permute.xlu0 %431
      %433 = vrot.lane.b32.xlu0 %v393, 4
      %v434 = vpop.permute.xlu0 %433
      %435 = vrot.lane.b32.xlu0 %v394, 4
      %v436 = vpop.permute.xlu0 %435
      %437 = vrot.lane.b32.xlu0 %v395, 4
      %v438 = vpop.permute.xlu0 %437
      %439 = vrot.lane.b32.xlu0 %v396, 4
      %v440 = vpop.permute.xlu0 %439
      %441 = vrot.lane.b32.xlu0 %v397, 4
      %v442 = vpop.permute.xlu0 %441
      %443 = vrot.lane.b32.xlu0 %v398, 4
      %v444 = vpop.permute.xlu0 %443
      %445 = vrot.lane.b32.xlu0 %v399, 4
      %v446 = vpop.permute.xlu0 %445
      %447 = vrot.lane.b32.xlu0 %v400, 4
      %v448 = vpop.permute.xlu0 %447
      %449 = vrot.lane.b32.xlu0 %v401, 4
      %v450 = vpop.permute.xlu0 %449
      %451 = vrot.lane.b32.xlu0 %v402, 4
      %v452 = vpop.permute.xlu0 %451
      %453 = vrot.lane.b32.xlu0 %v403, 4
      %v454 = vpop.permute.xlu0 %453
      %455 = vrot.lane.b32.xlu0 %v404, 4
      %v456 = vpop.permute.xlu0 %455
      %457 = vrot.lane.b32.xlu0 %v405, 4
      %v458 = vpop.permute.xlu0 %457
      %459 = vrot.lane.b32.xlu0 %v406, 4
      %v460 = vpop.permute.xlu0 %459
      %vm479 = vcmask 64544
      %480 = vst.msk [vmem:[#allocation3] sm:$0xff] %vm479, %v426
      %481 = vst.msk [vmem:[#allocation3 + $0x8] sm:$0xff] %vm479, %v428
      %482 = vst.msk [vmem:[#allocation3 + $0x10] sm:$0xff] %vm479, %v430
      %483 = vst.msk [vmem:[#allocation3 + $0x18] sm:$0xff] %vm479, %v432
      %484 = vst.msk [vmem:[#allocation3 + $0x20] sm:$0xff] %vm479, %v434
      %485 = vst.msk [vmem:[#allocation3 + $0x28] sm:$0xff] %vm479, %v436
      %486 = vst.msk [vmem:[#allocation3 + $0x30] sm:$0xff] %vm479, %v438
      %487 = vst.msk [vmem:[#allocation3 + $0x38] sm:$0xff] %vm479, %v440
      %488 = vst.msk [vmem:[#allocation3 + $0x40] sm:$0xff] %vm479, %v442
      %489 = vst.msk [vmem:[#allocation3 + $0x48] sm:$0xff] %vm479, %v444
      %490 = vst.msk [vmem:[#allocation3 + $0x50] sm:$0xff] %vm479, %v446
      %491 = vst.msk [vmem:[#allocation3 + $0x58] sm:$0xff] %vm479, %v448
      %492 = vst.msk [vmem:[#allocation3 + $0x60] sm:$0xff] %vm479, %v450
      %493 = vst.msk [vmem:[#allocation3 + $0x68] sm:$0xff] %vm479, %v452
      %494 = vst.msk [vmem:[#allocation3 + $0x70] sm:$0xff] %vm479, %v454
      %495 = vst.msk [vmem:[#allocation3 + $0x78] sm:$0xff] %vm479, %v456
      %496 = vst.msk [vmem:[#allocation3 + $0x80] sm:$0xff] %vm479, %v458
      %497 = vst.msk [vmem:[#allocation3 + $0x88] sm:$0xff] %vm479, %v460
      %v498 = vld [vmem:[#allocation2 + $0x2] sm:$0xff]
      %v499 = vld [vmem:[#allocation2 + $0xa] sm:$0xff]
      %v500 = vld [vmem:[#allocation2 + $0x1a] sm:$0xff]
      %v501 = vld [vmem:[#allocation2 + $0x22] sm:$0xff]
      %v502 = vld [vmem:[#allocation2 + $0x32] sm:$0xff]
      %v503 = vld [vmem:[#allocation2 + $0x3a] sm:$0xff]
      %v504 = vld [vmem:[#allocation2 + $0x4a] sm:$0xff]
      %v505 = vld [vmem:[#allocation2 + $0x52] sm:$0xff]
      %v506 = vld [vmem:[#allocation2 + $0x62] sm:$0xff]
      %v507 = vld [vmem:[#allocation2 + $0x6a] sm:$0xff]
      %v508 = vld [vmem:[#allocation2 + $0x7a] sm:$0xff]
      %v509 = vld [vmem:[#allocation2 + $0x82] sm:$0xff]
      %v510 = vld [vmem:[#allocation2 + $0x92] sm:$0xff]
      %v511 = vld [vmem:[#allocation2 + $0x9a] sm:$0xff]
      %v512 = vld [vmem:[#allocation2 + $0xaa] sm:$0xff]
      %v513 = vld [vmem:[#allocation2 + $0xb2] sm:$0xff]
      %v514 = vld [vmem:[#allocation2 + $0xc2] sm:$0xff]
      %v515 = vld [vmem:[#allocation2 + $0xca] sm:$0xff]
      %v516 = vld [vmem:[#allocation2 + $0xda] sm:$0xff]
      %v517 = vld [vmem:[#allocation2 + $0xe2] sm:$0xff]
      %v518 = vld [vmem:[#allocation2 + $0xf2] sm:$0xff]
      %v519 = vld [vmem:[#allocation2 + $0xfa] sm:$0xff]
      %v520 = vld [vmem:[#allocation2 + $0x10a] sm:$0xff]
      %v521 = vld [vmem:[#allocation2 + $0x112] sm:$0xff]
      %v522 = vld [vmem:[#allocation2 + $0x122] sm:$0xff]
      %v523 = vld [vmem:[#allocation2 + $0x12a] sm:$0xff]
      %v524 = vld [vmem:[#allocation2 + $0x13a] sm:$0xff]
      %v525 = vld [vmem:[#allocation2 + $0x142] sm:$0xff]
      %v526 = vld [vmem:[#allocation2 + $0x152] sm:$0xff]
      %v527 = vld [vmem:[#allocation2 + $0x15a] sm:$0xff]
      %v528 = vld [vmem:[#allocation2 + $0x16a] sm:$0xff]
      %v529 = vld [vmem:[#allocation2 + $0x172] sm:$0xff]
      %v530 = vld [vmem:[#allocation2 + $0x182] sm:$0xff]
      %v531 = vld [vmem:[#allocation2 + $0x18a] sm:$0xff]
      %v532 = vld [vmem:[#allocation2 + $0x19a] sm:$0xff]
      %v533 = vld [vmem:[#allocation2 + $0x1a2] sm:$0xff]
      %v534 = vpack.c.bf16 %v499, %v498
      %v535 = vpack.c.bf16 %v501, %v500
      %v536 = vpack.c.bf16 %v503, %v502
      %v537 = vpack.c.bf16 %v505, %v504
      %v538 = vpack.c.bf16 %v507, %v506
      %v539 = vpack.c.bf16 %v509, %v508
      %v540 = vpack.c.bf16 %v511, %v510
      %v541 = vpack.c.bf16 %v513, %v512
      %v542 = vpack.c.bf16 %v515, %v514
      %v543 = vpack.c.bf16 %v517, %v516
      %v544 = vpack.c.bf16 %v519, %v518
      %v545 = vpack.c.bf16 %v521, %v520
      %v546 = vpack.c.bf16 %v523, %v522
      %v547 = vpack.c.bf16 %v525, %v524
      %v548 = vpack.c.bf16 %v527, %v526
      %v549 = vpack.c.bf16 %v529, %v528
      %v550 = vpack.c.bf16 %v531, %v530
      %v551 = vpack.c.bf16 %v533, %v532
      %570 = vrot.lane.b32.xlu0 %v534, 8
      %v571 = vpop.permute.xlu0 %570
      %572 = vrot.lane.b32.xlu0 %v535, 8
      %v573 = vpop.permute.xlu0 %572
      %574 = vrot.lane.b32.xlu0 %v536, 8
      %v575 = vpop.permute.xlu0 %574
      %576 = vrot.lane.b32.xlu0 %v537, 8
      %v577 = vpop.permute.xlu0 %576
      %578 = vrot.lane.b32.xlu0 %v538, 8
      %v579 = vpop.permute.xlu0 %578
      %580 = vrot.lane.b32.xlu0 %v539, 8
      %v581 = vpop.permute.xlu0 %580
      %582 = vrot.lane.b32.xlu0 %v540, 8
      %v583 = vpop.permute.xlu0 %582
      %584 = vrot.lane.b32.xlu0 %v541, 8
      %v585 = vpop.permute.xlu0 %584
      %586 = vrot.lane.b32.xlu0 %v542, 8
      %v587 = vpop.permute.xlu0 %586
      %588 = vrot.lane.b32.xlu0 %v543, 8
      %v589 = vpop.permute.xlu0 %588
      %590 = vrot.lane.b32.xlu0 %v544, 8
      %v591 = vpop.permute.xlu0 %590
      %592 = vrot.lane.b32.xlu0 %v545, 8
      %v593 = vpop.permute.xlu0 %592
      %594 = vrot.lane.b32.xlu0 %v546, 8
      %v595 = vpop.permute.xlu0 %594
      %596 = vrot.lane.b32.xlu0 %v547, 8
      %v597 = vpop.permute.xlu0 %596
      %598 = vrot.lane.b32.xlu0 %v548, 8
      %v599 = vpop.permute.xlu0 %598
      %600 = vrot.lane.b32.xlu0 %v549, 8
      %v601 = vpop.permute.xlu0 %600
      %602 = vrot.lane.b32.xlu0 %v550, 8
      %v603 = vpop.permute.xlu0 %602
      %604 = vrot.lane.b32.xlu0 %v551, 8
      %v605 = vpop.permute.xlu0 %604
      %vm624 = vcmask 97344
      %625 = vst.msk [vmem:[#allocation3] sm:$0xff] %vm624, %v571
      %626 = vst.msk [vmem:[#allocation3 + $0x8] sm:$0xff] %vm624, %v573
      %627 = vst.msk [vmem:[#allocation3 + $0x10] sm:$0xff] %vm624, %v575
      %628 = vst.msk [vmem:[#allocation3 + $0x18] sm:$0xff] %vm624, %v577
      %629 = vst.msk [vmem:[#allocation3 + $0x20] sm:$0xff] %vm624, %v579
      %630 = vst.msk [vmem:[#allocation3 + $0x28] sm:$0xff] %vm624, %v581
      %631 = vst.msk [vmem:[#allocation3 + $0x30] sm:$0xff] %vm624, %v583
      %632 = vst.msk [vmem:[#allocation3 + $0x38] sm:$0xff] %vm624, %v585
      %633 = vst.msk [vmem:[#allocation3 + $0x40] sm:$0xff] %vm624, %v587
      %634 = vst.msk [vmem:[#allocation3 + $0x48] sm:$0xff] %vm624, %v589
      %635 = vst.msk [vmem:[#allocation3 + $0x50] sm:$0xff] %vm624, %v591
      %636 = vst.msk [vmem:[#allocation3 + $0x58] sm:$0xff] %vm624, %v593
      %637 = vst.msk [vmem:[#allocation3 + $0x60] sm:$0xff] %vm624, %v595
      %638 = vst.msk [vmem:[#allocation3 + $0x68] sm:$0xff] %vm624, %v597
      %639 = vst.msk [vmem:[#allocation3 + $0x70] sm:$0xff] %vm624, %v599
      %640 = vst.msk [vmem:[#allocation3 + $0x78] sm:$0xff] %vm624, %v601
      %641 = vst.msk [vmem:[#allocation3 + $0x80] sm:$0xff] %vm624, %v603
      %642 = vst.msk [vmem:[#allocation3 + $0x88] sm:$0xff] %vm624, %v605
      %v643 = vld [vmem:[#allocation3] sm:$0xff]
      %v644 = vld [vmem:[#allocation3 + $0x8] sm:$0xff]
      %v645 = vld [vmem:[#allocation3 + $0x10] sm:$0xff]
      %v646 = vld [vmem:[#allocation3 + $0x18] sm:$0xff]
      %v647 = vld [vmem:[#allocation3 + $0x20] sm:$0xff]
      %v648 = vld [vmem:[#allocation3 + $0x28] sm:$0xff]
      %v649 = vld [vmem:[#allocation3 + $0x30] sm:$0xff]
      %v650 = vld [vmem:[#allocation3 + $0x38] sm:$0xff]
      %v651 = vld [vmem:[#allocation3 + $0x40] sm:$0xff]
      %v652 = vld [vmem:[#allocation3 + $0x48] sm:$0xff]
      %v653 = vld [vmem:[#allocation3 + $0x50] sm:$0xff]
      %v654 = vld [vmem:[#allocation3 + $0x58] sm:$0xff]
      %v655 = vld [vmem:[#allocation3 + $0x60] sm:$0xff]
      %v656 = vld [vmem:[#allocation3 + $0x68] sm:$0xff]
      %v657 = vld [vmem:[#allocation3 + $0x70] sm:$0xff]
      %v658 = vld [vmem:[#allocation3 + $0x78] sm:$0xff]
      %v659 = vld [vmem:[%s1] sm:$0xf]
      %v660 = vld [vmem:[%s1 + $0x4] sm:$0x3]
      %v663 = vunpack.c.l.b16 %v659
      %v664 = vunpack.c.l.b16 %v660
      %v665 = vpack.c.b16 %v664, %v663
      %vm666 = vcmask 97280
      %v668 = vsel %vm666, %v643, 0
      %v671 = vsel %vm666, %v644, 0
      %v674 = vsel %vm666, %v645, 0
      %v677 = vsel %vm666, %v646, 0
      %v680 = vsel %vm666, %v647, 0
      %v683 = vsel %vm666, %v648, 0
      %v686 = vsel %vm666, %v649, 0
      %v689 = vsel %vm666, %v650, 0
      %v692 = vsel %vm666, %v651, 0
      %v695 = vsel %vm666, %v652, 0
      %v698 = vsel %vm666, %v653, 0
      %v701 = vsel %vm666, %v654, 0
      %v704 = vsel %vm666, %v655, 0
      %v707 = vsel %vm666, %v656, 0
      %v710 = vsel %vm666, %v657, 0
      %v713 = vsel %vm666, %v658, 0
      %vm715 = vcmask 1045504
      %v717 = vsel %vm715, %v665, 0
      %719 = vmatprep.subr.bf16.mxu0 0
      %720 = vmatpush1.bf16.msra.mxu0 %v717
      %721 = vmatprep.subr.bf16.mxu0 0
      %722 = vmatpush1.bf16.msra.mxu0 0
      %723 = vmatprep.subr.bf16.mxu0 0
      %724 = vmatpush1.bf16.msra.mxu0 0
      %725 = vmatprep.subr.bf16.mxu0 0
      %726 = vmatpush1.bf16.msra.mxu0 0
      %727 = vmatprep.subr.bf16.mxu0 0
      %728 = vmatpush1.bf16.msra.mxu0 0
      %729 = vmatprep.subr.bf16.mxu0 0
      %730 = vmatpush1.bf16.msra.mxu0 0
      %731 = vmatprep.subr.bf16.mxu0 0
      %732 = vmatpush1.bf16.msra.mxu0 0
      %733 = vmatprep.subr.bf16.mxu0 0
      %734 = vmatpush1.bf16.msra.mxu0 0
      %735 = vmatprep.subr.bf16.mxu0 0
      %736 = vmatpush1.bf16.msra.mxu0 0
      %737 = vmatprep.subr.bf16.mxu0 0
      %738 = vmatpush1.bf16.msra.mxu0 0
      %739 = vmatprep.subr.bf16.mxu0 0
      %740 = vmatpush1.bf16.msra.mxu0 0
      %741 = vmatprep.subr.bf16.mxu0 0
      %742 = vmatpush1.bf16.msra.mxu0 0
      %743 = vmatprep.subr.bf16.mxu0 0
      %744 = vmatpush1.bf16.msra.mxu0 0
      %745 = vmatprep.subr.bf16.mxu0 0
      %746 = vmatpush1.bf16.msra.mxu0 0
      %747 = vmatprep.subr.bf16.mxu0 0
      %748 = vmatpush1.bf16.msra.mxu0 0
      %749 = vmatprep.subr.bf16.mxu0 0
      %750 = vmatpush1.bf16.msra.mxu0 0
      %751 = vmatprep.mubr.bf16.mxu0 0
      %752 = vmatmul.mubr.bf16.gmra.mrb[0].mxu0 %v668
      %v753 = vpop.f32.mrb[0].mxu0
      %v754 = vadd.f32 0.0, %v753
      %v755 = vpop.f32.mrb[0].mxu0
      %v756 = vpop.f32.mrb[0].mxu0
      %v757 = vadd.f32 0.0, %v756
      %v758 = vpop.f32.mrb[0].mxu0
      %759 = vmatprep.mubr.bf16.mxu0 0
      %760 = vmatmul.mubr.bf16.gmra.mrb[0].mxu0 %v671
      %v761 = vpop.f32.mrb[0].mxu0
      %v762 = vadd.f32 0.0, %v761
      %v763 = vpop.f32.mrb[0].mxu0
      %v764 = vpop.f32.mrb[0].mxu0
      %v765 = vadd.f32 0.0, %v764
      %v766 = vpop.f32.mrb[0].mxu0
      %767 = vmatprep.mubr.bf16.mxu0 0
      %768 = vmatmul.mubr.bf16.gmra.mrb[0].mxu0 %v674
      %v769 = vpop.f32.mrb[0].mxu0
      %v770 = vadd.f32 0.0, %v769
      %v771 = vpop.f32.mrb[0].mxu0
      %v772 = vpop.f32.mrb[0].mxu0
      %v773 = vadd.f32 0.0, %v772
      %v774 = vpop.f32.mrb[0].mxu0
      %775 = vmatprep.mubr.bf16.mxu0 0
      %776 = vmatmul.mubr.bf16.gmra.mrb[0].mxu0 %v677
      %v777 = vpop.f32.mrb[0].mxu0
      %v778 = vadd.f32 0.0, %v777
      %v779 = vpop.f32.mrb[0].mxu0
      %v780 = vpop.f32.mrb[0].mxu0
      %v781 = vadd.f32 0.0, %v780
      %v782 = vpop.f32.mrb[0].mxu0
      %783 = vmatprep.mubr.bf16.mxu0 0
      %784 = vmatmul.mubr.bf16.gmra.mrb[0].mxu0 %v680
      %v785 = vpop.f32.mrb[0].mxu0
      %v786 = vadd.f32 0.0, %v785
      %v787 = vpop.f32.mrb[0].mxu0
      %v788 = vpop.f32.mrb[0].mxu0
      %v789 = vadd.f32 0.0, %v788
      %v790 = vpop.f32.mrb[0].mxu0
      %791 = vmatprep.mubr.bf16.mxu0 0
      %792 = vmatmul.mubr.bf16.gmra.mrb[0].mxu0 %v683
      %v793 = vpop.f32.mrb[0].mxu0
      %v794 = vadd.f32 0.0, %v793
      %v795 = vpop.f32.mrb[0].mxu0
      %v796 = vpop.f32.mrb[0].mxu0
      %v797 = vadd.f32 0.0, %v796
      %v798 = vpop.f32.mrb[0].mxu0
      %799 = vmatprep.mubr.bf16.mxu0 0
      %800 = vmatmul.mubr.bf16.gmra.mrb[0].mxu0 %v686
      %v801 = vpop.f32.mrb[0].mxu0
      %v802 = vadd.f32 0.0, %v801
      %v803 = vpop.f32.mrb[0].mxu0
      %v804 = vpop.f32.mrb[0].mxu0
      %v805 = vadd.f32 0.0, %v804
      %v806 = vpop.f32.mrb[0].mxu0
      %807 = vmatprep.mubr.bf16.mxu0 0
      %808 = vmatmul.mubr.bf16.gmra.mrb[0].mxu0 %v689
      %v809 = vpop.f32.mrb[0].mxu0
      %v810 = vadd.f32 0.0, %v809
      %v811 = vpop.f32.mrb[0].mxu0
      %v812 = vpop.f32.mrb[0].mxu0
      %v813 = vadd.f32 0.0, %v812
      %v814 = vpop.f32.mrb[0].mxu0
      %815 = vmatprep.mubr.bf16.mxu0 0
      %816 = vmatmul.mubr.bf16.gmra.mrb[0].mxu0 %v692
      %v817 = vpop.f32.mrb[0].mxu0
      %v818 = vadd.f32 0.0, %v817
      %v819 = vpop.f32.mrb[0].mxu0
      %v820 = vpop.f32.mrb[0].mxu0
      %v821 = vadd.f32 0.0, %v820
      %v822 = vpop.f32.mrb[0].mxu0
      %823 = vmatprep.mubr.bf16.mxu0 0
      %824 = vmatmul.mubr.bf16.gmra.mrb[0].mxu0 %v695
      %v825 = vpop.f32.mrb[0].mxu0
      %v826 = vadd.f32 0.0, %v825
      %v827 = vpop.f32.mrb[0].mxu0
      %v828 = vpop.f32.mrb[0].mxu0
      %v829 = vadd.f32 0.0, %v828
      %v830 = vpop.f32.mrb[0].mxu0
      %831 = vmatprep.mubr.bf16.mxu0 0
      %832 = vmatmul.mubr.bf16.gmra.mrb[0].mxu0 %v698
      %v833 = vpop.f32.mrb[0].mxu0
      %v834 = vadd.f32 0.0, %v833
      %v835 = vpop.f32.mrb[0].mxu0
      %v836 = vpop.f32.mrb[0].mxu0
      %v837 = vadd.f32 0.0, %v836
      %v838 = vpop.f32.mrb[0].mxu0
      %839 = vmatprep.mubr.bf16.mxu0 0
      %840 = vmatmul.mubr.bf16.gmra.mrb[0].mxu0 %v701
      %v841 = vpop.f32.mrb[0].mxu0
      %v842 = vadd.f32 0.0, %v841
      %v843 = vpop.f32.mrb[0].mxu0
      %v844 = vpop.f32.mrb[0].mxu0
      %v845 = vadd.f32 0.0, %v844
      %v846 = vpop.f32.mrb[0].mxu0
      %847 = vmatprep.mubr.bf16.mxu0 0
      %848 = vmatmul.mubr.bf16.gmra.mrb[0].mxu0 %v704
      %v849 = vpop.f32.mrb[0].mxu0
      %v850 = vadd.f32 0.0, %v849
      %v851 = vpop.f32.mrb[0].mxu0
      %v852 = vpop.f32.mrb[0].mxu0
      %v853 = vadd.f32 0.0, %v852
      %v854 = vpop.f32.mrb[0].mxu0
      %855 = vmatprep.mubr.bf16.mxu0 0
      %856 = vmatmul.mubr.bf16.gmra.mrb[0].mxu0 %v707
      %v857 = vpop.f32.mrb[0].mxu0
      %v858 = vadd.f32 0.0, %v857
      %v859 = vpop.f32.mrb[0].mxu0
      %v860 = vpop.f32.mrb[0].mxu0
      %v861 = vadd.f32 0.0, %v860
      %v862 = vpop.f32.mrb[0].mxu0
      %863 = vmatprep.mubr.bf16.mxu0 0
      %864 = vmatmul.mubr.bf16.gmra.mrb[0].mxu0 %v710
      %v865 = vpop.f32.mrb[0].mxu0
      %v866 = vadd.f32 0.0, %v865
      %v867 = vpop.f32.mrb[0].mxu0
      %v868 = vpop.f32.mrb[0].mxu0
      %v869 = vadd.f32 0.0, %v868
      %v870 = vpop.f32.mrb[0].mxu0
      %871 = vmatprep.mubr.bf16.mxu0 0
      %872 = vmatmul.mubr.bf16.gmra.mrb[0].mxu0 %v713
      %v873 = vpop.f32.mrb[0].mxu0
      %v874 = vadd.f32 0.0, %v873
      %v875 = vpop.f32.mrb[0].mxu0
      %v876 = vpop.f32.mrb[0].mxu0
      %v877 = vadd.f32 0.0, %v876
      %v878 = vpop.f32.mrb[0].mxu0
      %879 = vdwg.mxu0
      %880 = vst.msk [vmem:[#allocation4] sm:$0xff] %vm205, %v754
      %881 = vst.msk [vmem:[#allocation4 + $0x8] sm:$0xff] %vm205, %v757
      %882 = vst.msk [vmem:[#allocation4 + $0x10] sm:$0xff] %vm205, %v762
      %883 = vst.msk [vmem:[#allocation4 + $0x18] sm:$0xff] %vm205, %v765
      %884 = vst.msk [vmem:[#allocation4 + $0x20] sm:$0xff] %vm205, %v770
      %885 = vst.msk [vmem:[#allocation4 + $0x28] sm:$0xff] %vm205, %v773
      %886 = vst.msk [vmem:[#allocation4 + $0x30] sm:$0xff] %vm205, %v778
      %887 = vst.msk [vmem:[#allocation4 + $0x38] sm:$0xff] %vm205, %v781
      %888 = vst.msk [vmem:[#allocation4 + $0x40] sm:$0xff] %vm205, %v786
      %889 = vst.msk [vmem:[#allocation4 + $0x48] sm:$0xff] %vm205, %v789
      %890 = vst.msk [vmem:[#allocation4 + $0x50] sm:$0xff] %vm205, %v794
      %891 = vst.msk [vmem:[#allocation4 + $0x58] sm:$0xff] %vm205, %v797
      %892 = vst.msk [vmem:[#allocation4 + $0x60] sm:$0xff] %vm205, %v802
      %893 = vst.msk [vmem:[#allocation4 + $0x68] sm:$0xff] %vm205, %v805
      %894 = vst.msk [vmem:[#allocation4 + $0x70] sm:$0xff] %vm205, %v810
      %895 = vst.msk [vmem:[#allocation4 + $0x78] sm:$0xff] %vm205, %v813
      %896 = vst.msk [vmem:[#allocation4 + $0x80] sm:$0xff] %vm205, %v818
      %897 = vst.msk [vmem:[#allocation4 + $0x88] sm:$0xff] %vm205, %v821
      %898 = vst.msk [vmem:[#allocation4 + $0x90] sm:$0xff] %vm205, %v826
      %899 = vst.msk [vmem:[#allocation4 + $0x98] sm:$0xff] %vm205, %v829
      %900 = vst.msk [vmem:[#allocation4 + $0xa0] sm:$0xff] %vm205, %v834
      %901 = vst.msk [vmem:[#allocation4 + $0xa8] sm:$0xff] %vm205, %v837
      %902 = vst.msk [vmem:[#allocation4 + $0xb0] sm:$0xff] %vm205, %v842
      %903 = vst.msk [vmem:[#allocation4 + $0xb8] sm:$0xff] %vm205, %v845
      %904 = vst.msk [vmem:[#allocation4 + $0xc0] sm:$0xff] %vm205, %v850
      %905 = vst.msk [vmem:[#allocation4 + $0xc8] sm:$0xff] %vm205, %v853
      %906 = vst.msk [vmem:[#allocation4 + $0xd0] sm:$0xff] %vm205, %v858
      %907 = vst.msk [vmem:[#allocation4 + $0xd8] sm:$0xff] %vm205, %v861
      %908 = vst.msk [vmem:[#allocation4 + $0xe0] sm:$0xff] %vm205, %v866
      %909 = vst.msk [vmem:[#allocation4 + $0xe8] sm:$0xff] %vm205, %v869
      %910 = vst.msk [vmem:[#allocation4 + $0xf0] sm:$0xff] %vm205, %v874
      %911 = vst.msk [vmem:[#allocation4 + $0xf8] sm:$0xff] %vm205, %v877
      %s912 = scalar_lea.vmem [#allocation3], 8
      %v913 = vld [vmem:[%s912] sm:$0xff]
      %v914 = vld [vmem:[%s912 + $0x8] sm:$0xff]
      %v915 = vld [vmem:[%s912 + $0x10] sm:$0xff]
      %v916 = vld [vmem:[%s912 + $0x18] sm:$0xff]
      %v917 = vld [vmem:[%s912 + $0x20] sm:$0xff]
      %v918 = vld [vmem:[%s912 + $0x28] sm:$0xff]
      %v919 = vld [vmem:[%s912 + $0x30] sm:$0xff]
      %v920 = vld [vmem:[%s912 + $0x38] sm:$0xff]
      %v921 = vld [vmem:[%s912 + $0x40] sm:$0xff]
      %v922 = vld [vmem:[%s912 + $0x48] sm:$0xff]
      %v923 = vld [vmem:[%s912 + $0x50] sm:$0xff]
      %v924 = vld [vmem:[%s912 + $0x58] sm:$0xff]
      %v925 = vld [vmem:[%s912 + $0x60] sm:$0xff]
      %v926 = vld [vmem:[%s912 + $0x68] sm:$0xff]
      %v927 = vld [vmem:[%s912 + $0x70] sm:$0xff]
      %v928 = vld [vmem:[%s912 + $0x78] sm:$0xff]
      %s929 = scalar_lea.vmem %s1, 8
      %v930 = vld [vmem:[%s929] sm:$0xf]
      %v931 = vld [vmem:[%s929 + $0x4] sm:$0x3]
      %v934 = vunpack.c.l.b16 %v930
      %v935 = vunpack.c.l.b16 %v931
      %v936 = vpack.c.b16 %v935, %v934
      %v938 = vsel %vm666, %v913, 0
      %v941 = vsel %vm666, %v914, 0
      %v944 = vsel %vm666, %v915, 0
      %v947 = vsel %vm666, %v916, 0
      %v950 = vsel %vm666, %v917, 0
      %v953 = vsel %vm666, %v918, 0
      %v956 = vsel %vm666, %v919, 0
      %v959 = vsel %vm666, %v920, 0
      %v962 = vsel %vm666, %v921, 0
      %v965 = vsel %vm666, %v922, 0
      %v968 = vsel %vm666, %v923, 0
      %v971 = vsel %vm666, %v924, 0
      %v974 = vsel %vm666, %v925, 0
      %v977 = vsel %vm666, %v926, 0
      %v980 = vsel %vm666, %v927, 0
      %v983 = vsel %vm666, %v928, 0
      %v986 = vsel %vm715, %v936, 0
      %988 = vmatprep.subr.bf16.mxu0 0
      %989 = vmatpush1.bf16.msra.mxu0 %v986
      %990 = vmatprep.subr.bf16.mxu0 0
      %991 = vmatpush1.bf16.msra.mxu0 0
      %992 = vmatprep.subr.bf16.mxu0 0
      %993 = vmatpush1.bf16.msra.mxu0 0
      %994 = vmatprep.subr.bf16.mxu0 0
      %995 = vmatpush1.bf16.msra.mxu0 0
      %996 = vmatprep.subr.bf16.mxu0 0
      %997 = vmatpush1.bf16.msra.mxu0 0
      %998 = vmatprep.subr.bf16.mxu0 0
      %999 = vmatpush1.bf16.msra.mxu0 0
      %1000 = vmatprep.subr.bf16.mxu0 0
      %1001 = vmatpush1.bf16.msra.mxu0 0
      %1002 = vmatprep.subr.bf16.mxu0 0
      %1003 = vmatpush1.bf16.msra.mxu0 0
      %1004 = vmatprep.subr.bf16.mxu0 0
      %1005 = vmatpush1.bf16.msra.mxu0 0
      %1006 = vmatprep.subr.bf16.mxu0 0
      %1007 = vmatpush1.bf16.msra.mxu0 0
      %1008 = vmatprep.subr.bf16.mxu0 0
      %1009 = vmatpush1.bf16.msra.mxu0 0
      %1010 = vmatprep.subr.bf16.mxu0 0
      %1011 = vmatpush1.bf16.msra.mxu0 0
      %1012 = vmatprep.subr.bf16.mxu0 0
      %1013 = vmatpush1.bf16.msra.mxu0 0
      %1014 = vmatprep.subr.bf16.mxu0 0
      %1015 = vmatpush1.bf16.msra.mxu0 0
      %1016 = vmatprep.subr.bf16.mxu0 0
      %1017 = vmatpush1.bf16.msra.mxu0 0
      %1018 = vmatprep.subr.bf16.mxu0 0
      %1019 = vmatpush1.bf16.msra.mxu0 0
      %1020 = vmatprep.mubr.bf16.mxu0 0
      %1021 = vmatmul.mubr.bf16.gmra.mrb[0].mxu0 %v938
      %v1022 = vpop.f32.mrb[0].mxu0
      %v1023 = vadd.f32 0.0, %v1022
      %v1024 = vpop.f32.mrb[0].mxu0
      %v1025 = vpop.f32.mrb[0].mxu0
      %v1026 = vadd.f32 0.0, %v1025
      %v1027 = vpop.f32.mrb[0].mxu0
      %1028 = vmatprep.mubr.bf16.mxu0 0
      %1029 = vmatmul.mubr.bf16.gmra.mrb[0].mxu0 %v941
      %v1030 = vpop.f32.mrb[0].mxu0
      %v1031 = vadd.f32 0.0, %v1030
      %v1032 = vpop.f32.mrb[0].mxu0
      %v1033 = vpop.f32.mrb[0].mxu0
      %v1034 = vadd.f32 0.0, %v1033
      %v1035 = vpop.f32.mrb[0].mxu0
      %1036 = vmatprep.mubr.bf16.mxu0 0
      %1037 = vmatmul.mubr.bf16.gmra.mrb[0].mxu0 %v944
      %v1038 = vpop.f32.mrb[0].mxu0
      %v1039 = vadd.f32 0.0, %v1038
      %v1040 = vpop.f32.mrb[0].mxu0
      %v1041 = vpop.f32.mrb[0].mxu0
      %v1042 = vadd.f32 0.0, %v1041
      %v1043 = vpop.f32.mrb[0].mxu0
      %1044 = vmatprep.mubr.bf16.mxu0 0
      %1045 = vmatmul.mubr.bf16.gmra.mrb[0].mxu0 %v947
      %v1046 = vpop.f32.mrb[0].mxu0
      %v1047 = vadd.f32 0.0, %v1046
      %v1048 = vpop.f32.mrb[0].mxu0
      %v1049 = vpop.f32.mrb[0].mxu0
      %v1050 = vadd.f32 0.0, %v1049
      %v1051 = vpop.f32.mrb[0].mxu0
      %1052 = vmatprep.mubr.bf16.mxu0 0
      %1053 = vmatmul.mubr.bf16.gmra.mrb[0].mxu0 %v950
      %v1054 = vpop.f32.mrb[0].mxu0
      %v1055 = vadd.f32 0.0, %v1054
      %v1056 = vpop.f32.mrb[0].mxu0
      %v1057 = vpop.f32.mrb[0].mxu0
      %v1058 = vadd.f32 0.0, %v1057
      %v1059 = vpop.f32.mrb[0].mxu0
      %1060 = vmatprep.mubr.bf16.mxu0 0
      %1061 = vmatmul.mubr.bf16.gmra.mrb[0].mxu0 %v953
      %v1062 = vpop.f32.mrb[0].mxu0
      %v1063 = vadd.f32 0.0, %v1062
      %v1064 = vpop.f32.mrb[0].mxu0
      %v1065 = vpop.f32.mrb[0].mxu0
      %v1066 = vadd.f32 0.0, %v1065
      %v1067 = vpop.f32.mrb[0].mxu0
      %1068 = vmatprep.mubr.bf16.mxu0 0
      %1069 = vmatmul.mubr.bf16.gmra.mrb[0].mxu0 %v956
      %v1070 = vpop.f32.mrb[0].mxu0
      %v1071 = vadd.f32 0.0, %v1070
      %v1072 = vpop.f32.mrb[0].mxu0
      %v1073 = vpop.f32.mrb[0].mxu0
      %v1074 = vadd.f32 0.0, %v1073
      %v1075 = vpop.f32.mrb[0].mxu0
      %1076 = vmatprep.mubr.bf16.mxu0 0
      %1077 = vmatmul.mubr.bf16.gmra.mrb[0].mxu0 %v959
      %v1078 = vpop.f32.mrb[0].mxu0
      %v1079 = vadd.f32 0.0, %v1078
      %v1080 = vpop.f32.mrb[0].mxu0
      %v1081 = vpop.f32.mrb[0].mxu0
      %v1082 = vadd.f32 0.0, %v1081
      %v1083 = vpop.f32.mrb[0].mxu0
      %1084 = vmatprep.mubr.bf16.mxu0 0
      %1085 = vmatmul.mubr.bf16.gmra.mrb[0].mxu0 %v962
      %v1086 = vpop.f32.mrb[0].mxu0
      %v1087 = vadd.f32 0.0, %v1086
      %v1088 = vpop.f32.mrb[0].mxu0
      %v1089 = vpop.f32.mrb[0].mxu0
      %v1090 = vadd.f32 0.0, %v1089
      %v1091 = vpop.f32.mrb[0].mxu0
      %1092 = vmatprep.mubr.bf16.mxu0 0
      %1093 = vmatmul.mubr.bf16.gmra.mrb[0].mxu0 %v965
      %v1094 = vpop.f32.mrb[0].mxu0
      %v1095 = vadd.f32 0.0, %v1094
      %v1096 = vpop.f32.mrb[0].mxu0
      %v1097 = vpop.f32.mrb[0].mxu0
      %v1098 = vadd.f32 0.0, %v1097
      %v1099 = vpop.f32.mrb[0].mxu0
      %1100 = vmatprep.mubr.bf16.mxu0 0
      %1101 = vmatmul.mubr.bf16.gmra.mrb[0].mxu0 %v968
      %v1102 = vpop.f32.mrb[0].mxu0
      %v1103 = vadd.f32 0.0, %v1102
      %v1104 = vpop.f32.mrb[0].mxu0
      %v1105 = vpop.f32.mrb[0].mxu0
      %v1106 = vadd.f32 0.0, %v1105
      %v1107 = vpop.f32.mrb[0].mxu0
      %1108 = vmatprep.mubr.bf16.mxu0 0
      %1109 = vmatmul.mubr.bf16.gmra.mrb[0].mxu0 %v971
      %v1110 = vpop.f32.mrb[0].mxu0
      %v1111 = vadd.f32 0.0, %v1110
      %v1112 = vpop.f32.mrb[0].mxu0
      %v1113 = vpop.f32.mrb[0].mxu0
      %v1114 = vadd.f32 0.0, %v1113
      %v1115 = vpop.f32.mrb[0].mxu0
      %1116 = vmatprep.mubr.bf16.mxu0 0
      %1117 = vmatmul.mubr.bf16.gmra.mrb[0].mxu0 %v974
      %v1118 = vpop.f32.mrb[0].mxu0
      %v1119 = vadd.f32 0.0, %v1118
      %v1120 = vpop.f32.mrb[0].mxu0
      %v1121 = vpop.f32.mrb[0].mxu0
      %v1122 = vadd.f32 0.0, %v1121
      %v1123 = vpop.f32.mrb[0].mxu0
      %1124 = vmatprep.mubr.bf16.mxu0 0
      %1125 = vmatmul.mubr.bf16.gmra.mrb[0].mxu0 %v977
      %v1126 = vpop.f32.mrb[0].mxu0
      %v1127 = vadd.f32 0.0, %v1126
      %v1128 = vpop.f32.mrb[0].mxu0
      %v1129 = vpop.f32.mrb[0].mxu0
      %v1130 = vadd.f32 0.0, %v1129
      %v1131 = vpop.f32.mrb[0].mxu0
      %1132 = vmatprep.mubr.bf16.mxu0 0
      %1133 = vmatmul.mubr.bf16.gmra.mrb[0].mxu0 %v980
      %v1134 = vpop.f32.mrb[0].mxu0
      %v1135 = vadd.f32 0.0, %v1134
      %v1136 = vpop.f32.mrb[0].mxu0
      %v1137 = vpop.f32.mrb[0].mxu0
      %v1138 = vadd.f32 0.0, %v1137
      %v1139 = vpop.f32.mrb[0].mxu0
      %1140 = vmatprep.mubr.bf16.mxu0 0
      %1141 = vmatmul.mubr.bf16.gmra.mrb[0].mxu0 %v983
      %v1142 = vpop.f32.mrb[0].mxu0
      %v1143 = vadd.f32 0.0, %v1142
      %v1144 = vpop.f32.mrb[0].mxu0
      %v1145 = vpop.f32.mrb[0].mxu0
      %v1146 = vadd.f32 0.0, %v1145
      %v1147 = vpop.f32.mrb[0].mxu0
      %1148 = vdwg.mxu0
      %v1149 = vld [vmem:[#allocation4] sm:$0xff]
      %v1150 = vld [vmem:[#allocation4 + $0x8] sm:$0xff]
      %v1151 = vld [vmem:[#allocation4 + $0x10] sm:$0xff]
      %v1152 = vld [vmem:[#allocation4 + $0x18] sm:$0xff]
      %v1153 = vld [vmem:[#allocation4 + $0x20] sm:$0xff]
      %v1154 = vld [vmem:[#allocation4 + $0x28] sm:$0xff]
      %v1155 = vld [vmem:[#allocation4 + $0x30] sm:$0xff]
      %v1156 = vld [vmem:[#allocation4 + $0x38] sm:$0xff]
      %v1157 = vld [vmem:[#allocation4 + $0x40] sm:$0xff]
      %v1158 = vld [vmem:[#allocation4 + $0x48] sm:$0xff]
      %v1159 = vld [vmem:[#allocation4 + $0x50] sm:$0xff]
      %v1160 = vld [vmem:[#allocation4 + $0x58] sm:$0xff]
      %v1161 = vld [vmem:[#allocation4 + $0x60] sm:$0xff]
      %v1162 = vld [vmem:[#allocation4 + $0x68] sm:$0xff]
      %v1163 = vld [vmem:[#allocation4 + $0x70] sm:$0xff]
      %v1164 = vld [vmem:[#allocation4 + $0x78] sm:$0xff]
      %v1165 = vld [vmem:[#allocation4 + $0x80] sm:$0xff]
      %v1166 = vld [vmem:[#allocation4 + $0x88] sm:$0xff]
      %v1167 = vld [vmem:[#allocation4 + $0x90] sm:$0xff]
      %v1168 = vld [vmem:[#allocation4 + $0x98] sm:$0xff]
      %v1169 = vld [vmem:[#allocation4 + $0xa0] sm:$0xff]
      %v1170 = vld [vmem:[#allocation4 + $0xa8] sm:$0xff]
      %v1171 = vld [vmem:[#allocation4 + $0xb0] sm:$0xff]
      %v1172 = vld [vmem:[#allocation4 + $0xb8] sm:$0xff]
      %v1173 = vld [vmem:[#allocation4 + $0xc0] sm:$0xff]
      %v1174 = vld [vmem:[#allocation4 + $0xc8] sm:$0xff]
      %v1175 = vld [vmem:[#allocation4 + $0xd0] sm:$0xff]
      %v1176 = vld [vmem:[#allocation4 + $0xd8] sm:$0xff]
      %v1177 = vld [vmem:[#allocation4 + $0xe0] sm:$0xff]
      %v1178 = vld [vmem:[#allocation4 + $0xe8] sm:$0xff]
      %v1179 = vld [vmem:[#allocation4 + $0xf0] sm:$0xff]
      %v1180 = vld [vmem:[#allocation4 + $0xf8] sm:$0xff]
      %v1181 = vadd.f32 %v1149, %v1023
      %v1182 = vadd.f32 %v1150, %v1026
      %v1183 = vadd.f32 %v1151, %v1031
      %v1184 = vadd.f32 %v1152, %v1034
      %v1185 = vadd.f32 %v1153, %v1039
      %v1186 = vadd.f32 %v1154, %v1042
      %v1187 = vadd.f32 %v1155, %v1047
      %v1188 = vadd.f32 %v1156, %v1050
      %v1189 = vadd.f32 %v1157, %v1055
      %v1190 = vadd.f32 %v1158, %v1058
      %v1191 = vadd.f32 %v1159, %v1063
      %v1192 = vadd.f32 %v1160, %v1066
      %v1193 = vadd.f32 %v1161, %v1071
      %v1194 = vadd.f32 %v1162, %v1074
      %v1195 = vadd.f32 %v1163, %v1079
      %v1196 = vadd.f32 %v1164, %v1082
      %v1197 = vadd.f32 %v1165, %v1087
      %v1198 = vadd.f32 %v1166, %v1090
      %v1199 = vadd.f32 %v1167, %v1095
      %v1200 = vadd.f32 %v1168, %v1098
      %v1201 = vadd.f32 %v1169, %v1103
      %v1202 = vadd.f32 %v1170, %v1106
      %v1203 = vadd.f32 %v1171, %v1111
      %v1204 = vadd.f32 %v1172, %v1114
      %v1205 = vadd.f32 %v1173, %v1119
      %v1206 = vadd.f32 %v1174, %v1122
      %v1207 = vadd.f32 %v1175, %v1127
      %v1208 = vadd.f32 %v1176, %v1130
      %v1209 = vadd.f32 %v1177, %v1135
      %v1210 = vadd.f32 %v1178, %v1138
      %v1211 = vadd.f32 %v1179, %v1143
      %v1212 = vadd.f32 %v1180, %v1146
      %1213 = vst.msk [vmem:[#allocation4] sm:$0xff] %vm205, %v1181
      %1214 = vst.msk [vmem:[#allocation4 + $0x8] sm:$0xff] %vm205, %v1182
      %1215 = vst.msk [vmem:[#allocation4 + $0x10] sm:$0xff] %vm205, %v1183
      %1216 = vst.msk [vmem:[#allocation4 + $0x18] sm:$0xff] %vm205, %v1184
      %1217 = vst.msk [vmem:[#allocation4 + $0x20] sm:$0xff] %vm205, %v1185
      %1218 = vst.msk [vmem:[#allocation4 + $0x28] sm:$0xff] %vm205, %v1186
      %1219 = vst.msk [vmem:[#allocation4 + $0x30] sm:$0xff] %vm205, %v1187
      %1220 = vst.msk [vmem:[#allocation4 + $0x38] sm:$0xff] %vm205, %v1188
      %1221 = vst.msk [vmem:[#allocation4 + $0x40] sm:$0xff] %vm205, %v1189
      %1222 = vst.msk [vmem:[#allocation4 + $0x48] sm:$0xff] %vm205, %v1190
      %1223 = vst.msk [vmem:[#allocation4 + $0x50] sm:$0xff] %vm205, %v1191
      %1224 = vst.msk [vmem:[#allocation4 + $0x58] sm:$0xff] %vm205, %v1192
      %1225 = vst.msk [vmem:[#allocation4 + $0x60] sm:$0xff] %vm205, %v1193
      %1226 = vst.msk [vmem:[#allocation4 + $0x68] sm:$0xff] %vm205, %v1194
      %1227 = vst.msk [vmem:[#allocation4 + $0x70] sm:$0xff] %vm205, %v1195
      %1228 = vst.msk [vmem:[#allocation4 + $0x78] sm:$0xff] %vm205, %v1196
      %1229 = vst.msk [vmem:[#allocation4 + $0x80] sm:$0xff] %vm205, %v1197
      %1230 = vst.msk [vmem:[#allocation4 + $0x88] sm:$0xff] %vm205, %v1198
      %1231 = vst.msk [vmem:[#allocation4 + $0x90] sm:$0xff] %vm205, %v1199
      %1232 = vst.msk [vmem:[#allocation4 + $0x98] sm:$0xff] %vm205, %v1200
      %1233 = vst.msk [vmem:[#allocation4 + $0xa0] sm:$0xff] %vm205, %v1201
      %1234 = vst.msk [vmem:[#allocation4 + $0xa8] sm:$0xff] %vm205, %v1202
      %1235 = vst.msk [vmem:[#allocation4 + $0xb0] sm:$0xff] %vm205, %v1203
      %1236 = vst.msk [vmem:[#allocation4 + $0xb8] sm:$0xff] %vm205, %v1204
      %1237 = vst.msk [vmem:[#allocation4 + $0xc0] sm:$0xff] %vm205, %v1205
      %1238 = vst.msk [vmem:[#allocation4 + $0xc8] sm:$0xff] %vm205, %v1206
      %1239 = vst.msk [vmem:[#allocation4 + $0xd0] sm:$0xff] %vm205, %v1207
      %1240 = vst.msk [vmem:[#allocation4 + $0xd8] sm:$0xff] %vm205, %v1208
      %1241 = vst.msk [vmem:[#allocation4 + $0xe0] sm:$0xff] %vm205, %v1209
      %1242 = vst.msk [vmem:[#allocation4 + $0xe8] sm:$0xff] %vm205, %v1210
      %1243 = vst.msk [vmem:[#allocation4 + $0xf0] sm:$0xff] %vm205, %v1211
      %1244 = vst.msk [vmem:[#allocation4 + $0xf8] sm:$0xff] %vm205, %v1212
      %s1245 = scalar_lea.vmem [#allocation3], 16
      %v1246 = vld [vmem:[%s1245] sm:$0xff]
      %v1247 = vld [vmem:[%s1245 + $0x8] sm:$0xff]
      %v1248 = vld [vmem:[%s1245 + $0x10] sm:$0xff]
      %v1249 = vld [vmem:[%s1245 + $0x18] sm:$0xff]
      %v1250 = vld [vmem:[%s1245 + $0x20] sm:$0xff]
      %v1251 = vld [vmem:[%s1245 + $0x28] sm:$0xff]
      %v1252 = vld [vmem:[%s1245 + $0x30] sm:$0xff]
      %v1253 = vld [vmem:[%s1245 + $0x38] sm:$0xff]
      %v1254 = vld [vmem:[%s1245 + $0x40] sm:$0xff]
      %v1255 = vld [vmem:[%s1245 + $0x48] sm:$0xff]
      %v1256 = vld [vmem:[%s1245 + $0x50] sm:$0xff]
      %v1257 = vld [vmem:[%s1245 + $0x58] sm:$0xff]
      %v1258 = vld [vmem:[%s1245 + $0x60] sm:$0xff]
      %v1259 = vld [vmem:[%s1245 + $0x68] sm:$0xff]
      %v1260 = vld [vmem:[%s1245 + $0x70] sm:$0xff]
      %v1261 = vld [vmem:[%s1245 + $0x78] sm:$0xff]
      %s1262 = scalar_lea.vmem %s1, 16
      %v1263 = vld [vmem:[%s1262] sm:$0xf]
      %v1264 = vld [vmem:[%s1262 + $0x4] sm:$0x3]
      %v1267 = vunpack.c.l.b16 %v1263
      %v1268 = vunpack.c.l.b16 %v1264
      %v1269 = vpack.c.b16 %v1268, %v1267
      %v1271 = vsel %vm666, %v1246, 0
      %v1274 = vsel %vm666, %v1247, 0
      %v1277 = vsel %vm666, %v1248, 0
      %v1280 = vsel %vm666, %v1249, 0
      %v1283 = vsel %vm666, %v1250, 0
      %v1286 = vsel %vm666, %v1251, 0
      %v1289 = vsel %vm666, %v1252, 0
      %v1292 = vsel %vm666, %v1253, 0
      %v1295 = vsel %vm666, %v1254, 0
      %v1298 = vsel %vm666, %v1255, 0
      %v1301 = vsel %vm666, %v1256, 0
      %v1304 = vsel %vm666, %v1257, 0
      %v1307 = vsel %vm666, %v1258, 0
      %v1310 = vsel %vm666, %v1259, 0
      %v1313 = vsel %vm666, %v1260, 0
      %v1316 = vsel %vm666, %v1261, 0
      %v1319 = vsel %vm715, %v1269, 0
      %1321 = vmatprep.subr.bf16.mxu0 0
      %1322 = vmatpush1.bf16.msra.mxu0 %v1319
      %1323 = vmatprep.subr.bf16.mxu0 0
      %1324 = vmatpush1.bf16.msra.mxu0 0
      %1325 = vmatprep.subr.bf16.mxu0 0
      %1326 = vmatpush1.bf16.msra.mxu0 0
      %1327 = vmatprep.subr.bf16.mxu0 0
      %1328 = vmatpush1.bf16.msra.mxu0 0
      %1329 = vmatprep.subr.bf16.mxu0 0
      %1330 = vmatpush1.bf16.msra.mxu0 0
      %1331 = vmatprep.subr.bf16.mxu0 0
      %1332 = vmatpush1.bf16.msra.mxu0 0
      %1333 = vmatprep.subr.bf16.mxu0 0
      %1334 = vmatpush1.bf16.msra.mxu0 0
      %1335 = vmatprep.subr.bf16.mxu0 0
      %1336 = vmatpush1.bf16.msra.mxu0 0
      %1337 = vmatprep.subr.bf16.mxu0 0
      %1338 = vmatpush1.bf16.msra.mxu0 0
      %1339 = vmatprep.subr.bf16.mxu0 0
      %1340 = vmatpush1.bf16.msra.mxu0 0
      %1341 = vmatprep.subr.bf16.mxu0 0
      %1342 = vmatpush1.bf16.msra.mxu0 0
      %1343 = vmatprep.subr.bf16.mxu0 0
      %1344 = vmatpush1.bf16.msra.mxu0 0
      %1345 = vmatprep.subr.bf16.mxu0 0
      %1346 = vmatpush1.bf16.msra.mxu0 0
      %1347 = vmatprep.subr.bf16.mxu0 0
      %1348 = vmatpush1.bf16.msra.mxu0 0
      %1349 = vmatprep.subr.bf16.mxu0 0
      %1350 = vmatpush1.bf16.msra.mxu0 0
      %1351 = vmatprep.subr.bf16.mxu0 0
      %1352 = vmatpush1.bf16.msra.mxu0 0
      %1353 = vmatprep.mubr.bf16.mxu0 0
      %1354 = vmatmul.mubr.bf16.gmra.mrb[0].mxu0 %v1271
      %v1355 = vpop.f32.mrb[0].mxu0
      %v1356 = vadd.f32 0.0, %v1355
      %v1357 = vpop.f32.mrb[0].mxu0
      %v1358 = vpop.f32.mrb[0].mxu0
      %v1359 = vadd.f32 0.0, %v1358
      %v1360 = vpop.f32.mrb[0].mxu0
      %1361 = vmatprep.mubr.bf16.mxu0 0
      %1362 = vmatmul.mubr.bf16.gmra.mrb[0].mxu0 %v1274
      %v1363 = vpop.f32.mrb[0].mxu0
      %v1364 = vadd.f32 0.0, %v1363
      %v1365 = vpop.f32.mrb[0].mxu0
      %v1366 = vpop.f32.mrb[0].mxu0
      %v1367 = vadd.f32 0.0, %v1366
      %v1368 = vpop.f32.mrb[0].mxu0
      %1369 = vmatprep.mubr.bf16.mxu0 0
      %1370 = vmatmul.mubr.bf16.gmra.mrb[0].mxu0 %v1277
      %v1371 = vpop.f32.mrb[0].mxu0
      %v1372 = vadd.f32 0.0, %v1371
      %v1373 = vpop.f32.mrb[0].mxu0
      %v1374 = vpop.f32.mrb[0].mxu0
      %v1375 = vadd.f32 0.0, %v1374
      %v1376 = vpop.f32.mrb[0].mxu0
      %1377 = vmatprep.mubr.bf16.mxu0 0
      %1378 = vmatmul.mubr.bf16.gmra.mrb[0].mxu0 %v1280
      %v1379 = vpop.f32.mrb[0].mxu0
      %v1380 = vadd.f32 0.0, %v1379
      %v1381 = vpop.f32.mrb[0].mxu0
      %v1382 = vpop.f32.mrb[0].mxu0
      %v1383 = vadd.f32 0.0, %v1382
      %v1384 = vpop.f32.mrb[0].mxu0
      %1385 = vmatprep.mubr.bf16.mxu0 0
      %1386 = vmatmul.mubr.bf16.gmra.mrb[0].mxu0 %v1283
      %v1387 = vpop.f32.mrb[0].mxu0
      %v1388 = vadd.f32 0.0, %v1387
      %v1389 = vpop.f32.mrb[0].mxu0
      %v1390 = vpop.f32.mrb[0].mxu0
      %v1391 = vadd.f32 0.0, %v1390
      %v1392 = vpop.f32.mrb[0].mxu0
      %1393 = vmatprep.mubr.bf16.mxu0 0
      %1394 = vmatmul.mubr.bf16.gmra.mrb[0].mxu0 %v1286
      %v1395 = vpop.f32.mrb[0].mxu0
      %v1396 = vadd.f32 0.0, %v1395
      %v1397 = vpop.f32.mrb[0].mxu0
      %v1398 = vpop.f32.mrb[0].mxu0
      %v1399 = vadd.f32 0.0, %v1398
      %v1400 = vpop.f32.mrb[0].mxu0
      %1401 = vmatprep.mubr.bf16.mxu0 0
      %1402 = vmatmul.mubr.bf16.gmra.mrb[0].mxu0 %v1289
      %v1403 = vpop.f32.mrb[0].mxu0
      %v1404 = vadd.f32 0.0, %v1403
      %v1405 = vpop.f32.mrb[0].mxu0
      %v1406 = vpop.f32.mrb[0].mxu0
      %v1407 = vadd.f32 0.0, %v1406
      %v1408 = vpop.f32.mrb[0].mxu0
      %1409 = vmatprep.mubr.bf16.mxu0 0
      %1410 = vmatmul.mubr.bf16.gmra.mrb[0].mxu0 %v1292
      %v1411 = vpop.f32.mrb[0].mxu0
      %v1412 = vadd.f32 0.0, %v1411
      %v1413 = vpop.f32.mrb[0].mxu0
      %v1414 = vpop.f32.mrb[0].mxu0
      %v1415 = vadd.f32 0.0, %v1414
      %v1416 = vpop.f32.mrb[0].mxu0
      %1417 = vmatprep.mubr.bf16.mxu0 0
      %1418 = vmatmul.mubr.bf16.gmra.mrb[0].mxu0 %v1295
      %v1419 = vpop.f32.mrb[0].mxu0
      %v1420 = vadd.f32 0.0, %v1419
      %v1421 = vpop.f32.mrb[0].mxu0
      %v1422 = vpop.f32.mrb[0].mxu0
      %v1423 = vadd.f32 0.0, %v1422
      %v1424 = vpop.f32.mrb[0].mxu0
      %1425 = vmatprep.mubr.bf16.mxu0 0
      %1426 = vmatmul.mubr.bf16.gmra.mrb[0].mxu0 %v1298
      %v1427 = vpop.f32.mrb[0].mxu0
      %v1428 = vadd.f32 0.0, %v1427
      %v1429 = vpop.f32.mrb[0].mxu0
      %v1430 = vpop.f32.mrb[0].mxu0
      %v1431 = vadd.f32 0.0, %v1430
      %v1432 = vpop.f32.mrb[0].mxu0
      %1433 = vmatprep.mubr.bf16.mxu0 0
      %1434 = vmatmul.mubr.bf16.gmra.mrb[0].mxu0 %v1301
      %v1435 = vpop.f32.mrb[0].mxu0
      %v1436 = vadd.f32 0.0, %v1435
      %v1437 = vpop.f32.mrb[0].mxu0
      %v1438 = vpop.f32.mrb[0].mxu0
      %v1439 = vadd.f32 0.0, %v1438
      %v1440 = vpop.f32.mrb[0].mxu0
      %1441 = vmatprep.mubr.bf16.mxu0 0
      %1442 = vmatmul.mubr.bf16.gmra.mrb[0].mxu0 %v1304
      %v1443 = vpop.f32.mrb[0].mxu0
      %v1444 = vadd.f32 0.0, %v1443
      %v1445 = vpop.f32.mrb[0].mxu0
      %v1446 = vpop.f32.mrb[0].mxu0
      %v1447 = vadd.f32 0.0, %v1446
      %v1448 = vpop.f32.mrb[0].mxu0
      %1449 = vmatprep.mubr.bf16.mxu0 0
      %1450 = vmatmul.mubr.bf16.gmra.mrb[0].mxu0 %v1307
      %v1451 = vpop.f32.mrb[0].mxu0
      %v1452 = vadd.f32 0.0, %v1451
      %v1453 = vpop.f32.mrb[0].mxu0
      %v1454 = vpop.f32.mrb[0].mxu0
      %v1455 = vadd.f32 0.0, %v1454
      %v1456 = vpop.f32.mrb[0].mxu0
      %1457 = vmatprep.mubr.bf16.mxu0 0
      %1458 = vmatmul.mubr.bf16.gmra.mrb[0].mxu0 %v1310
      %v1459 = vpop.f32.mrb[0].mxu0
      %v1460 = vadd.f32 0.0, %v1459
      %v1461 = vpop.f32.mrb[0].mxu0
      %v1462 = vpop.f32.mrb[0].mxu0
      %v1463 = vadd.f32 0.0, %v1462
      %v1464 = vpop.f32.mrb[0].mxu0
      %1465 = vmatprep.mubr.bf16.mxu0 0
      %1466 = vmatmul.mubr.bf16.gmra.mrb[0].mxu0 %v1313
      %v1467 = vpop.f32.mrb[0].mxu0
      %v1468 = vadd.f32 0.0, %v1467
      %v1469 = vpop.f32.mrb[0].mxu0
      %v1470 = vpop.f32.mrb[0].mxu0
      %v1471 = vadd.f32 0.0, %v1470
      %v1472 = vpop.f32.mrb[0].mxu0
      %1473 = vmatprep.mubr.bf16.mxu0 0
      %1474 = vmatmul.mubr.bf16.gmra.mrb[0].mxu0 %v1316
      %v1475 = vpop.f32.mrb[0].mxu0
      %v1476 = vadd.f32 0.0, %v1475
      %v1477 = vpop.f32.mrb[0].mxu0
      %v1478 = vpop.f32.mrb[0].mxu0
      %v1479 = vadd.f32 0.0, %v1478
      %v1480 = vpop.f32.mrb[0].mxu0
      %1481 = vdwg.mxu0
      %v1482 = vld [vmem:[#allocation4] sm:$0xff]
      %v1483 = vld [vmem:[#allocation4 + $0x8] sm:$0xff]
      %v1484 = vld [vmem:[#allocation4 + $0x10] sm:$0xff]
      %v1485 = vld [vmem:[#allocation4 + $0x18] sm:$0xff]
      %v1486 = vld [vmem:[#allocation4 + $0x20] sm:$0xff]
      %v1487 = vld [vmem:[#allocation4 + $0x28] sm:$0xff]
      %v1488 = vld [vmem:[#allocation4 + $0x30] sm:$0xff]
      %v1489 = vld [vmem:[#allocation4 + $0x38] sm:$0xff]
      %v1490 = vld [vmem:[#allocation4 + $0x40] sm:$0xff]
      %v1491 = vld [vmem:[#allocation4 + $0x48] sm:$0xff]
      %v1492 = vld [vmem:[#allocation4 + $0x50] sm:$0xff]
      %v1493 = vld [vmem:[#allocation4 + $0x58] sm:$0xff]
      %v1494 = vld [vmem:[#allocation4 + $0x60] sm:$0xff]
      %v1495 = vld [vmem:[#allocation4 + $0x68] sm:$0xff]
      %v1496 = vld [vmem:[#allocation4 + $0x70] sm:$0xff]
      %v1497 = vld [vmem:[#allocation4 + $0x78] sm:$0xff]
      %v1498 = vld [vmem:[#allocation4 + $0x80] sm:$0xff]
      %v1499 = vld [vmem:[#allocation4 + $0x88] sm:$0xff]
      %v1500 = vld [vmem:[#allocation4 + $0x90] sm:$0xff]
      %v1501 = vld [vmem:[#allocation4 + $0x98] sm:$0xff]
      %v1502 = vld [vmem:[#allocation4 + $0xa0] sm:$0xff]
      %v1503 = vld [vmem:[#allocation4 + $0xa8] sm:$0xff]
      %v1504 = vld [vmem:[#allocation4 + $0xb0] sm:$0xff]
      %v1505 = vld [vmem:[#allocation4 + $0xb8] sm:$0xff]
      %v1506 = vld [vmem:[#allocation4 + $0xc0] sm:$0xff]
      %v1507 = vld [vmem:[#allocation4 + $0xc8] sm:$0xff]
      %v1508 = vld [vmem:[#allocation4 + $0xd0] sm:$0xff]
      %v1509 = vld [vmem:[#allocation4 + $0xd8] sm:$0xff]
      %v1510 = vld [vmem:[#allocation4 + $0xe0] sm:$0xff]
      %v1511 = vld [vmem:[#allocation4 + $0xe8] sm:$0xff]
      %v1512 = vld [vmem:[#allocation4 + $0xf0] sm:$0xff]
      %v1513 = vld [vmem:[#allocation4 + $0xf8] sm:$0xff]
      %v1514 = vadd.f32 %v1482, %v1356
      %v1515 = vadd.f32 %v1483, %v1359
      %v1516 = vadd.f32 %v1484, %v1364
      %v1517 = vadd.f32 %v1485, %v1367
      %v1518 = vadd.f32 %v1486, %v1372
      %v1519 = vadd.f32 %v1487, %v1375
      %v1520 = vadd.f32 %v1488, %v1380
      %v1521 = vadd.f32 %v1489, %v1383
      %v1522 = vadd.f32 %v1490, %v1388
      %v1523 = vadd.f32 %v1491, %v1391
      %v1524 = vadd.f32 %v1492, %v1396
      %v1525 = vadd.f32 %v1493, %v1399
      %v1526 = vadd.f32 %v1494, %v1404
      %v1527 = vadd.f32 %v1495, %v1407
      %v1528 = vadd.f32 %v1496, %v1412
      %v1529 = vadd.f32 %v1497, %v1415
      %v1530 = vadd.f32 %v1498, %v1420
      %v1531 = vadd.f32 %v1499, %v1423
      %v1532 = vadd.f32 %v1500, %v1428
      %v1533 = vadd.f32 %v1501, %v1431
      %v1534 = vadd.f32 %v1502, %v1436
      %v1535 = vadd.f32 %v1503, %v1439
      %v1536 = vadd.f32 %v1504, %v1444
      %v1537 = vadd.f32 %v1505, %v1447
      %v1538 = vadd.f32 %v1506, %v1452
      %v1539 = vadd.f32 %v1507, %v1455
      %v1540 = vadd.f32 %v1508, %v1460
      %v1541 = vadd.f32 %v1509, %v1463
      %v1542 = vadd.f32 %v1510, %v1468
      %v1543 = vadd.f32 %v1511, %v1471
      %v1544 = vadd.f32 %v1512, %v1476
      %v1545 = vadd.f32 %v1513, %v1479
      %1546 = vst.msk [vmem:[#allocation4] sm:$0xff] %vm205, %v1514
      %1547 = vst.msk [vmem:[#allocation4 + $0x8] sm:$0xff] %vm205, %v1515
      %1548 = vst.msk [vmem:[#allocation4 + $0x10] sm:$0xff] %vm205, %v1516
      %1549 = vst.msk [vmem:[#allocation4 + $0x18] sm:$0xff] %vm205, %v1517
      %1550 = vst.msk [vmem:[#allocation4 + $0x20] sm:$0xff] %vm205, %v1518
      %1551 = vst.msk [vmem:[#allocation4 + $0x28] sm:$0xff] %vm205, %v1519
      %1552 = vst.msk [vmem:[#allocation4 + $0x30] sm:$0xff] %vm205, %v1520
      %1553 = vst.msk [vmem:[#allocation4 + $0x38] sm:$0xff] %vm205, %v1521
      %1554 = vst.msk [vmem:[#allocation4 + $0x40] sm:$0xff] %vm205, %v1522
      %1555 = vst.msk [vmem:[#allocation4 + $0x48] sm:$0xff] %vm205, %v1523
      %1556 = vst.msk [vmem:[#allocation4 + $0x50] sm:$0xff] %vm205, %v1524
      %1557 = vst.msk [vmem:[#allocation4 + $0x58] sm:$0xff] %vm205, %v1525
      %1558 = vst.msk [vmem:[#allocation4 + $0x60] sm:$0xff] %vm205, %v1526
      %1559 = vst.msk [vmem:[#allocation4 + $0x68] sm:$0xff] %vm205, %v1527
      %1560 = vst.msk [vmem:[#allocation4 + $0x70] sm:$0xff] %vm205, %v1528
      %1561 = vst.msk [vmem:[#allocation4 + $0x78] sm:$0xff] %vm205, %v1529
      %1562 = vst.msk [vmem:[#allocation4 + $0x80] sm:$0xff] %vm205, %v1530
      %1563 = vst.msk [vmem:[#allocation4 + $0x88] sm:$0xff] %vm205, %v1531
      %1564 = vst.msk [vmem:[#allocation4 + $0x90] sm:$0xff] %vm205, %v1532
      %1565 = vst.msk [vmem:[#allocation4 + $0x98] sm:$0xff] %vm205, %v1533
      %1566 = vst.msk [vmem:[#allocation4 + $0xa0] sm:$0xff] %vm205, %v1534
      %1567 = vst.msk [vmem:[#allocation4 + $0xa8] sm:$0xff] %vm205, %v1535
      %1568 = vst.msk [vmem:[#allocation4 + $0xb0] sm:$0xff] %vm205, %v1536
      %1569 = vst.msk [vmem:[#allocation4 + $0xb8] sm:$0xff] %vm205, %v1537
      %1570 = vst.msk [vmem:[#allocation4 + $0xc0] sm:$0xff] %vm205, %v1538
      %1571 = vst.msk [vmem:[#allocation4 + $0xc8] sm:$0xff] %vm205, %v1539
      %1572 = vst.msk [vmem:[#allocation4 + $0xd0] sm:$0xff] %vm205, %v1540
      %1573 = vst.msk [vmem:[#allocation4 + $0xd8] sm:$0xff] %vm205, %v1541
      %1574 = vst.msk [vmem:[#allocation4 + $0xe0] sm:$0xff] %vm205, %v1542
      %1575 = vst.msk [vmem:[#allocation4 + $0xe8] sm:$0xff] %vm205, %v1543
      %1576 = vst.msk [vmem:[#allocation4 + $0xf0] sm:$0xff] %vm205, %v1544
      %1577 = vst.msk [vmem:[#allocation4 + $0xf8] sm:$0xff] %vm205, %v1545
      %v1578 = vld [vmem:[#allocation4] sm:$0xff]
      %v1579 = vld [vmem:[#allocation4 + $0x8] sm:$0xff]
      %v1580 = vld [vmem:[#allocation4 + $0x10] sm:$0xff]
      %v1581 = vld [vmem:[#allocation4 + $0x18] sm:$0xff]
      %v1582 = vld [vmem:[#allocation4 + $0x20] sm:$0xff]
      %v1583 = vld [vmem:[#allocation4 + $0x28] sm:$0xff]
      %v1584 = vld [vmem:[#allocation4 + $0x30] sm:$0xff]
      %v1585 = vld [vmem:[#allocation4 + $0x38] sm:$0xff]
      %v1586 = vld [vmem:[#allocation4 + $0x40] sm:$0xff]
      %v1587 = vld [vmem:[#allocation4 + $0x48] sm:$0xff]
      %v1588 = vld [vmem:[#allocation4 + $0x50] sm:$0xff]
      %v1589 = vld [vmem:[#allocation4 + $0x58] sm:$0xff]
      %v1590 = vld [vmem:[#allocation4 + $0x60] sm:$0xff]
      %v1591 = vld [vmem:[#allocation4 + $0x68] sm:$0xff]
      %v1592 = vld [vmem:[#allocation4 + $0x70] sm:$0xff]
      %v1593 = vld [vmem:[#allocation4 + $0x78] sm:$0xff]
      %v1594 = vld [vmem:[#allocation4 + $0x80] sm:$0xff]
      %v1595 = vld [vmem:[#allocation4 + $0x88] sm:$0xff]
      %v1596 = vld [vmem:[#allocation4 + $0x90] sm:$0xff]
      %v1597 = vld [vmem:[#allocation4 + $0x98] sm:$0xff]
      %v1598 = vld [vmem:[#allocation4 + $0xa0] sm:$0xff]
      %v1599 = vld [vmem:[#allocation4 + $0xa8] sm:$0xff]
      %v1600 = vld [vmem:[#allocation4 + $0xb0] sm:$0xff]
      %v1601 = vld [vmem:[#allocation4 + $0xb8] sm:$0xff]
      %v1602 = vld [vmem:[#allocation4 + $0xc0] sm:$0xff]
      %v1603 = vld [vmem:[#allocation4 + $0xc8] sm:$0xff]
      %v1604 = vld [vmem:[#allocation4 + $0xd0] sm:$0xff]
      %v1605 = vld [vmem:[#allocation4 + $0xd8] sm:$0xff]
      %v1606 = vld [vmem:[#allocation4 + $0xe0] sm:$0xff]
      %v1607 = vld [vmem:[#allocation4 + $0xe8] sm:$0xff]
      %v1608 = vld [vmem:[#allocation4 + $0xf0] sm:$0xff]
      %v1609 = vld [vmem:[#allocation4 + $0xf8] sm:$0xff]
      %v1610 = vsel %vm205, %v1578, 0.0
      %v1611 = vsel %vm205, %v1579, 0.0
      %v1612 = vadd.f32 %v1610, %v1611
      %v1613 = vsel %vm205, %v1580, 0.0
      %v1614 = vadd.f32 %v1612, %v1613
      %v1615 = vsel %vm205, %v1581, 0.0
      %v1616 = vadd.f32 %v1614, %v1615
      %v1617 = vsel %vm205, %v1582, 0.0
      %v1618 = vadd.f32 %v1616, %v1617
      %v1619 = vsel %vm205, %v1583, 0.0
      %v1620 = vadd.f32 %v1618, %v1619
      %v1621 = vsel %vm205, %v1584, 0.0
      %v1622 = vadd.f32 %v1620, %v1621
      %v1623 = vsel %vm205, %v1585, 0.0
      %v1624 = vadd.f32 %v1622, %v1623
      %v1625 = vsel %vm205, %v1586, 0.0
      %v1626 = vadd.f32 %v1624, %v1625
      %v1627 = vsel %vm205, %v1587, 0.0
      %v1628 = vadd.f32 %v1626, %v1627
      %v1629 = vsel %vm205, %v1588, 0.0
      %v1630 = vadd.f32 %v1628, %v1629
      %v1631 = vsel %vm205, %v1589, 0.0
      %v1632 = vadd.f32 %v1630, %v1631
      %v1633 = vsel %vm205, %v1590, 0.0
      %v1634 = vadd.f32 %v1632, %v1633
      %v1635 = vsel %vm205, %v1591, 0.0
      %v1636 = vadd.f32 %v1634, %v1635
      %v1637 = vsel %vm205, %v1592, 0.0
      %v1638 = vadd.f32 %v1636, %v1637
      %v1639 = vsel %vm205, %v1593, 0.0
      %v1640 = vadd.f32 %v1638, %v1639
      %v1641 = vsel %vm205, %v1594, 0.0
      %v1642 = vadd.f32 %v1640, %v1641
      %v1643 = vsel %vm205, %v1595, 0.0
      %v1644 = vadd.f32 %v1642, %v1643
      %v1645 = vsel %vm205, %v1596, 0.0
      %v1646 = vadd.f32 %v1644, %v1645
      %v1647 = vsel %vm205, %v1597, 0.0
      %v1648 = vadd.f32 %v1646, %v1647
      %v1649 = vsel %vm205, %v1598, 0.0
      %v1650 = vadd.f32 %v1648, %v1649
      %v1651 = vsel %vm205, %v1599, 0.0
      %v1652 = vadd.f32 %v1650, %v1651
      %v1653 = vsel %vm205, %v1600, 0.0
      %v1654 = vadd.f32 %v1652, %v1653
      %v1655 = vsel %vm205, %v1601, 0.0
      %v1656 = vadd.f32 %v1654, %v1655
      %v1657 = vsel %vm205, %v1602, 0.0
      %v1658 = vadd.f32 %v1656, %v1657
      %v1659 = vsel %vm205, %v1603, 0.0
      %v1660 = vadd.f32 %v1658, %v1659
      %v1661 = vsel %vm205, %v1604, 0.0
      %v1662 = vadd.f32 %v1660, %v1661
      %v1663 = vsel %vm205, %v1605, 0.0
      %v1664 = vadd.f32 %v1662, %v1663
      %v1665 = vsel %vm205, %v1606, 0.0
      %v1666 = vadd.f32 %v1664, %v1665
      %v1667 = vsel %vm205, %v1607, 0.0
      %v1668 = vadd.f32 %v1666, %v1667
      %v1669 = vsel %vm205, %v1608, 0.0
      %v1670 = vadd.f32 %v1668, %v1669
      %v1671 = vsel %vm205, %v1609, 0.0
      %v1672 = vadd.f32 %v1670, %v1671
      %v1673 = vrot.slane %v1672, 4
      %v1674 = vadd.f32 %v1672, %v1673
      %v1675 = vrot.slane %v1674, 2
      %v1676 = vadd.f32 %v1674, %v1675
      %v1677 = vrot.slane %v1676, 1
      %v1678 = vadd.f32 %v1676, %v1677
      %v1679 = vmul.f32 %v1578, %v1578
      %v1680 = vmul.f32 %v1579, %v1579
      %v1681 = vmul.f32 %v1580, %v1580
      %v1682 = vmul.f32 %v1581, %v1581
      %v1683 = vmul.f32 %v1582, %v1582
      %v1684 = vmul.f32 %v1583, %v1583
      %v1685 = vmul.f32 %v1584, %v1584
      %v1686 = vmul.f32 %v1585, %v1585
      %v1687 = vmul.f32 %v1586, %v1586
      %v1688 = vmul.f32 %v1587, %v1587
      %v1689 = vmul.f32 %v1588, %v1588
      %v1690 = vmul.f32 %v1589, %v1589
      %v1691 = vmul.f32 %v1590, %v1590
      %v1692 = vmul.f32 %v1591, %v1591
      %v1693 = vmul.f32 %v1592, %v1592
      %v1694 = vmul.f32 %v1593, %v1593
      %v1695 = vmul.f32 %v1594, %v1594
      %v1696 = vmul.f32 %v1595, %v1595
      %v1697 = vmul.f32 %v1596, %v1596
      %v1698 = vmul.f32 %v1597, %v1597
      %v1699 = vmul.f32 %v1598, %v1598
      %v1700 = vmul.f32 %v1599, %v1599
      %v1701 = vmul.f32 %v1600, %v1600
      %v1702 = vmul.f32 %v1601, %v1601
      %v1703 = vmul.f32 %v1602, %v1602
      %v1704 = vmul.f32 %v1603, %v1603
      %v1705 = vmul.f32 %v1604, %v1604
      %v1706 = vmul.f32 %v1605, %v1605
      %v1707 = vmul.f32 %v1606, %v1606
      %v1708 = vmul.f32 %v1607, %v1607
      %v1709 = vmul.f32 %v1608, %v1608
      %v1710 = vmul.f32 %v1609, %v1609
      %v1711 = vsel %vm205, %v1679, 0.0
      %v1712 = vsel %vm205, %v1680, 0.0
      %v1713 = vadd.f32 %v1711, %v1712
      %v1714 = vsel %vm205, %v1681, 0.0
      %v1715 = vadd.f32 %v1713, %v1714
      %v1716 = vsel %vm205, %v1682, 0.0
      %v1717 = vadd.f32 %v1715, %v1716
      %v1718 = vsel %vm205, %v1683, 0.0
      %v1719 = vadd.f32 %v1717, %v1718
      %v1720 = vsel %vm205, %v1684, 0.0
      %v1721 = vadd.f32 %v1719, %v1720
      %v1722 = vsel %vm205, %v1685, 0.0
      %v1723 = vadd.f32 %v1721, %v1722
      %v1724 = vsel %vm205, %v1686, 0.0
      %v1725 = vadd.f32 %v1723, %v1724
      %v1726 = vsel %vm205, %v1687, 0.0
      %v1727 = vadd.f32 %v1725, %v1726
      %v1728 = vsel %vm205, %v1688, 0.0
      %v1729 = vadd.f32 %v1727, %v1728
      %v1730 = vsel %vm205, %v1689, 0.0
      %v1731 = vadd.f32 %v1729, %v1730
      %v1732 = vsel %vm205, %v1690, 0.0
      %v1733 = vadd.f32 %v1731, %v1732
      %v1734 = vsel %vm205, %v1691, 0.0
      %v1735 = vadd.f32 %v1733, %v1734
      %v1736 = vsel %vm205, %v1692, 0.0
      %v1737 = vadd.f32 %v1735, %v1736
      %v1738 = vsel %vm205, %v1693, 0.0
      %v1739 = vadd.f32 %v1737, %v1738
      %v1740 = vsel %vm205, %v1694, 0.0
      %v1741 = vadd.f32 %v1739, %v1740
      %v1742 = vsel %vm205, %v1695, 0.0
      %v1743 = vadd.f32 %v1741, %v1742
      %v1744 = vsel %vm205, %v1696, 0.0
      %v1745 = vadd.f32 %v1743, %v1744
      %v1746 = vsel %vm205, %v1697, 0.0
      %v1747 = vadd.f32 %v1745, %v1746
      %v1748 = vsel %vm205, %v1698, 0.0
      %v1749 = vadd.f32 %v1747, %v1748
      %v1750 = vsel %vm205, %v1699, 0.0
      %v1751 = vadd.f32 %v1749, %v1750
      %v1752 = vsel %vm205, %v1700, 0.0
      %v1753 = vadd.f32 %v1751, %v1752
      %v1754 = vsel %vm205, %v1701, 0.0
      %v1755 = vadd.f32 %v1753, %v1754
      %v1756 = vsel %vm205, %v1702, 0.0
      %v1757 = vadd.f32 %v1755, %v1756
      %v1758 = vsel %vm205, %v1703, 0.0
      %v1759 = vadd.f32 %v1757, %v1758
      %v1760 = vsel %vm205, %v1704, 0.0
      %v1761 = vadd.f32 %v1759, %v1760
      %v1762 = vsel %vm205, %v1705, 0.0
      %v1763 = vadd.f32 %v1761, %v1762
      %v1764 = vsel %vm205, %v1706, 0.0
      %v1765 = vadd.f32 %v1763, %v1764
      %v1766 = vsel %vm205, %v1707, 0.0
      %v1767 = vadd.f32 %v1765, %v1766
      %v1768 = vsel %vm205, %v1708, 0.0
      %v1769 = vadd.f32 %v1767, %v1768
      %v1770 = vsel %vm205, %v1709, 0.0
      %v1771 = vadd.f32 %v1769, %v1770
      %v1772 = vsel %vm205, %v1710, 0.0
      %v1773 = vadd.f32 %v1771, %v1772
      %v1774 = vrot.slane %v1773, 4
      %v1775 = vadd.f32 %v1773, %v1774
      %v1776 = vrot.slane %v1775, 2
      %v1777 = vadd.f32 %v1775, %v1776
      %v1778 = vrot.slane %v1777, 1
      %v1779 = vadd.f32 %v1777, %v1778
      %v1780 = vmul.f32 %v1678, 0.00390625
      %v1781 = vmul.f32 %v1779, 0.00390625
      %v1782 = vmul.f32 %v1780, %v1780
      %v1783 = vsub.f32 %v1781, %v1782
      %v1784 = vmax.f32 %v1783, 0.0
      %v1785 = vsub.f32 %v1578, %v1780
      %v1786 = vsub.f32 %v1579, %v1780
      %v1787 = vsub.f32 %v1580, %v1780
      %v1788 = vsub.f32 %v1581, %v1780
      %v1789 = vsub.f32 %v1582, %v1780
      %v1790 = vsub.f32 %v1583, %v1780
      %v1791 = vsub.f32 %v1584, %v1780
      %v1792 = vsub.f32 %v1585, %v1780
      %v1793 = vsub.f32 %v1586, %v1780
      %v1794 = vsub.f32 %v1587, %v1780
      %v1795 = vsub.f32 %v1588, %v1780
      %v1796 = vsub.f32 %v1589, %v1780
      %v1797 = vsub.f32 %v1590, %v1780
      %v1798 = vsub.f32 %v1591, %v1780
      %v1799 = vsub.f32 %v1592, %v1780
      %v1800 = vsub.f32 %v1593, %v1780
      %v1801 = vsub.f32 %v1594, %v1780
      %v1802 = vsub.f32 %v1595, %v1780
      %v1803 = vsub.f32 %v1596, %v1780
      %v1804 = vsub.f32 %v1597, %v1780
      %v1805 = vsub.f32 %v1598, %v1780
      %v1806 = vsub.f32 %v1599, %v1780
      %v1807 = vsub.f32 %v1600, %v1780
      %v1808 = vsub.f32 %v1601, %v1780
      %v1809 = vsub.f32 %v1602, %v1780
      %v1810 = vsub.f32 %v1603, %v1780
      %v1811 = vsub.f32 %v1604, %v1780
      %v1812 = vsub.f32 %v1605, %v1780
      %v1813 = vsub.f32 %v1606, %v1780
      %v1814 = vsub.f32 %v1607, %v1780
      %v1815 = vsub.f32 %v1608, %v1780
      %v1816 = vsub.f32 %v1609, %v1780
      %v1817 = vadd.f32 %v1784, 1e-05
      %v1818 = vrsqrt.pop %v1817
      %v1819 = vmul.f32 %v1785, %v1818
      %v1820 = vmul.f32 %v1786, %v1818
      %v1821 = vmul.f32 %v1787, %v1818
      %v1822 = vmul.f32 %v1788, %v1818
      %v1823 = vmul.f32 %v1789, %v1818
      %v1824 = vmul.f32 %v1790, %v1818
      %v1825 = vmul.f32 %v1791, %v1818
      %v1826 = vmul.f32 %v1792, %v1818
      %v1827 = vmul.f32 %v1793, %v1818
      %v1828 = vmul.f32 %v1794, %v1818
      %v1829 = vmul.f32 %v1795, %v1818
      %v1830 = vmul.f32 %v1796, %v1818
      %v1831 = vmul.f32 %v1797, %v1818
      %v1832 = vmul.f32 %v1798, %v1818
      %v1833 = vmul.f32 %v1799, %v1818
      %v1834 = vmul.f32 %v1800, %v1818
      %v1835 = vmul.f32 %v1801, %v1818
      %v1836 = vmul.f32 %v1802, %v1818
      %v1837 = vmul.f32 %v1803, %v1818
      %v1838 = vmul.f32 %v1804, %v1818
      %v1839 = vmul.f32 %v1805, %v1818
      %v1840 = vmul.f32 %v1806, %v1818
      %v1841 = vmul.f32 %v1807, %v1818
      %v1842 = vmul.f32 %v1808, %v1818
      %v1843 = vmul.f32 %v1809, %v1818
      %v1844 = vmul.f32 %v1810, %v1818
      %v1845 = vmul.f32 %v1811, %v1818
      %v1846 = vmul.f32 %v1812, %v1818
      %v1847 = vmul.f32 %v1813, %v1818
      %v1848 = vmul.f32 %v1814, %v1818
      %v1849 = vmul.f32 %v1815, %v1818
      %v1850 = vmul.f32 %v1816, %v1818
      %v1851 = vmax.f32 %v1819, 0.0
      %v1852 = vmax.f32 %v1820, 0.0
      %v1853 = vmax.f32 %v1821, 0.0
      %v1854 = vmax.f32 %v1822, 0.0
      %v1855 = vmax.f32 %v1823, 0.0
      %v1856 = vmax.f32 %v1824, 0.0
      %v1857 = vmax.f32 %v1825, 0.0
      %v1858 = vmax.f32 %v1826, 0.0
      %v1859 = vmax.f32 %v1827, 0.0
      %v1860 = vmax.f32 %v1828, 0.0
      %v1861 = vmax.f32 %v1829, 0.0
      %v1862 = vmax.f32 %v1830, 0.0
      %v1863 = vmax.f32 %v1831, 0.0
      %v1864 = vmax.f32 %v1832, 0.0
      %v1865 = vmax.f32 %v1833, 0.0
      %v1866 = vmax.f32 %v1834, 0.0
      %v1867 = vmax.f32 %v1835, 0.0
      %v1868 = vmax.f32 %v1836, 0.0
      %v1869 = vmax.f32 %v1837, 0.0
      %v1870 = vmax.f32 %v1838, 0.0
      %v1871 = vmax.f32 %v1839, 0.0
      %v1872 = vmax.f32 %v1840, 0.0
      %v1873 = vmax.f32 %v1841, 0.0
      %v1874 = vmax.f32 %v1842, 0.0
      %v1875 = vmax.f32 %v1843, 0.0
      %v1876 = vmax.f32 %v1844, 0.0
      %v1877 = vmax.f32 %v1845, 0.0
      %v1878 = vmax.f32 %v1846, 0.0
      %v1879 = vmax.f32 %v1847, 0.0
      %v1880 = vmax.f32 %v1848, 0.0
      %v1881 = vmax.f32 %v1849, 0.0
      %v1882 = vmax.f32 %v1850, 0.0
      %1883 = vst.msk [vmem:[%s204 + $0x1] sm:$0xff] %vm205, %v1851
      %1884 = vst.msk [vmem:[%s204 + $0x9] sm:$0xff] %vm205, %v1852
      %1885 = vst.msk [vmem:[%s204 + $0x19] sm:$0xff] %vm205, %v1853
      %1886 = vst.msk [vmem:[%s204 + $0x21] sm:$0xff] %vm205, %v1854
      %1887 = vst.msk [vmem:[%s204 + $0x31] sm:$0xff] %vm205, %v1855
      %1888 = vst.msk [vmem:[%s204 + $0x39] sm:$0xff] %vm205, %v1856
      %1889 = vst.msk [vmem:[%s204 + $0x49] sm:$0xff] %vm205, %v1857
      %1890 = vst.msk [vmem:[%s204 + $0x51] sm:$0xff] %vm205, %v1858
      %1891 = vst.msk [vmem:[%s204 + $0x61] sm:$0xff] %vm205, %v1859
      %1892 = vst.msk [vmem:[%s204 + $0x69] sm:$0xff] %vm205, %v1860
      %1893 = vst.msk [vmem:[%s204 + $0x79] sm:$0xff] %vm205, %v1861
      %1894 = vst.msk [vmem:[%s204 + $0x81] sm:$0xff] %vm205, %v1862
      %1895 = vst.msk [vmem:[%s204 + $0x91] sm:$0xff] %vm205, %v1863
      %1896 = vst.msk [vmem:[%s204 + $0x99] sm:$0xff] %vm205, %v1864
      %1897 = vst.msk [vmem:[%s204 + $0xa9] sm:$0xff] %vm205, %v1865
      %1898 = vst.msk [vmem:[%s204 + $0xb1] sm:$0xff] %vm205, %v1866
      %1899 = vst.msk [vmem:[%s204 + $0xc1] sm:$0xff] %vm205, %v1867
      %1900 = vst.msk [vmem:[%s204 + $0xc9] sm:$0xff] %vm205, %v1868
      %1901 = vst.msk [vmem:[%s204 + $0xd9] sm:$0xff] %vm205, %v1869
      %1902 = vst.msk [vmem:[%s204 + $0xe1] sm:$0xff] %vm205, %v1870
      %1903 = vst.msk [vmem:[%s204 + $0xf1] sm:$0xff] %vm205, %v1871
      %1904 = vst.msk [vmem:[%s204 + $0xf9] sm:$0xff] %vm205, %v1872
      %1905 = vst.msk [vmem:[%s204 + $0x109] sm:$0xff] %vm205, %v1873
      %1906 = vst.msk [vmem:[%s204 + $0x111] sm:$0xff] %vm205, %v1874
      %1907 = vst.msk [vmem:[%s204 + $0x121] sm:$0xff] %vm205, %v1875
      %1908 = vst.msk [vmem:[%s204 + $0x129] sm:$0xff] %vm205, %v1876
      %1909 = vst.msk [vmem:[%s204 + $0x139] sm:$0xff] %vm205, %v1877
      %1910 = vst.msk [vmem:[%s204 + $0x141] sm:$0xff] %vm205, %v1878
      %1911 = vst.msk [vmem:[%s204 + $0x151] sm:$0xff] %vm205, %v1879
      %1912 = vst.msk [vmem:[%s204 + $0x159] sm:$0xff] %vm205, %v1880
      %1913 = vst.msk [vmem:[%s204 + $0x169] sm:$0xff] %vm205, %v1881
      %1914 = vst.msk [vmem:[%s204 + $0x171] sm:$0xff] %vm205, %v1882
      %1915 = vst.msk [vmem:[#allocation2 + $0x1] sm:$0xff] %vm205, %v1853
      %1916 = vst.msk [vmem:[#allocation2 + $0x9] sm:$0xff] %vm205, %v1854
      %1917 = vst.msk [vmem:[%s240 + $0x1] sm:$0xff] %vm205, %v1879
      %1918 = vst.msk [vmem:[%s240 + $0x9] sm:$0xff] %vm205, %v1880
      %1919 = vst.msk [vmem:[%s204 - $0x1] sm:$0x2] %vm243, %v1851
      %1920 = vst.msk [vmem:[%s204 + $0x17] sm:$0x2] %vm243, %v1853
      %1921 = vst.msk [vmem:[%s204 + $0x2f] sm:$0x2] %vm243, %v1855
      %1922 = vst.msk [vmem:[%s204 + $0x47] sm:$0x2] %vm243, %v1857
      %1923 = vst.msk [vmem:[%s204 + $0x5f] sm:$0x2] %vm243, %v1859
      %1924 = vst.msk [vmem:[%s204 + $0x77] sm:$0x2] %vm243, %v1861
      %1925 = vst.msk [vmem:[%s204 + $0x8f] sm:$0x2] %vm243, %v1863
      %1926 = vst.msk [vmem:[%s204 + $0xa7] sm:$0x2] %vm243, %v1865
      %1927 = vst.msk [vmem:[%s204 + $0xbf] sm:$0x2] %vm243, %v1867
      %1928 = vst.msk [vmem:[%s204 + $0xd7] sm:$0x2] %vm243, %v1869
      %1929 = vst.msk [vmem:[%s204 + $0xef] sm:$0x2] %vm243, %v1871
      %1930 = vst.msk [vmem:[%s204 + $0x107] sm:$0x2] %vm243, %v1873
      %1931 = vst.msk [vmem:[%s204 + $0x11f] sm:$0x2] %vm243, %v1875
      %1932 = vst.msk [vmem:[%s204 + $0x137] sm:$0x2] %vm243, %v1877
      %1933 = vst.msk [vmem:[%s204 + $0x14f] sm:$0x2] %vm243, %v1879
      %1934 = vst.msk [vmem:[%s204 + $0x167] sm:$0x2] %vm243, %v1881
      %1935 = vst.msk [vmem:[%s204 + $0xb] sm:$0x40] %vm260, %v1852
      %1936 = vst.msk [vmem:[%s204 + $0x23] sm:$0x40] %vm260, %v1854
      %1937 = vst.msk [vmem:[%s204 + $0x3b] sm:$0x40] %vm260, %v1856
      %1938 = vst.msk [vmem:[%s204 + $0x53] sm:$0x40] %vm260, %v1858
      %1939 = vst.msk [vmem:[%s204 + $0x6b] sm:$0x40] %vm260, %v1860
      %1940 = vst.msk [vmem:[%s204 + $0x83] sm:$0x40] %vm260, %v1862
      %1941 = vst.msk [vmem:[%s204 + $0x9b] sm:$0x40] %vm260, %v1864
      %1942 = vst.msk [vmem:[%s204 + $0xb3] sm:$0x40] %vm260, %v1866
      %1943 = vst.msk [vmem:[%s204 + $0xcb] sm:$0x40] %vm260, %v1868
      %1944 = vst.msk [vmem:[%s204 + $0xe3] sm:$0x40] %vm260, %v1870
      %1945 = vst.msk [vmem:[%s204 + $0xfb] sm:$0x40] %vm260, %v1872
      %1946 = vst.msk [vmem:[%s204 + $0x113] sm:$0x40] %vm260, %v1874
      %1947 = vst.msk [vmem:[%s204 + $0x12b] sm:$0x40] %vm260, %v1876
      %1948 = vst.msk [vmem:[%s204 + $0x143] sm:$0x40] %vm260, %v1878
      %1949 = vst.msk [vmem:[%s204 + $0x15b] sm:$0x40] %vm260, %v1880
      %1950 = vst.msk [vmem:[%s204 + $0x173] sm:$0x40] %vm260, %v1882
      %1951 = vst.msk [vmem:[#allocation2 - $0x1] sm:$0x2] %vm243, %v1853
      %1952 = vst.msk [vmem:[#allocation2 + $0xb] sm:$0x40] %vm260, %v1854
      %1953 = vst.msk [vmem:[%s240 - $0x1] sm:$0x2] %vm243, %v1879
      %1954 = vst.msk [vmem:[%s240 + $0xb] sm:$0x40] %vm260, %v1880
      %v1955 = vld [vmem:[#allocation2] sm:$0xff]
      %v1956 = vld [vmem:[#allocation2 + $0x8] sm:$0xff]
      %v1957 = vld [vmem:[#allocation2 + $0x18] sm:$0xff]
      %v1958 = vld [vmem:[#allocation2 + $0x20] sm:$0xff]
      %v1959 = vld [vmem:[#allocation2 + $0x30] sm:$0xff]
      %v1960 = vld [vmem:[#allocation2 + $0x38] sm:$0xff]
      %v1961 = vld [vmem:[#allocation2 + $0x48] sm:$0xff]
      %v1962 = vld [vmem:[#allocation2 + $0x50] sm:$0xff]
      %v1963 = vld [vmem:[#allocation2 + $0x60] sm:$0xff]
      %v1964 = vld [vmem:[#allocation2 + $0x68] sm:$0xff]
      %v1965 = vld [vmem:[#allocation2 + $0x78] sm:$0xff]
      %v1966 = vld [vmem:[#allocation2 + $0x80] sm:$0xff]
      %v1967 = vld [vmem:[#allocation2 + $0x90] sm:$0xff]
      %v1968 = vld [vmem:[#allocation2 + $0x98] sm:$0xff]
      %v1969 = vld [vmem:[#allocation2 + $0xa8] sm:$0xff]
      %v1970 = vld [vmem:[#allocation2 + $0xb0] sm:$0xff]
      %v1971 = vld [vmem:[#allocation2 + $0xc0] sm:$0xff]
      %v1972 = vld [vmem:[#allocation2 + $0xc8] sm:$0xff]
      %v1973 = vld [vmem:[#allocation2 + $0xd8] sm:$0xff]
      %v1974 = vld [vmem:[#allocation2 + $0xe0] sm:$0xff]
      %v1975 = vld [vmem:[#allocation2 + $0xf0] sm:$0xff]
      %v1976 = vld [vmem:[#allocation2 + $0xf8] sm:$0xff]
      %v1977 = vld [vmem:[#allocation2 + $0x108] sm:$0xff]
      %v1978 = vld [vmem:[#allocation2 + $0x110] sm:$0xff]
      %v1979 = vld [vmem:[#allocation2 + $0x120] sm:$0xff]
      %v1980 = vld [vmem:[#allocation2 + $0x128] sm:$0xff]
      %v1981 = vld [vmem:[#allocation2 + $0x138] sm:$0xff]
      %v1982 = vld [vmem:[#allocation2 + $0x140] sm:$0xff]
      %v1983 = vld [vmem:[#allocation2 + $0x150] sm:$0xff]
      %v1984 = vld [vmem:[#allocation2 + $0x158] sm:$0xff]
      %v1985 = vld [vmem:[#allocation2 + $0x168] sm:$0xff]
      %v1986 = vld [vmem:[#allocation2 + $0x170] sm:$0xff]
      %v1987 = vld [vmem:[#allocation2 + $0x180] sm:$0xff]
      %v1988 = vld [vmem:[#allocation2 + $0x188] sm:$0xff]
      %v1989 = vld [vmem:[#allocation2 + $0x198] sm:$0xff]
      %v1990 = vld [vmem:[#allocation2 + $0x1a0] sm:$0xff]
      %v1991 = vpack.c.bf16 %v1956, %v1955
      %v1992 = vpack.c.bf16 %v1958, %v1957
      %v1993 = vpack.c.bf16 %v1960, %v1959
      %v1994 = vpack.c.bf16 %v1962, %v1961
      %v1995 = vpack.c.bf16 %v1964, %v1963
      %v1996 = vpack.c.bf16 %v1966, %v1965
      %v1997 = vpack.c.bf16 %v1968, %v1967
      %v1998 = vpack.c.bf16 %v1970, %v1969
      %v1999 = vpack.c.bf16 %v1972, %v1971
      %v2000 = vpack.c.bf16 %v1974, %v1973
      %v2001 = vpack.c.bf16 %v1976, %v1975
      %v2002 = vpack.c.bf16 %v1978, %v1977
      %v2003 = vpack.c.bf16 %v1980, %v1979
      %v2004 = vpack.c.bf16 %v1982, %v1981
      %v2005 = vpack.c.bf16 %v1984, %v1983
      %v2006 = vpack.c.bf16 %v1986, %v1985
      %v2007 = vpack.c.bf16 %v1988, %v1987
      %v2008 = vpack.c.bf16 %v1990, %v1989
      %2009 = vst.msk [vmem:[#allocation3] sm:$0xff] %vm205, %v1991
      %2010 = vst.msk [vmem:[#allocation3 + $0x8] sm:$0xff] %vm205, %v1992
      %2011 = vst.msk [vmem:[#allocation3 + $0x10] sm:$0xff] %vm205, %v1993
      %2012 = vst.msk [vmem:[#allocation3 + $0x18] sm:$0xff] %vm205, %v1994
      %2013 = vst.msk [vmem:[#allocation3 + $0x20] sm:$0xff] %vm205, %v1995
      %2014 = vst.msk [vmem:[#allocation3 + $0x28] sm:$0xff] %vm205, %v1996
      %2015 = vst.msk [vmem:[#allocation3 + $0x30] sm:$0xff] %vm205, %v1997
      %2016 = vst.msk [vmem:[#allocation3 + $0x38] sm:$0xff] %vm205, %v1998
      %2017 = vst.msk [vmem:[#allocation3 + $0x40] sm:$0xff] %vm205, %v1999
      %2018 = vst.msk [vmem:[#allocation3 + $0x48] sm:$0xff] %vm205, %v2000
      %2019 = vst.msk [vmem:[#allocation3 + $0x50] sm:$0xff] %vm205, %v2001
      %2020 = vst.msk [vmem:[#allocation3 + $0x58] sm:$0xff] %vm205, %v2002
      %2021 = vst.msk [vmem:[#allocation3 + $0x60] sm:$0xff] %vm205, %v2003
      %2022 = vst.msk [vmem:[#allocation3 + $0x68] sm:$0xff] %vm205, %v2004
      %2023 = vst.msk [vmem:[#allocation3 + $0x70] sm:$0xff] %vm205, %v2005
      %2024 = vst.msk [vmem:[#allocation3 + $0x78] sm:$0xff] %vm205, %v2006
      %2025 = vst.msk [vmem:[#allocation3 + $0x80] sm:$0xff] %vm205, %v2007
      %2026 = vst.msk [vmem:[#allocation3 + $0x88] sm:$0xff] %vm205, %v2008
      %v2027 = vld [vmem:[#allocation2 + $0x1] sm:$0xff]
      %v2028 = vld [vmem:[#allocation2 + $0x9] sm:$0xff]
      %v2029 = vld [vmem:[#allocation2 + $0x19] sm:$0xff]
      %v2030 = vld [vmem:[#allocation2 + $0x21] sm:$0xff]
      %v2031 = vld [vmem:[#allocation2 + $0x31] sm:$0xff]
      %v2032 = vld [vmem:[#allocation2 + $0x39] sm:$0xff]
      %v2033 = vld [vmem:[#allocation2 + $0x49] sm:$0xff]
      %v2034 = vld [vmem:[#allocation2 + $0x51] sm:$0xff]
      %v2035 = vld [vmem:[#allocation2 + $0x61] sm:$0xff]
      %v2036 = vld [vmem:[#allocation2 + $0x69] sm:$0xff]
      %v2037 = vld [vmem:[#allocation2 + $0x79] sm:$0xff]
      %v2038 = vld [vmem:[#allocation2 + $0x81] sm:$0xff]
      %v2039 = vld [vmem:[#allocation2 + $0x91] sm:$0xff]
      %v2040 = vld [vmem:[#allocation2 + $0x99] sm:$0xff]
      %v2041 = vld [vmem:[#allocation2 + $0xa9] sm:$0xff]
      %v2042 = vld [vmem:[#allocation2 + $0xb1] sm:$0xff]
      %v2043 = vld [vmem:[#allocation2 + $0xc1] sm:$0xff]
      %v2044 = vld [vmem:[#allocation2 + $0xc9] sm:$0xff]
      %v2045 = vld [vmem:[#allocation2 + $0xd9] sm:$0xff]
      %v2046 = vld [vmem:[#allocation2 + $0xe1] sm:$0xff]
      %v2047 = vld [vmem:[#allocation2 + $0xf1] sm:$0xff]
      %v2048 = vld [vmem:[#allocation2 + $0xf9] sm:$0xff]
      %v2049 = vld [vmem:[#allocation2 + $0x109] sm:$0xff]
      %v2050 = vld [vmem:[#allocation2 + $0x111] sm:$0xff]
      %v2051 = vld [vmem:[#allocation2 + $0x121] sm:$0xff]
      %v2052 = vld [vmem:[#allocation2 + $0x129] sm:$0xff]
      %v2053 = vld [vmem:[#allocation2 + $0x139] sm:$0xff]
      %v2054 = vld [vmem:[#allocation2 + $0x141] sm:$0xff]
      %v2055 = vld [vmem:[#allocation2 + $0x151] sm:$0xff]
      %v2056 = vld [vmem:[#allocation2 + $0x159] sm:$0xff]
      %v2057 = vld [vmem:[#allocation2 + $0x169] sm:$0xff]
      %v2058 = vld [vmem:[#allocation2 + $0x171] sm:$0xff]
      %v2059 = vld [vmem:[#allocation2 + $0x181] sm:$0xff]
      %v2060 = vld [vmem:[#allocation2 + $0x189] sm:$0xff]
      %v2061 = vld [vmem:[#allocation2 + $0x199] sm:$0xff]
      %v2062 = vld [vmem:[#allocation2 + $0x1a1] sm:$0xff]
      %v2063 = vpack.c.bf16 %v2028, %v2027
      %v2064 = vpack.c.bf16 %v2030, %v2029
      %v2065 = vpack.c.bf16 %v2032, %v2031
      %v2066 = vpack.c.bf16 %v2034, %v2033
      %v2067 = vpack.c.bf16 %v2036, %v2035
      %v2068 = vpack.c.bf16 %v2038, %v2037
      %v2069 = vpack.c.bf16 %v2040, %v2039
      %v2070 = vpack.c.bf16 %v2042, %v2041
      %v2071 = vpack.c.bf16 %v2044, %v2043
      %v2072 = vpack.c.bf16 %v2046, %v2045
      %v2073 = vpack.c.bf16 %v2048, %v2047
      %v2074 = vpack.c.bf16 %v2050, %v2049
      %v2075 = vpack.c.bf16 %v2052, %v2051
      %v2076 = vpack.c.bf16 %v2054, %v2053
      %v2077 = vpack.c.bf16 %v2056, %v2055
      %v2078 = vpack.c.bf16 %v2058, %v2057
      %v2079 = vpack.c.bf16 %v2060, %v2059
      %v2080 = vpack.c.bf16 %v2062, %v2061
      %2099 = vrot.lane.b32.xlu0 %v2063, 4
      %v2100 = vpop.permute.xlu0 %2099
      %2101 = vrot.lane.b32.xlu0 %v2064, 4
      %v2102 = vpop.permute.xlu0 %2101
      %2103 = vrot.lane.b32.xlu0 %v2065, 4
      %v2104 = vpop.permute.xlu0 %2103
      %2105 = vrot.lane.b32.xlu0 %v2066, 4
      %v2106 = vpop.permute.xlu0 %2105
      %2107 = vrot.lane.b32.xlu0 %v2067, 4
      %v2108 = vpop.permute.xlu0 %2107
      %2109 = vrot.lane.b32.xlu0 %v2068, 4
      %v2110 = vpop.permute.xlu0 %2109
      %2111 = vrot.lane.b32.xlu0 %v2069, 4
      %v2112 = vpop.permute.xlu0 %2111
      %2113 = vrot.lane.b32.xlu0 %v2070, 4
      %v2114 = vpop.permute.xlu0 %2113
      %2115 = vrot.lane.b32.xlu0 %v2071, 4
      %v2116 = vpop.permute.xlu0 %2115
      %2117 = vrot.lane.b32.xlu0 %v2072, 4
      %v2118 = vpop.permute.xlu0 %2117
      %2119 = vrot.lane.b32.xlu0 %v2073, 4
      %v2120 = vpop.permute.xlu0 %2119
      %2121 = vrot.lane.b32.xlu0 %v2074, 4
      %v2122 = vpop.permute.xlu0 %2121
      %2123 = vrot.lane.b32.xlu0 %v2075, 4
      %v2124 = vpop.permute.xlu0 %2123
      %2125 = vrot.lane.b32.xlu0 %v2076, 4
      %v2126 = vpop.permute.xlu0 %2125
      %2127 = vrot.lane.b32.xlu0 %v2077, 4
      %v2128 = vpop.permute.xlu0 %2127
      %2129 = vrot.lane.b32.xlu0 %v2078, 4
      %v2130 = vpop.permute.xlu0 %2129
      %2131 = vrot.lane.b32.xlu0 %v2079, 4
      %v2132 = vpop.permute.xlu0 %2131
      %2133 = vrot.lane.b32.xlu0 %v2080, 4
      %v2134 = vpop.permute.xlu0 %2133
      %2153 = vst.msk [vmem:[#allocation3] sm:$0xff] %vm479, %v2100
      %2154 = vst.msk [vmem:[#allocation3 + $0x8] sm:$0xff] %vm479, %v2102
      %2155 = vst.msk [vmem:[#allocation3 + $0x10] sm:$0xff] %vm479, %v2104
      %2156 = vst.msk [vmem:[#allocation3 + $0x18] sm:$0xff] %vm479, %v2106
      %2157 = vst.msk [vmem:[#allocation3 + $0x20] sm:$0xff] %vm479, %v2108
      %2158 = vst.msk [vmem:[#allocation3 + $0x28] sm:$0xff] %vm479, %v2110
      %2159 = vst.msk [vmem:[#allocation3 + $0x30] sm:$0xff] %vm479, %v2112
      %2160 = vst.msk [vmem:[#allocation3 + $0x38] sm:$0xff] %vm479, %v2114
      %2161 = vst.msk [vmem:[#allocation3 + $0x40] sm:$0xff] %vm479, %v2116
      %2162 = vst.msk [vmem:[#allocation3 + $0x48] sm:$0xff] %vm479, %v2118
      %2163 = vst.msk [vmem:[#allocation3 + $0x50] sm:$0xff] %vm479, %v2120
      %2164 = vst.msk [vmem:[#allocation3 + $0x58] sm:$0xff] %vm479, %v2122
      %2165 = vst.msk [vmem:[#allocation3 + $0x60] sm:$0xff] %vm479, %v2124
      %2166 = vst.msk [vmem:[#allocation3 + $0x68] sm:$0xff] %vm479, %v2126
      %2167 = vst.msk [vmem:[#allocation3 + $0x70] sm:$0xff] %vm479, %v2128
      %2168 = vst.msk [vmem:[#allocation3 + $0x78] sm:$0xff] %vm479, %v2130
      %2169 = vst.msk [vmem:[#allocation3 + $0x80] sm:$0xff] %vm479, %v2132
      %2170 = vst.msk [vmem:[#allocation3 + $0x88] sm:$0xff] %vm479, %v2134
      %v2171 = vld [vmem:[#allocation2 + $0x2] sm:$0xff]
      %v2172 = vld [vmem:[#allocation2 + $0xa] sm:$0xff]
      %v2173 = vld [vmem:[#allocation2 + $0x1a] sm:$0xff]
      %v2174 = vld [vmem:[#allocation2 + $0x22] sm:$0xff]
      %v2175 = vld [vmem:[#allocation2 + $0x32] sm:$0xff]
      %v2176 = vld [vmem:[#allocation2 + $0x3a] sm:$0xff]
      %v2177 = vld [vmem:[#allocation2 + $0x4a] sm:$0xff]
      %v2178 = vld [vmem:[#allocation2 + $0x52] sm:$0xff]
      %v2179 = vld [vmem:[#allocation2 + $0x62] sm:$0xff]
      %v2180 = vld [vmem:[#allocation2 + $0x6a] sm:$0xff]
      %v2181 = vld [vmem:[#allocation2 + $0x7a] sm:$0xff]
      %v2182 = vld [vmem:[#allocation2 + $0x82] sm:$0xff]
      %v2183 = vld [vmem:[#allocation2 + $0x92] sm:$0xff]
      %v2184 = vld [vmem:[#allocation2 + $0x9a] sm:$0xff]
      %v2185 = vld [vmem:[#allocation2 + $0xaa] sm:$0xff]
      %v2186 = vld [vmem:[#allocation2 + $0xb2] sm:$0xff]
      %v2187 = vld [vmem:[#allocation2 + $0xc2] sm:$0xff]
      %v2188 = vld [vmem:[#allocation2 + $0xca] sm:$0xff]
      %v2189 = vld [vmem:[#allocation2 + $0xda] sm:$0xff]
      %v2190 = vld [vmem:[#allocation2 + $0xe2] sm:$0xff]
      %v2191 = vld [vmem:[#allocation2 + $0xf2] sm:$0xff]
      %v2192 = vld [vmem:[#allocation2 + $0xfa] sm:$0xff]
      %v2193 = vld [vmem:[#allocation2 + $0x10a] sm:$0xff]
      %v2194 = vld [vmem:[#allocation2 + $0x112] sm:$0xff]
      %v2195 = vld [vmem:[#allocation2 + $0x122] sm:$0xff]
      %v2196 = vld [vmem:[#allocation2 + $0x12a] sm:$0xff]
      %v2197 = vld [vmem:[#allocation2 + $0x13a] sm:$0xff]
      %v2198 = vld [vmem:[#allocation2 + $0x142] sm:$0xff]
      %v2199 = vld [vmem:[#allocation2 + $0x152] sm:$0xff]
      %v2200 = vld [vmem:[#allocation2 + $0x15a] sm:$0xff]
      %v2201 = vld [vmem:[#allocation2 + $0x16a] sm:$0xff]
      %v2202 = vld [vmem:[#allocation2 + $0x172] sm:$0xff]
      %v2203 = vld [vmem:[#allocation2 + $0x182] sm:$0xff]
      %v2204 = vld [vmem:[#allocation2 + $0x18a] sm:$0xff]
      %v2205 = vld [vmem:[#allocation2 + $0x19a] sm:$0xff]
      %v2206 = vld [vmem:[#allocation2 + $0x1a2] sm:$0xff]
      %v2207 = vpack.c.bf16 %v2172, %v2171
      %v2208 = vpack.c.bf16 %v2174, %v2173
      %v2209 = vpack.c.bf16 %v2176, %v2175
      %v2210 = vpack.c.bf16 %v2178, %v2177
      %v2211 = vpack.c.bf16 %v2180, %v2179
      %v2212 = vpack.c.bf16 %v2182, %v2181
      %v2213 = vpack.c.bf16 %v2184, %v2183
      %v2214 = vpack.c.bf16 %v2186, %v2185
      %v2215 = vpack.c.bf16 %v2188, %v2187
      %v2216 = vpack.c.bf16 %v2190, %v2189
      %v2217 = vpack.c.bf16 %v2192, %v2191
      %v2218 = vpack.c.bf16 %v2194, %v2193
      %v2219 = vpack.c.bf16 %v2196, %v2195
      %v2220 = vpack.c.bf16 %v2198, %v2197
      %v2221 = vpack.c.bf16 %v2200, %v2199
      %v2222 = vpack.c.bf16 %v2202, %v2201
      %v2223 = vpack.c.bf16 %v2204, %v2203
      %v2224 = vpack.c.bf16 %v2206, %v2205
      %2243 = vrot.lane.b32.xlu0 %v2207, 8
      %v2244 = vpop.permute.xlu0 %2243
      %2245 = vrot.lane.b32.xlu0 %v2208, 8
      %v2246 = vpop.permute.xlu0 %2245
      %2247 = vrot.lane.b32.xlu0 %v2209, 8
      %v2248 = vpop.permute.xlu0 %2247
      %2249 = vrot.lane.b32.xlu0 %v2210, 8
      %v2250 = vpop.permute.xlu0 %2249
      %2251 = vrot.lane.b32.xlu0 %v2211, 8
      %v2252 = vpop.permute.xlu0 %2251
      %2253 = vrot.lane.b32.xlu0 %v2212, 8
      %v2254 = vpop.permute.xlu0 %2253
      %2255 = vrot.lane.b32.xlu0 %v2213, 8
      %v2256 = vpop.permute.xlu0 %2255
      %2257 = vrot.lane.b32.xlu0 %v2214, 8
      %v2258 = vpop.permute.xlu0 %2257
      %2259 = vrot.lane.b32.xlu0 %v2215, 8
      %v2260 = vpop.permute.xlu0 %2259
      %2261 = vrot.lane.b32.xlu0 %v2216, 8
      %v2262 = vpop.permute.xlu0 %2261
      %2263 = vrot.lane.b32.xlu0 %v2217, 8
      %v2264 = vpop.permute.xlu0 %2263
      %2265 = vrot.lane.b32.xlu0 %v2218, 8
      %v2266 = vpop.permute.xlu0 %2265
      %2267 = vrot.lane.b32.xlu0 %v2219, 8
      %v2268 = vpop.permute.xlu0 %2267
      %2269 = vrot.lane.b32.xlu0 %v2220, 8
      %v2270 = vpop.permute.xlu0 %2269
      %2271 = vrot.lane.b32.xlu0 %v2221, 8
      %v2272 = vpop.permute.xlu0 %2271
      %2273 = vrot.lane.b32.xlu0 %v2222, 8
      %v2274 = vpop.permute.xlu0 %2273
      %2275 = vrot.lane.b32.xlu0 %v2223, 8
      %v2276 = vpop.permute.xlu0 %2275
      %2277 = vrot.lane.b32.xlu0 %v2224, 8
      %v2278 = vpop.permute.xlu0 %2277
      %2297 = vst.msk [vmem:[#allocation3] sm:$0xff] %vm624, %v2244
      %2298 = vst.msk [vmem:[#allocation3 + $0x8] sm:$0xff] %vm624, %v2246
      %2299 = vst.msk [vmem:[#allocation3 + $0x10] sm:$0xff] %vm624, %v2248
      %2300 = vst.msk [vmem:[#allocation3 + $0x18] sm:$0xff] %vm624, %v2250
      %2301 = vst.msk [vmem:[#allocation3 + $0x20] sm:$0xff] %vm624, %v2252
      %2302 = vst.msk [vmem:[#allocation3 + $0x28] sm:$0xff] %vm624, %v2254
      %2303 = vst.msk [vmem:[#allocation3 + $0x30] sm:$0xff] %vm624, %v2256
      %2304 = vst.msk [vmem:[#allocation3 + $0x38] sm:$0xff] %vm624, %v2258
      %2305 = vst.msk [vmem:[#allocation3 + $0x40] sm:$0xff] %vm624, %v2260
      %2306 = vst.msk [vmem:[#allocation3 + $0x48] sm:$0xff] %vm624, %v2262
      %2307 = vst.msk [vmem:[#allocation3 + $0x50] sm:$0xff] %vm624, %v2264
      %2308 = vst.msk [vmem:[#allocation3 + $0x58] sm:$0xff] %vm624, %v2266
      %2309 = vst.msk [vmem:[#allocation3 + $0x60] sm:$0xff] %vm624, %v2268
      %2310 = vst.msk [vmem:[#allocation3 + $0x68] sm:$0xff] %vm624, %v2270
      %2311 = vst.msk [vmem:[#allocation3 + $0x70] sm:$0xff] %vm624, %v2272
      %2312 = vst.msk [vmem:[#allocation3 + $0x78] sm:$0xff] %vm624, %v2274
      %2313 = vst.msk [vmem:[#allocation3 + $0x80] sm:$0xff] %vm624, %v2276
      %2314 = vst.msk [vmem:[#allocation3 + $0x88] sm:$0xff] %vm624, %v2278
      %v2315 = vld [vmem:[#allocation3] sm:$0xff]
      %v2316 = vld [vmem:[#allocation3 + $0x8] sm:$0xff]
      %v2317 = vld [vmem:[#allocation3 + $0x10] sm:$0xff]
      %v2318 = vld [vmem:[#allocation3 + $0x18] sm:$0xff]
      %v2319 = vld [vmem:[#allocation3 + $0x20] sm:$0xff]
      %v2320 = vld [vmem:[#allocation3 + $0x28] sm:$0xff]
      %v2321 = vld [vmem:[#allocation3 + $0x30] sm:$0xff]
      %v2322 = vld [vmem:[#allocation3 + $0x38] sm:$0xff]
      %v2323 = vld [vmem:[#allocation3 + $0x40] sm:$0xff]
      %v2324 = vld [vmem:[#allocation3 + $0x48] sm:$0xff]
      %v2325 = vld [vmem:[#allocation3 + $0x50] sm:$0xff]
      %v2326 = vld [vmem:[#allocation3 + $0x58] sm:$0xff]
      %v2327 = vld [vmem:[#allocation3 + $0x60] sm:$0xff]
      %v2328 = vld [vmem:[#allocation3 + $0x68] sm:$0xff]
      %v2329 = vld [vmem:[#allocation3 + $0x70] sm:$0xff]
      %v2330 = vld [vmem:[#allocation3 + $0x78] sm:$0xff]
      %v2331 = vld [vmem:[%s2] sm:$0xf]
      %v2332 = vld [vmem:[%s2 + $0x4] sm:$0x3]
      %v2335 = vunpack.c.l.b16 %v2331
      %v2336 = vunpack.c.l.b16 %v2332
      %v2337 = vpack.c.b16 %v2336, %v2335
      %v2339 = vsel %vm666, %v2315, 0
      %v2342 = vsel %vm666, %v2316, 0
      %v2345 = vsel %vm666, %v2317, 0
      %v2348 = vsel %vm666, %v2318, 0
      %v2351 = vsel %vm666, %v2319, 0
      %v2354 = vsel %vm666, %v2320, 0
      %v2357 = vsel %vm666, %v2321, 0
      %v2360 = vsel %vm666, %v2322, 0
      %v2363 = vsel %vm666, %v2323, 0
      %v2366 = vsel %vm666, %v2324, 0
      %v2369 = vsel %vm666, %v2325, 0
      %v2372 = vsel %vm666, %v2326, 0
      %v2375 = vsel %vm666, %v2327, 0
      %v2378 = vsel %vm666, %v2328, 0
      %v2381 = vsel %vm666, %v2329, 0
      %v2384 = vsel %vm666, %v2330, 0
      %v2387 = vsel %vm715, %v2337, 0
      %2389 = vmatprep.subr.bf16.mxu0 0
      %2390 = vmatpush1.bf16.msra.mxu0 %v2387
      %2391 = vmatprep.subr.bf16.mxu0 0
      %2392 = vmatpush1.bf16.msra.mxu0 0
      %2393 = vmatprep.subr.bf16.mxu0 0
      %2394 = vmatpush1.bf16.msra.mxu0 0
      %2395 = vmatprep.subr.bf16.mxu0 0
      %2396 = vmatpush1.bf16.msra.mxu0 0
      %2397 = vmatprep.subr.bf16.mxu0 0
      %2398 = vmatpush1.bf16.msra.mxu0 0
      %2399 = vmatprep.subr.bf16.mxu0 0
      %2400 = vmatpush1.bf16.msra.mxu0 0
      %2401 = vmatprep.subr.bf16.mxu0 0
      %2402 = vmatpush1.bf16.msra.mxu0 0
      %2403 = vmatprep.subr.bf16.mxu0 0
      %2404 = vmatpush1.bf16.msra.mxu0 0
      %2405 = vmatprep.subr.bf16.mxu0 0
      %2406 = vmatpush1.bf16.msra.mxu0 0
      %2407 = vmatprep.subr.bf16.mxu0 0
      %2408 = vmatpush1.bf16.msra.mxu0 0
      %2409 = vmatprep.subr.bf16.mxu0 0
      %2410 = vmatpush1.bf16.msra.mxu0 0
      %2411 = vmatprep.subr.bf16.mxu0 0
      %2412 = vmatpush1.bf16.msra.mxu0 0
      %2413 = vmatprep.subr.bf16.mxu0 0
      %2414 = vmatpush1.bf16.msra.mxu0 0
      %2415 = vmatprep.subr.bf16.mxu0 0
      %2416 = vmatpush1.bf16.msra.mxu0 0
      %2417 = vmatprep.subr.bf16.mxu0 0
      %2418 = vmatpush1.bf16.msra.mxu0 0
      %2419 = vmatprep.subr.bf16.mxu0 0
      %2420 = vmatpush1.bf16.msra.mxu0 0
      %2421 = vmatprep.mubr.bf16.mxu0 0
      %2422 = vmatmul.mubr.bf16.gmra.mrb[0].mxu0 %v2339
      %v2423 = vpop.f32.mrb[0].mxu0
      %v2424 = vadd.f32 0.0, %v2423
      %v2425 = vpop.f32.mrb[0].mxu0
      %v2426 = vpop.f32.mrb[0].mxu0
      %v2427 = vadd.f32 0.0, %v2426
      %v2428 = vpop.f32.mrb[0].mxu0
      %2429 = vmatprep.mubr.bf16.mxu0 0
      %2430 = vmatmul.mubr.bf16.gmra.mrb[0].mxu0 %v2342
      %v2431 = vpop.f32.mrb[0].mxu0
      %v2432 = vadd.f32 0.0, %v2431
      %v2433 = vpop.f32.mrb[0].mxu0
      %v2434 = vpop.f32.mrb[0].mxu0
      %v2435 = vadd.f32 0.0, %v2434
      %v2436 = vpop.f32.mrb[0].mxu0
      %2437 = vmatprep.mubr.bf16.mxu0 0
      %2438 = vmatmul.mubr.bf16.gmra.mrb[0].mxu0 %v2345
      %v2439 = vpop.f32.mrb[0].mxu0
      %v2440 = vadd.f32 0.0, %v2439
      %v2441 = vpop.f32.mrb[0].mxu0
      %v2442 = vpop.f32.mrb[0].mxu0
      %v2443 = vadd.f32 0.0, %v2442
      %v2444 = vpop.f32.mrb[0].mxu0
      %2445 = vmatprep.mubr.bf16.mxu0 0
      %2446 = vmatmul.mubr.bf16.gmra.mrb[0].mxu0 %v2348
      %v2447 = vpop.f32.mrb[0].mxu0
      %v2448 = vadd.f32 0.0, %v2447
      %v2449 = vpop.f32.mrb[0].mxu0
      %v2450 = vpop.f32.mrb[0].mxu0
      %v2451 = vadd.f32 0.0, %v2450
      %v2452 = vpop.f32.mrb[0].mxu0
      %2453 = vmatprep.mubr.bf16.mxu0 0
      %2454 = vmatmul.mubr.bf16.gmra.mrb[0].mxu0 %v2351
      %v2455 = vpop.f32.mrb[0].mxu0
      %v2456 = vadd.f32 0.0, %v2455
      %v2457 = vpop.f32.mrb[0].mxu0
      %v2458 = vpop.f32.mrb[0].mxu0
      %v2459 = vadd.f32 0.0, %v2458
      %v2460 = vpop.f32.mrb[0].mxu0
      %2461 = vmatprep.mubr.bf16.mxu0 0
      %2462 = vmatmul.mubr.bf16.gmra.mrb[0].mxu0 %v2354
      %v2463 = vpop.f32.mrb[0].mxu0
      %v2464 = vadd.f32 0.0, %v2463
      %v2465 = vpop.f32.mrb[0].mxu0
      %v2466 = vpop.f32.mrb[0].mxu0
      %v2467 = vadd.f32 0.0, %v2466
      %v2468 = vpop.f32.mrb[0].mxu0
      %2469 = vmatprep.mubr.bf16.mxu0 0
      %2470 = vmatmul.mubr.bf16.gmra.mrb[0].mxu0 %v2357
      %v2471 = vpop.f32.mrb[0].mxu0
      %v2472 = vadd.f32 0.0, %v2471
      %v2473 = vpop.f32.mrb[0].mxu0
      %v2474 = vpop.f32.mrb[0].mxu0
      %v2475 = vadd.f32 0.0, %v2474
      %v2476 = vpop.f32.mrb[0].mxu0
      %2477 = vmatprep.mubr.bf16.mxu0 0
      %2478 = vmatmul.mubr.bf16.gmra.mrb[0].mxu0 %v2360
      %v2479 = vpop.f32.mrb[0].mxu0
      %v2480 = vadd.f32 0.0, %v2479
      %v2481 = vpop.f32.mrb[0].mxu0
      %v2482 = vpop.f32.mrb[0].mxu0
      %v2483 = vadd.f32 0.0, %v2482
      %v2484 = vpop.f32.mrb[0].mxu0
      %2485 = vmatprep.mubr.bf16.mxu0 0
      %2486 = vmatmul.mubr.bf16.gmra.mrb[0].mxu0 %v2363
      %v2487 = vpop.f32.mrb[0].mxu0
      %v2488 = vadd.f32 0.0, %v2487
      %v2489 = vpop.f32.mrb[0].mxu0
      %v2490 = vpop.f32.mrb[0].mxu0
      %v2491 = vadd.f32 0.0, %v2490
      %v2492 = vpop.f32.mrb[0].mxu0
      %2493 = vmatprep.mubr.bf16.mxu0 0
      %2494 = vmatmul.mubr.bf16.gmra.mrb[0].mxu0 %v2366
      %v2495 = vpop.f32.mrb[0].mxu0
      %v2496 = vadd.f32 0.0, %v2495
      %v2497 = vpop.f32.mrb[0].mxu0
      %v2498 = vpop.f32.mrb[0].mxu0
      %v2499 = vadd.f32 0.0, %v2498
      %v2500 = vpop.f32.mrb[0].mxu0
      %2501 = vmatprep.mubr.bf16.mxu0 0
      %2502 = vmatmul.mubr.bf16.gmra.mrb[0].mxu0 %v2369
      %v2503 = vpop.f32.mrb[0].mxu0
      %v2504 = vadd.f32 0.0, %v2503
      %v2505 = vpop.f32.mrb[0].mxu0
      %v2506 = vpop.f32.mrb[0].mxu0
      %v2507 = vadd.f32 0.0, %v2506
      %v2508 = vpop.f32.mrb[0].mxu0
      %2509 = vmatprep.mubr.bf16.mxu0 0
      %2510 = vmatmul.mubr.bf16.gmra.mrb[0].mxu0 %v2372
      %v2511 = vpop.f32.mrb[0].mxu0
      %v2512 = vadd.f32 0.0, %v2511
      %v2513 = vpop.f32.mrb[0].mxu0
      %v2514 = vpop.f32.mrb[0].mxu0
      %v2515 = vadd.f32 0.0, %v2514
      %v2516 = vpop.f32.mrb[0].mxu0
      %2517 = vmatprep.mubr.bf16.mxu0 0
      %2518 = vmatmul.mubr.bf16.gmra.mrb[0].mxu0 %v2375
      %v2519 = vpop.f32.mrb[0].mxu0
      %v2520 = vadd.f32 0.0, %v2519
      %v2521 = vpop.f32.mrb[0].mxu0
      %v2522 = vpop.f32.mrb[0].mxu0
      %v2523 = vadd.f32 0.0, %v2522
      %v2524 = vpop.f32.mrb[0].mxu0
      %2525 = vmatprep.mubr.bf16.mxu0 0
      %2526 = vmatmul.mubr.bf16.gmra.mrb[0].mxu0 %v2378
      %v2527 = vpop.f32.mrb[0].mxu0
      %v2528 = vadd.f32 0.0, %v2527
      %v2529 = vpop.f32.mrb[0].mxu0
      %v2530 = vpop.f32.mrb[0].mxu0
      %v2531 = vadd.f32 0.0, %v2530
      %v2532 = vpop.f32.mrb[0].mxu0
      %2533 = vmatprep.mubr.bf16.mxu0 0
      %2534 = vmatmul.mubr.bf16.gmra.mrb[0].mxu0 %v2381
      %v2535 = vpop.f32.mrb[0].mxu0
      %v2536 = vadd.f32 0.0, %v2535
      %v2537 = vpop.f32.mrb[0].mxu0
      %v2538 = vpop.f32.mrb[0].mxu0
      %v2539 = vadd.f32 0.0, %v2538
      %v2540 = vpop.f32.mrb[0].mxu0
      %2541 = vmatprep.mubr.bf16.mxu0 0
      %2542 = vmatmul.mubr.bf16.gmra.mrb[0].mxu0 %v2384
      %v2543 = vpop.f32.mrb[0].mxu0
      %v2544 = vadd.f32 0.0, %v2543
      %v2545 = vpop.f32.mrb[0].mxu0
      %v2546 = vpop.f32.mrb[0].mxu0
      %v2547 = vadd.f32 0.0, %v2546
      %v2548 = vpop.f32.mrb[0].mxu0
      %2549 = vdwg.mxu0
      %2550 = vst.msk [vmem:[#allocation4] sm:$0xff] %vm205, %v2424
      %2551 = vst.msk [vmem:[#allocation4 + $0x8] sm:$0xff] %vm205, %v2427
      %2552 = vst.msk [vmem:[#allocation4 + $0x10] sm:$0xff] %vm205, %v2432
      %2553 = vst.msk [vmem:[#allocation4 + $0x18] sm:$0xff] %vm205, %v2435
      %2554 = vst.msk [vmem:[#allocation4 + $0x20] sm:$0xff] %vm205, %v2440
      %2555 = vst.msk [vmem:[#allocation4 + $0x28] sm:$0xff] %vm205, %v2443
      %2556 = vst.msk [vmem:[#allocation4 + $0x30] sm:$0xff] %vm205, %v2448
      %2557 = vst.msk [vmem:[#allocation4 + $0x38] sm:$0xff] %vm205, %v2451
      %2558 = vst.msk [vmem:[#allocation4 + $0x40] sm:$0xff] %vm205, %v2456
      %2559 = vst.msk [vmem:[#allocation4 + $0x48] sm:$0xff] %vm205, %v2459
      %2560 = vst.msk [vmem:[#allocation4 + $0x50] sm:$0xff] %vm205, %v2464
      %2561 = vst.msk [vmem:[#allocation4 + $0x58] sm:$0xff] %vm205, %v2467
      %2562 = vst.msk [vmem:[#allocation4 + $0x60] sm:$0xff] %vm205, %v2472
      %2563 = vst.msk [vmem:[#allocation4 + $0x68] sm:$0xff] %vm205, %v2475
      %2564 = vst.msk [vmem:[#allocation4 + $0x70] sm:$0xff] %vm205, %v2480
      %2565 = vst.msk [vmem:[#allocation4 + $0x78] sm:$0xff] %vm205, %v2483
      %2566 = vst.msk [vmem:[#allocation4 + $0x80] sm:$0xff] %vm205, %v2488
      %2567 = vst.msk [vmem:[#allocation4 + $0x88] sm:$0xff] %vm205, %v2491
      %2568 = vst.msk [vmem:[#allocation4 + $0x90] sm:$0xff] %vm205, %v2496
      %2569 = vst.msk [vmem:[#allocation4 + $0x98] sm:$0xff] %vm205, %v2499
      %2570 = vst.msk [vmem:[#allocation4 + $0xa0] sm:$0xff] %vm205, %v2504
      %2571 = vst.msk [vmem:[#allocation4 + $0xa8] sm:$0xff] %vm205, %v2507
      %2572 = vst.msk [vmem:[#allocation4 + $0xb0] sm:$0xff] %vm205, %v2512
      %2573 = vst.msk [vmem:[#allocation4 + $0xb8] sm:$0xff] %vm205, %v2515
      %2574 = vst.msk [vmem:[#allocation4 + $0xc0] sm:$0xff] %vm205, %v2520
      %2575 = vst.msk [vmem:[#allocation4 + $0xc8] sm:$0xff] %vm205, %v2523
      %2576 = vst.msk [vmem:[#allocation4 + $0xd0] sm:$0xff] %vm205, %v2528
      %2577 = vst.msk [vmem:[#allocation4 + $0xd8] sm:$0xff] %vm205, %v2531
      %2578 = vst.msk [vmem:[#allocation4 + $0xe0] sm:$0xff] %vm205, %v2536
      %2579 = vst.msk [vmem:[#allocation4 + $0xe8] sm:$0xff] %vm205, %v2539
      %2580 = vst.msk [vmem:[#allocation4 + $0xf0] sm:$0xff] %vm205, %v2544
      %2581 = vst.msk [vmem:[#allocation4 + $0xf8] sm:$0xff] %vm205, %v2547
      %v2582 = vld [vmem:[%s912] sm:$0xff]
      %v2583 = vld [vmem:[%s912 + $0x8] sm:$0xff]
      %v2584 = vld [vmem:[%s912 + $0x10] sm:$0xff]
      %v2585 = vld [vmem:[%s912 + $0x18] sm:$0xff]
      %v2586 = vld [vmem:[%s912 + $0x20] sm:$0xff]
      %v2587 = vld [vmem:[%s912 + $0x28] sm:$0xff]
      %v2588 = vld [vmem:[%s912 + $0x30] sm:$0xff]
      %v2589 = vld [vmem:[%s912 + $0x38] sm:$0xff]
      %v2590 = vld [vmem:[%s912 + $0x40] sm:$0xff]
      %v2591 = vld [vmem:[%s912 + $0x48] sm:$0xff]
      %v2592 = vld [vmem:[%s912 + $0x50] sm:$0xff]
      %v2593 = vld [vmem:[%s912 + $0x58] sm:$0xff]
      %v2594 = vld [vmem:[%s912 + $0x60] sm:$0xff]
      %v2595 = vld [vmem:[%s912 + $0x68] sm:$0xff]
      %v2596 = vld [vmem:[%s912 + $0x70] sm:$0xff]
      %v2597 = vld [vmem:[%s912 + $0x78] sm:$0xff]
      %s2598 = scalar_lea.vmem %s2, 8
      %v2599 = vld [vmem:[%s2598] sm:$0xf]
      %v2600 = vld [vmem:[%s2598 + $0x4] sm:$0x3]
      %v2603 = vunpack.c.l.b16 %v2599
      %v2604 = vunpack.c.l.b16 %v2600
      %v2605 = vpack.c.b16 %v2604, %v2603
      %v2607 = vsel %vm666, %v2582, 0
      %v2610 = vsel %vm666, %v2583, 0
      %v2613 = vsel %vm666, %v2584, 0
      %v2616 = vsel %vm666, %v2585, 0
      %v2619 = vsel %vm666, %v2586, 0
      %v2622 = vsel %vm666, %v2587, 0
      %v2625 = vsel %vm666, %v2588, 0
      %v2628 = vsel %vm666, %v2589, 0
      %v2631 = vsel %vm666, %v2590, 0
      %v2634 = vsel %vm666, %v2591, 0
      %v2637 = vsel %vm666, %v2592, 0
      %v2640 = vsel %vm666, %v2593, 0
      %v2643 = vsel %vm666, %v2594, 0
      %v2646 = vsel %vm666, %v2595, 0
      %v2649 = vsel %vm666, %v2596, 0
      %v2652 = vsel %vm666, %v2597, 0
      %v2655 = vsel %vm715, %v2605, 0
      %2657 = vmatprep.subr.bf16.mxu0 0
      %2658 = vmatpush1.bf16.msra.mxu0 %v2655
      %2659 = vmatprep.subr.bf16.mxu0 0
      %2660 = vmatpush1.bf16.msra.mxu0 0
      %2661 = vmatprep.subr.bf16.mxu0 0
      %2662 = vmatpush1.bf16.msra.mxu0 0
      %2663 = vmatprep.subr.bf16.mxu0 0
      %2664 = vmatpush1.bf16.msra.mxu0 0
      %2665 = vmatprep.subr.bf16.mxu0 0
      %2666 = vmatpush1.bf16.msra.mxu0 0
      %2667 = vmatprep.subr.bf16.mxu0 0
      %2668 = vmatpush1.bf16.msra.mxu0 0
      %2669 = vmatprep.subr.bf16.mxu0 0
      %2670 = vmatpush1.bf16.msra.mxu0 0
      %2671 = vmatprep.subr.bf16.mxu0 0
      %2672 = vmatpush1.bf16.msra.mxu0 0
      %2673 = vmatprep.subr.bf16.mxu0 0
      %2674 = vmatpush1.bf16.msra.mxu0 0
      %2675 = vmatprep.subr.bf16.mxu0 0
      %2676 = vmatpush1.bf16.msra.mxu0 0
      %2677 = vmatprep.subr.bf16.mxu0 0
      %2678 = vmatpush1.bf16.msra.mxu0 0
      %2679 = vmatprep.subr.bf16.mxu0 0
      %2680 = vmatpush1.bf16.msra.mxu0 0
      %2681 = vmatprep.subr.bf16.mxu0 0
      %2682 = vmatpush1.bf16.msra.mxu0 0
      %2683 = vmatprep.subr.bf16.mxu0 0
      %2684 = vmatpush1.bf16.msra.mxu0 0
      %2685 = vmatprep.subr.bf16.mxu0 0
      %2686 = vmatpush1.bf16.msra.mxu0 0
      %2687 = vmatprep.subr.bf16.mxu0 0
      %2688 = vmatpush1.bf16.msra.mxu0 0
      %2689 = vmatprep.mubr.bf16.mxu0 0
      %2690 = vmatmul.mubr.bf16.gmra.mrb[0].mxu0 %v2607
      %v2691 = vpop.f32.mrb[0].mxu0
      %v2692 = vadd.f32 0.0, %v2691
      %v2693 = vpop.f32.mrb[0].mxu0
      %v2694 = vpop.f32.mrb[0].mxu0
      %v2695 = vadd.f32 0.0, %v2694
      %v2696 = vpop.f32.mrb[0].mxu0
      %2697 = vmatprep.mubr.bf16.mxu0 0
      %2698 = vmatmul.mubr.bf16.gmra.mrb[0].mxu0 %v2610
      %v2699 = vpop.f32.mrb[0].mxu0
      %v2700 = vadd.f32 0.0, %v2699
      %v2701 = vpop.f32.mrb[0].mxu0
      %v2702 = vpop.f32.mrb[0].mxu0
      %v2703 = vadd.f32 0.0, %v2702
      %v2704 = vpop.f32.mrb[0].mxu0
      %2705 = vmatprep.mubr.bf16.mxu0 0
      %2706 = vmatmul.mubr.bf16.gmra.mrb[0].mxu0 %v2613
      %v2707 = vpop.f32.mrb[0].mxu0
      %v2708 = vadd.f32 0.0, %v2707
      %v2709 = vpop.f32.mrb[0].mxu0
      %v2710 = vpop.f32.mrb[0].mxu0
      %v2711 = vadd.f32 0.0, %v2710
      %v2712 = vpop.f32.mrb[0].mxu0
      %2713 = vmatprep.mubr.bf16.mxu0 0
      %2714 = vmatmul.mubr.bf16.gmra.mrb[0].mxu0 %v2616
      %v2715 = vpop.f32.mrb[0].mxu0
      %v2716 = vadd.f32 0.0, %v2715
      %v2717 = vpop.f32.mrb[0].mxu0
      %v2718 = vpop.f32.mrb[0].mxu0
      %v2719 = vadd.f32 0.0, %v2718
      %v2720 = vpop.f32.mrb[0].mxu0
      %2721 = vmatprep.mubr.bf16.mxu0 0
      %2722 = vmatmul.mubr.bf16.gmra.mrb[0].mxu0 %v2619
      %v2723 = vpop.f32.mrb[0].mxu0
      %v2724 = vadd.f32 0.0, %v2723
      %v2725 = vpop.f32.mrb[0].mxu0
      %v2726 = vpop.f32.mrb[0].mxu0
      %v2727 = vadd.f32 0.0, %v2726
      %v2728 = vpop.f32.mrb[0].mxu0
      %2729 = vmatprep.mubr.bf16.mxu0 0
      %2730 = vmatmul.mubr.bf16.gmra.mrb[0].mxu0 %v2622
      %v2731 = vpop.f32.mrb[0].mxu0
      %v2732 = vadd.f32 0.0, %v2731
      %v2733 = vpop.f32.mrb[0].mxu0
      %v2734 = vpop.f32.mrb[0].mxu0
      %v2735 = vadd.f32 0.0, %v2734
      %v2736 = vpop.f32.mrb[0].mxu0
      %2737 = vmatprep.mubr.bf16.mxu0 0
      %2738 = vmatmul.mubr.bf16.gmra.mrb[0].mxu0 %v2625
      %v2739 = vpop.f32.mrb[0].mxu0
      %v2740 = vadd.f32 0.0, %v2739
      %v2741 = vpop.f32.mrb[0].mxu0
      %v2742 = vpop.f32.mrb[0].mxu0
      %v2743 = vadd.f32 0.0, %v2742
      %v2744 = vpop.f32.mrb[0].mxu0
      %2745 = vmatprep.mubr.bf16.mxu0 0
      %2746 = vmatmul.mubr.bf16.gmra.mrb[0].mxu0 %v2628
      %v2747 = vpop.f32.mrb[0].mxu0
      %v2748 = vadd.f32 0.0, %v2747
      %v2749 = vpop.f32.mrb[0].mxu0
      %v2750 = vpop.f32.mrb[0].mxu0
      %v2751 = vadd.f32 0.0, %v2750
      %v2752 = vpop.f32.mrb[0].mxu0
      %2753 = vmatprep.mubr.bf16.mxu0 0
      %2754 = vmatmul.mubr.bf16.gmra.mrb[0].mxu0 %v2631
      %v2755 = vpop.f32.mrb[0].mxu0
      %v2756 = vadd.f32 0.0, %v2755
      %v2757 = vpop.f32.mrb[0].mxu0
      %v2758 = vpop.f32.mrb[0].mxu0
      %v2759 = vadd.f32 0.0, %v2758
      %v2760 = vpop.f32.mrb[0].mxu0
      %2761 = vmatprep.mubr.bf16.mxu0 0
      %2762 = vmatmul.mubr.bf16.gmra.mrb[0].mxu0 %v2634
      %v2763 = vpop.f32.mrb[0].mxu0
      %v2764 = vadd.f32 0.0, %v2763
      %v2765 = vpop.f32.mrb[0].mxu0
      %v2766 = vpop.f32.mrb[0].mxu0
      %v2767 = vadd.f32 0.0, %v2766
      %v2768 = vpop.f32.mrb[0].mxu0
      %2769 = vmatprep.mubr.bf16.mxu0 0
      %2770 = vmatmul.mubr.bf16.gmra.mrb[0].mxu0 %v2637
      %v2771 = vpop.f32.mrb[0].mxu0
      %v2772 = vadd.f32 0.0, %v2771
      %v2773 = vpop.f32.mrb[0].mxu0
      %v2774 = vpop.f32.mrb[0].mxu0
      %v2775 = vadd.f32 0.0, %v2774
      %v2776 = vpop.f32.mrb[0].mxu0
      %2777 = vmatprep.mubr.bf16.mxu0 0
      %2778 = vmatmul.mubr.bf16.gmra.mrb[0].mxu0 %v2640
      %v2779 = vpop.f32.mrb[0].mxu0
      %v2780 = vadd.f32 0.0, %v2779
      %v2781 = vpop.f32.mrb[0].mxu0
      %v2782 = vpop.f32.mrb[0].mxu0
      %v2783 = vadd.f32 0.0, %v2782
      %v2784 = vpop.f32.mrb[0].mxu0
      %2785 = vmatprep.mubr.bf16.mxu0 0
      %2786 = vmatmul.mubr.bf16.gmra.mrb[0].mxu0 %v2643
      %v2787 = vpop.f32.mrb[0].mxu0
      %v2788 = vadd.f32 0.0, %v2787
      %v2789 = vpop.f32.mrb[0].mxu0
      %v2790 = vpop.f32.mrb[0].mxu0
      %v2791 = vadd.f32 0.0, %v2790
      %v2792 = vpop.f32.mrb[0].mxu0
      %2793 = vmatprep.mubr.bf16.mxu0 0
      %2794 = vmatmul.mubr.bf16.gmra.mrb[0].mxu0 %v2646
      %v2795 = vpop.f32.mrb[0].mxu0
      %v2796 = vadd.f32 0.0, %v2795
      %v2797 = vpop.f32.mrb[0].mxu0
      %v2798 = vpop.f32.mrb[0].mxu0
      %v2799 = vadd.f32 0.0, %v2798
      %v2800 = vpop.f32.mrb[0].mxu0
      %2801 = vmatprep.mubr.bf16.mxu0 0
      %2802 = vmatmul.mubr.bf16.gmra.mrb[0].mxu0 %v2649
      %v2803 = vpop.f32.mrb[0].mxu0
      %v2804 = vadd.f32 0.0, %v2803
      %v2805 = vpop.f32.mrb[0].mxu0
      %v2806 = vpop.f32.mrb[0].mxu0
      %v2807 = vadd.f32 0.0, %v2806
      %v2808 = vpop.f32.mrb[0].mxu0
      %2809 = vmatprep.mubr.bf16.mxu0 0
      %2810 = vmatmul.mubr.bf16.gmra.mrb[0].mxu0 %v2652
      %v2811 = vpop.f32.mrb[0].mxu0
      %v2812 = vadd.f32 0.0, %v2811
      %v2813 = vpop.f32.mrb[0].mxu0
      %v2814 = vpop.f32.mrb[0].mxu0
      %v2815 = vadd.f32 0.0, %v2814
      %v2816 = vpop.f32.mrb[0].mxu0
      %2817 = vdwg.mxu0
      %v2818 = vld [vmem:[#allocation4] sm:$0xff]
      %v2819 = vld [vmem:[#allocation4 + $0x8] sm:$0xff]
      %v2820 = vld [vmem:[#allocation4 + $0x10] sm:$0xff]
      %v2821 = vld [vmem:[#allocation4 + $0x18] sm:$0xff]
      %v2822 = vld [vmem:[#allocation4 + $0x20] sm:$0xff]
      %v2823 = vld [vmem:[#allocation4 + $0x28] sm:$0xff]
      %v2824 = vld [vmem:[#allocation4 + $0x30] sm:$0xff]
      %v2825 = vld [vmem:[#allocation4 + $0x38] sm:$0xff]
      %v2826 = vld [vmem:[#allocation4 + $0x40] sm:$0xff]
      %v2827 = vld [vmem:[#allocation4 + $0x48] sm:$0xff]
      %v2828 = vld [vmem:[#allocation4 + $0x50] sm:$0xff]
      %v2829 = vld [vmem:[#allocation4 + $0x58] sm:$0xff]
      %v2830 = vld [vmem:[#allocation4 + $0x60] sm:$0xff]
      %v2831 = vld [vmem:[#allocation4 + $0x68] sm:$0xff]
      %v2832 = vld [vmem:[#allocation4 + $0x70] sm:$0xff]
      %v2833 = vld [vmem:[#allocation4 + $0x78] sm:$0xff]
      %v2834 = vld [vmem:[#allocation4 + $0x80] sm:$0xff]
      %v2835 = vld [vmem:[#allocation4 + $0x88] sm:$0xff]
      %v2836 = vld [vmem:[#allocation4 + $0x90] sm:$0xff]
      %v2837 = vld [vmem:[#allocation4 + $0x98] sm:$0xff]
      %v2838 = vld [vmem:[#allocation4 + $0xa0] sm:$0xff]
      %v2839 = vld [vmem:[#allocation4 + $0xa8] sm:$0xff]
      %v2840 = vld [vmem:[#allocation4 + $0xb0] sm:$0xff]
      %v2841 = vld [vmem:[#allocation4 + $0xb8] sm:$0xff]
      %v2842 = vld [vmem:[#allocation4 + $0xc0] sm:$0xff]
      %v2843 = vld [vmem:[#allocation4 + $0xc8] sm:$0xff]
      %v2844 = vld [vmem:[#allocation4 + $0xd0] sm:$0xff]
      %v2845 = vld [vmem:[#allocation4 + $0xd8] sm:$0xff]
      %v2846 = vld [vmem:[#allocation4 + $0xe0] sm:$0xff]
      %v2847 = vld [vmem:[#allocation4 + $0xe8] sm:$0xff]
      %v2848 = vld [vmem:[#allocation4 + $0xf0] sm:$0xff]
      %v2849 = vld [vmem:[#allocation4 + $0xf8] sm:$0xff]
      %v2850 = vadd.f32 %v2818, %v2692
      %v2851 = vadd.f32 %v2819, %v2695
      %v2852 = vadd.f32 %v2820, %v2700
      %v2853 = vadd.f32 %v2821, %v2703
      %v2854 = vadd.f32 %v2822, %v2708
      %v2855 = vadd.f32 %v2823, %v2711
      %v2856 = vadd.f32 %v2824, %v2716
      %v2857 = vadd.f32 %v2825, %v2719
      %v2858 = vadd.f32 %v2826, %v2724
      %v2859 = vadd.f32 %v2827, %v2727
      %v2860 = vadd.f32 %v2828, %v2732
      %v2861 = vadd.f32 %v2829, %v2735
      %v2862 = vadd.f32 %v2830, %v2740
      %v2863 = vadd.f32 %v2831, %v2743
      %v2864 = vadd.f32 %v2832, %v2748
      %v2865 = vadd.f32 %v2833, %v2751
      %v2866 = vadd.f32 %v2834, %v2756
      %v2867 = vadd.f32 %v2835, %v2759
      %v2868 = vadd.f32 %v2836, %v2764
      %v2869 = vadd.f32 %v2837, %v2767
      %v2870 = vadd.f32 %v2838, %v2772
      %v2871 = vadd.f32 %v2839, %v2775
      %v2872 = vadd.f32 %v2840, %v2780
      %v2873 = vadd.f32 %v2841, %v2783
      %v2874 = vadd.f32 %v2842, %v2788
      %v2875 = vadd.f32 %v2843, %v2791
      %v2876 = vadd.f32 %v2844, %v2796
      %v2877 = vadd.f32 %v2845, %v2799
      %v2878 = vadd.f32 %v2846, %v2804
      %v2879 = vadd.f32 %v2847, %v2807
      %v2880 = vadd.f32 %v2848, %v2812
      %v2881 = vadd.f32 %v2849, %v2815
      %2882 = vst.msk [vmem:[#allocation4] sm:$0xff] %vm205, %v2850
      %2883 = vst.msk [vmem:[#allocation4 + $0x8] sm:$0xff] %vm205, %v2851
      %2884 = vst.msk [vmem:[#allocation4 + $0x10] sm:$0xff] %vm205, %v2852
      %2885 = vst.msk [vmem:[#allocation4 + $0x18] sm:$0xff] %vm205, %v2853
      %2886 = vst.msk [vmem:[#allocation4 + $0x20] sm:$0xff] %vm205, %v2854
      %2887 = vst.msk [vmem:[#allocation4 + $0x28] sm:$0xff] %vm205, %v2855
      %2888 = vst.msk [vmem:[#allocation4 + $0x30] sm:$0xff] %vm205, %v2856
      %2889 = vst.msk [vmem:[#allocation4 + $0x38] sm:$0xff] %vm205, %v2857
      %2890 = vst.msk [vmem:[#allocation4 + $0x40] sm:$0xff] %vm205, %v2858
      %2891 = vst.msk [vmem:[#allocation4 + $0x48] sm:$0xff] %vm205, %v2859
      %2892 = vst.msk [vmem:[#allocation4 + $0x50] sm:$0xff] %vm205, %v2860
      %2893 = vst.msk [vmem:[#allocation4 + $0x58] sm:$0xff] %vm205, %v2861
      %2894 = vst.msk [vmem:[#allocation4 + $0x60] sm:$0xff] %vm205, %v2862
      %2895 = vst.msk [vmem:[#allocation4 + $0x68] sm:$0xff] %vm205, %v2863
      %2896 = vst.msk [vmem:[#allocation4 + $0x70] sm:$0xff] %vm205, %v2864
      %2897 = vst.msk [vmem:[#allocation4 + $0x78] sm:$0xff] %vm205, %v2865
      %2898 = vst.msk [vmem:[#allocation4 + $0x80] sm:$0xff] %vm205, %v2866
      %2899 = vst.msk [vmem:[#allocation4 + $0x88] sm:$0xff] %vm205, %v2867
      %2900 = vst.msk [vmem:[#allocation4 + $0x90] sm:$0xff] %vm205, %v2868
      %2901 = vst.msk [vmem:[#allocation4 + $0x98] sm:$0xff] %vm205, %v2869
      %2902 = vst.msk [vmem:[#allocation4 + $0xa0] sm:$0xff] %vm205, %v2870
      %2903 = vst.msk [vmem:[#allocation4 + $0xa8] sm:$0xff] %vm205, %v2871
      %2904 = vst.msk [vmem:[#allocation4 + $0xb0] sm:$0xff] %vm205, %v2872
      %2905 = vst.msk [vmem:[#allocation4 + $0xb8] sm:$0xff] %vm205, %v2873
      %2906 = vst.msk [vmem:[#allocation4 + $0xc0] sm:$0xff] %vm205, %v2874
      %2907 = vst.msk [vmem:[#allocation4 + $0xc8] sm:$0xff] %vm205, %v2875
      %2908 = vst.msk [vmem:[#allocation4 + $0xd0] sm:$0xff] %vm205, %v2876
      %2909 = vst.msk [vmem:[#allocation4 + $0xd8] sm:$0xff] %vm205, %v2877
      %2910 = vst.msk [vmem:[#allocation4 + $0xe0] sm:$0xff] %vm205, %v2878
      %2911 = vst.msk [vmem:[#allocation4 + $0xe8] sm:$0xff] %vm205, %v2879
      %2912 = vst.msk [vmem:[#allocation4 + $0xf0] sm:$0xff] %vm205, %v2880
      %2913 = vst.msk [vmem:[#allocation4 + $0xf8] sm:$0xff] %vm205, %v2881
      %v2914 = vld [vmem:[%s1245] sm:$0xff]
      %v2915 = vld [vmem:[%s1245 + $0x8] sm:$0xff]
      %v2916 = vld [vmem:[%s1245 + $0x10] sm:$0xff]
      %v2917 = vld [vmem:[%s1245 + $0x18] sm:$0xff]
      %v2918 = vld [vmem:[%s1245 + $0x20] sm:$0xff]
      %v2919 = vld [vmem:[%s1245 + $0x28] sm:$0xff]
      %v2920 = vld [vmem:[%s1245 + $0x30] sm:$0xff]
      %v2921 = vld [vmem:[%s1245 + $0x38] sm:$0xff]
      %v2922 = vld [vmem:[%s1245 + $0x40] sm:$0xff]
      %v2923 = vld [vmem:[%s1245 + $0x48] sm:$0xff]
      %v2924 = vld [vmem:[%s1245 + $0x50] sm:$0xff]
      %v2925 = vld [vmem:[%s1245 + $0x58] sm:$0xff]
      %v2926 = vld [vmem:[%s1245 + $0x60] sm:$0xff]
      %v2927 = vld [vmem:[%s1245 + $0x68] sm:$0xff]
      %v2928 = vld [vmem:[%s1245 + $0x70] sm:$0xff]
      %v2929 = vld [vmem:[%s1245 + $0x78] sm:$0xff]
      %s2930 = scalar_lea.vmem %s2, 16
      %v2931 = vld [vmem:[%s2930] sm:$0xf]
      %v2932 = vld [vmem:[%s2930 + $0x4] sm:$0x3]
      %v2935 = vunpack.c.l.b16 %v2931
      %v2936 = vunpack.c.l.b16 %v2932
      %v2937 = vpack.c.b16 %v2936, %v2935
      %v2939 = vsel %vm666, %v2914, 0
      %v2942 = vsel %vm666, %v2915, 0
      %v2945 = vsel %vm666, %v2916, 0
      %v2948 = vsel %vm666, %v2917, 0
      %v2951 = vsel %vm666, %v2918, 0
      %v2954 = vsel %vm666, %v2919, 0
      %v2957 = vsel %vm666, %v2920, 0
      %v2960 = vsel %vm666, %v2921, 0
      %v2963 = vsel %vm666, %v2922, 0
      %v2966 = vsel %vm666, %v2923, 0
      %v2969 = vsel %vm666, %v2924, 0
      %v2972 = vsel %vm666, %v2925, 0
      %v2975 = vsel %vm666, %v2926, 0
      %v2978 = vsel %vm666, %v2927, 0
      %v2981 = vsel %vm666, %v2928, 0
      %v2984 = vsel %vm666, %v2929, 0
      %v2987 = vsel %vm715, %v2937, 0
      %2989 = vmatprep.subr.bf16.mxu0 0
      %2990 = vmatpush1.bf16.msra.mxu0 %v2987
      %2991 = vmatprep.subr.bf16.mxu0 0
      %2992 = vmatpush1.bf16.msra.mxu0 0
      %2993 = vmatprep.subr.bf16.mxu0 0
      %2994 = vmatpush1.bf16.msra.mxu0 0
      %2995 = vmatprep.subr.bf16.mxu0 0
      %2996 = vmatpush1.bf16.msra.mxu0 0
      %2997 = vmatprep.subr.bf16.mxu0 0
      %2998 = vmatpush1.bf16.msra.mxu0 0
      %2999 = vmatprep.subr.bf16.mxu0 0
      %3000 = vmatpush1.bf16.msra.mxu0 0
      %3001 = vmatprep.subr.bf16.mxu0 0
      %3002 = vmatpush1.bf16.msra.mxu0 0
      %3003 = vmatprep.subr.bf16.mxu0 0
      %3004 = vmatpush1.bf16.msra.mxu0 0
      %3005 = vmatprep.subr.bf16.mxu0 0
      %3006 = vmatpush1.bf16.msra.mxu0 0
      %3007 = vmatprep.subr.bf16.mxu0 0
      %3008 = vmatpush1.bf16.msra.mxu0 0
      %3009 = vmatprep.subr.bf16.mxu0 0
      %3010 = vmatpush1.bf16.msra.mxu0 0
      %3011 = vmatprep.subr.bf16.mxu0 0
      %3012 = vmatpush1.bf16.msra.mxu0 0
      %3013 = vmatprep.subr.bf16.mxu0 0
      %3014 = vmatpush1.bf16.msra.mxu0 0
      %3015 = vmatprep.subr.bf16.mxu0 0
      %3016 = vmatpush1.bf16.msra.mxu0 0
      %3017 = vmatprep.subr.bf16.mxu0 0
      %3018 = vmatpush1.bf16.msra.mxu0 0
      %3019 = vmatprep.subr.bf16.mxu0 0
      %3020 = vmatpush1.bf16.msra.mxu0 0
      %3021 = vmatprep.mubr.bf16.mxu0 0
      %3022 = vmatmul.mubr.bf16.gmra.mrb[0].mxu0 %v2939
      %v3023 = vpop.f32.mrb[0].mxu0
      %v3024 = vadd.f32 0.0, %v3023
      %v3025 = vpop.f32.mrb[0].mxu0
      %v3026 = vpop.f32.mrb[0].mxu0
      %v3027 = vadd.f32 0.0, %v3026
      %v3028 = vpop.f32.mrb[0].mxu0
      %3029 = vmatprep.mubr.bf16.mxu0 0
      %3030 = vmatmul.mubr.bf16.gmra.mrb[0].mxu0 %v2942
      %v3031 = vpop.f32.mrb[0].mxu0
      %v3032 = vadd.f32 0.0, %v3031
      %v3033 = vpop.f32.mrb[0].mxu0
      %v3034 = vpop.f32.mrb[0].mxu0
      %v3035 = vadd.f32 0.0, %v3034
      %v3036 = vpop.f32.mrb[0].mxu0
      %3037 = vmatprep.mubr.bf16.mxu0 0
      %3038 = vmatmul.mubr.bf16.gmra.mrb[0].mxu0 %v2945
      %v3039 = vpop.f32.mrb[0].mxu0
      %v3040 = vadd.f32 0.0, %v3039
      %v3041 = vpop.f32.mrb[0].mxu0
      %v3042 = vpop.f32.mrb[0].mxu0
      %v3043 = vadd.f32 0.0, %v3042
      %v3044 = vpop.f32.mrb[0].mxu0
      %3045 = vmatprep.mubr.bf16.mxu0 0
      %3046 = vmatmul.mubr.bf16.gmra.mrb[0].mxu0 %v2948
      %v3047 = vpop.f32.mrb[0].mxu0
      %v3048 = vadd.f32 0.0, %v3047
      %v3049 = vpop.f32.mrb[0].mxu0
      %v3050 = vpop.f32.mrb[0].mxu0
      %v3051 = vadd.f32 0.0, %v3050
      %v3052 = vpop.f32.mrb[0].mxu0
      %3053 = vmatprep.mubr.bf16.mxu0 0
      %3054 = vmatmul.mubr.bf16.gmra.mrb[0].mxu0 %v2951
      %v3055 = vpop.f32.mrb[0].mxu0
      %v3056 = vadd.f32 0.0, %v3055
      %v3057 = vpop.f32.mrb[0].mxu0
      %v3058 = vpop.f32.mrb[0].mxu0
      %v3059 = vadd.f32 0.0, %v3058
      %v3060 = vpop.f32.mrb[0].mxu0
      %3061 = vmatprep.mubr.bf16.mxu0 0
      %3062 = vmatmul.mubr.bf16.gmra.mrb[0].mxu0 %v2954
      %v3063 = vpop.f32.mrb[0].mxu0
      %v3064 = vadd.f32 0.0, %v3063
      %v3065 = vpop.f32.mrb[0].mxu0
      %v3066 = vpop.f32.mrb[0].mxu0
      %v3067 = vadd.f32 0.0, %v3066
      %v3068 = vpop.f32.mrb[0].mxu0
      %3069 = vmatprep.mubr.bf16.mxu0 0
      %3070 = vmatmul.mubr.bf16.gmra.mrb[0].mxu0 %v2957
      %v3071 = vpop.f32.mrb[0].mxu0
      %v3072 = vadd.f32 0.0, %v3071
      %v3073 = vpop.f32.mrb[0].mxu0
      %v3074 = vpop.f32.mrb[0].mxu0
      %v3075 = vadd.f32 0.0, %v3074
      %v3076 = vpop.f32.mrb[0].mxu0
      %3077 = vmatprep.mubr.bf16.mxu0 0
      %3078 = vmatmul.mubr.bf16.gmra.mrb[0].mxu0 %v2960
      %v3079 = vpop.f32.mrb[0].mxu0
      %v3080 = vadd.f32 0.0, %v3079
      %v3081 = vpop.f32.mrb[0].mxu0
      %v3082 = vpop.f32.mrb[0].mxu0
      %v3083 = vadd.f32 0.0, %v3082
      %v3084 = vpop.f32.mrb[0].mxu0
      %3085 = vmatprep.mubr.bf16.mxu0 0
      %3086 = vmatmul.mubr.bf16.gmra.mrb[0].mxu0 %v2963
      %v3087 = vpop.f32.mrb[0].mxu0
      %v3088 = vadd.f32 0.0, %v3087
      %v3089 = vpop.f32.mrb[0].mxu0
      %v3090 = vpop.f32.mrb[0].mxu0
      %v3091 = vadd.f32 0.0, %v3090
      %v3092 = vpop.f32.mrb[0].mxu0
      %3093 = vmatprep.mubr.bf16.mxu0 0
      %3094 = vmatmul.mubr.bf16.gmra.mrb[0].mxu0 %v2966
      %v3095 = vpop.f32.mrb[0].mxu0
      %v3096 = vadd.f32 0.0, %v3095
      %v3097 = vpop.f32.mrb[0].mxu0
      %v3098 = vpop.f32.mrb[0].mxu0
      %v3099 = vadd.f32 0.0, %v3098
      %v3100 = vpop.f32.mrb[0].mxu0
      %3101 = vmatprep.mubr.bf16.mxu0 0
      %3102 = vmatmul.mubr.bf16.gmra.mrb[0].mxu0 %v2969
      %v3103 = vpop.f32.mrb[0].mxu0
      %v3104 = vadd.f32 0.0, %v3103
      %v3105 = vpop.f32.mrb[0].mxu0
      %v3106 = vpop.f32.mrb[0].mxu0
      %v3107 = vadd.f32 0.0, %v3106
      %v3108 = vpop.f32.mrb[0].mxu0
      %3109 = vmatprep.mubr.bf16.mxu0 0
      %3110 = vmatmul.mubr.bf16.gmra.mrb[0].mxu0 %v2972
      %v3111 = vpop.f32.mrb[0].mxu0
      %v3112 = vadd.f32 0.0, %v3111
      %v3113 = vpop.f32.mrb[0].mxu0
      %v3114 = vpop.f32.mrb[0].mxu0
      %v3115 = vadd.f32 0.0, %v3114
      %v3116 = vpop.f32.mrb[0].mxu0
      %3117 = vmatprep.mubr.bf16.mxu0 0
      %3118 = vmatmul.mubr.bf16.gmra.mrb[0].mxu0 %v2975
      %v3119 = vpop.f32.mrb[0].mxu0
      %v3120 = vadd.f32 0.0, %v3119
      %v3121 = vpop.f32.mrb[0].mxu0
      %v3122 = vpop.f32.mrb[0].mxu0
      %v3123 = vadd.f32 0.0, %v3122
      %v3124 = vpop.f32.mrb[0].mxu0
      %3125 = vmatprep.mubr.bf16.mxu0 0
      %3126 = vmatmul.mubr.bf16.gmra.mrb[0].mxu0 %v2978
      %v3127 = vpop.f32.mrb[0].mxu0
      %v3128 = vadd.f32 0.0, %v3127
      %v3129 = vpop.f32.mrb[0].mxu0
      %v3130 = vpop.f32.mrb[0].mxu0
      %v3131 = vadd.f32 0.0, %v3130
      %v3132 = vpop.f32.mrb[0].mxu0
      %3133 = vmatprep.mubr.bf16.mxu0 0
      %3134 = vmatmul.mubr.bf16.gmra.mrb[0].mxu0 %v2981
      %v3135 = vpop.f32.mrb[0].mxu0
      %v3136 = vadd.f32 0.0, %v3135
      %v3137 = vpop.f32.mrb[0].mxu0
      %v3138 = vpop.f32.mrb[0].mxu0
      %v3139 = vadd.f32 0.0, %v3138
      %v3140 = vpop.f32.mrb[0].mxu0
      %3141 = vmatprep.mubr.bf16.mxu0 0
      %3142 = vmatmul.mubr.bf16.gmra.mrb[0].mxu0 %v2984
      %v3143 = vpop.f32.mrb[0].mxu0
      %v3144 = vadd.f32 0.0, %v3143
      %v3145 = vpop.f32.mrb[0].mxu0
      %v3146 = vpop.f32.mrb[0].mxu0
      %v3147 = vadd.f32 0.0, %v3146
      %v3148 = vpop.f32.mrb[0].mxu0
      %3149 = vdwg.mxu0
      %v3150 = vld [vmem:[#allocation4] sm:$0xff]
      %v3151 = vld [vmem:[#allocation4 + $0x8] sm:$0xff]
      %v3152 = vld [vmem:[#allocation4 + $0x10] sm:$0xff]
      %v3153 = vld [vmem:[#allocation4 + $0x18] sm:$0xff]
      %v3154 = vld [vmem:[#allocation4 + $0x20] sm:$0xff]
      %v3155 = vld [vmem:[#allocation4 + $0x28] sm:$0xff]
      %v3156 = vld [vmem:[#allocation4 + $0x30] sm:$0xff]
      %v3157 = vld [vmem:[#allocation4 + $0x38] sm:$0xff]
      %v3158 = vld [vmem:[#allocation4 + $0x40] sm:$0xff]
      %v3159 = vld [vmem:[#allocation4 + $0x48] sm:$0xff]
      %v3160 = vld [vmem:[#allocation4 + $0x50] sm:$0xff]
      %v3161 = vld [vmem:[#allocation4 + $0x58] sm:$0xff]
      %v3162 = vld [vmem:[#allocation4 + $0x60] sm:$0xff]
      %v3163 = vld [vmem:[#allocation4 + $0x68] sm:$0xff]
      %v3164 = vld [vmem:[#allocation4 + $0x70] sm:$0xff]
      %v3165 = vld [vmem:[#allocation4 + $0x78] sm:$0xff]
      %v3166 = vld [vmem:[#allocation4 + $0x80] sm:$0xff]
      %v3167 = vld [vmem:[#allocation4 + $0x88] sm:$0xff]
      %v3168 = vld [vmem:[#allocation4 + $0x90] sm:$0xff]
      %v3169 = vld [vmem:[#allocation4 + $0x98] sm:$0xff]
      %v3170 = vld [vmem:[#allocation4 + $0xa0] sm:$0xff]
      %v3171 = vld [vmem:[#allocation4 + $0xa8] sm:$0xff]
      %v3172 = vld [vmem:[#allocation4 + $0xb0] sm:$0xff]
      %v3173 = vld [vmem:[#allocation4 + $0xb8] sm:$0xff]
      %v3174 = vld [vmem:[#allocation4 + $0xc0] sm:$0xff]
      %v3175 = vld [vmem:[#allocation4 + $0xc8] sm:$0xff]
      %v3176 = vld [vmem:[#allocation4 + $0xd0] sm:$0xff]
      %v3177 = vld [vmem:[#allocation4 + $0xd8] sm:$0xff]
      %v3178 = vld [vmem:[#allocation4 + $0xe0] sm:$0xff]
      %v3179 = vld [vmem:[#allocation4 + $0xe8] sm:$0xff]
      %v3180 = vld [vmem:[#allocation4 + $0xf0] sm:$0xff]
      %v3181 = vld [vmem:[#allocation4 + $0xf8] sm:$0xff]
      %v3182 = vadd.f32 %v3150, %v3024
      %v3183 = vadd.f32 %v3151, %v3027
      %v3184 = vadd.f32 %v3152, %v3032
      %v3185 = vadd.f32 %v3153, %v3035
      %v3186 = vadd.f32 %v3154, %v3040
      %v3187 = vadd.f32 %v3155, %v3043
      %v3188 = vadd.f32 %v3156, %v3048
      %v3189 = vadd.f32 %v3157, %v3051
      %v3190 = vadd.f32 %v3158, %v3056
      %v3191 = vadd.f32 %v3159, %v3059
      %v3192 = vadd.f32 %v3160, %v3064
      %v3193 = vadd.f32 %v3161, %v3067
      %v3194 = vadd.f32 %v3162, %v3072
      %v3195 = vadd.f32 %v3163, %v3075
      %v3196 = vadd.f32 %v3164, %v3080
      %v3197 = vadd.f32 %v3165, %v3083
      %v3198 = vadd.f32 %v3166, %v3088
      %v3199 = vadd.f32 %v3167, %v3091
      %v3200 = vadd.f32 %v3168, %v3096
      %v3201 = vadd.f32 %v3169, %v3099
      %v3202 = vadd.f32 %v3170, %v3104
      %v3203 = vadd.f32 %v3171, %v3107
      %v3204 = vadd.f32 %v3172, %v3112
      %v3205 = vadd.f32 %v3173, %v3115
      %v3206 = vadd.f32 %v3174, %v3120
      %v3207 = vadd.f32 %v3175, %v3123
      %v3208 = vadd.f32 %v3176, %v3128
      %v3209 = vadd.f32 %v3177, %v3131
      %v3210 = vadd.f32 %v3178, %v3136
      %v3211 = vadd.f32 %v3179, %v3139
      %v3212 = vadd.f32 %v3180, %v3144
      %v3213 = vadd.f32 %v3181, %v3147
      %3214 = vst.msk [vmem:[#allocation4] sm:$0xff] %vm205, %v3182
      %3215 = vst.msk [vmem:[#allocation4 + $0x8] sm:$0xff] %vm205, %v3183
      %3216 = vst.msk [vmem:[#allocation4 + $0x10] sm:$0xff] %vm205, %v3184
      %3217 = vst.msk [vmem:[#allocation4 + $0x18] sm:$0xff] %vm205, %v3185
      %3218 = vst.msk [vmem:[#allocation4 + $0x20] sm:$0xff] %vm205, %v3186
      %3219 = vst.msk [vmem:[#allocation4 + $0x28] sm:$0xff] %vm205, %v3187
      %3220 = vst.msk [vmem:[#allocation4 + $0x30] sm:$0xff] %vm205, %v3188
      %3221 = vst.msk [vmem:[#allocation4 + $0x38] sm:$0xff] %vm205, %v3189
      %3222 = vst.msk [vmem:[#allocation4 + $0x40] sm:$0xff] %vm205, %v3190
      %3223 = vst.msk [vmem:[#allocation4 + $0x48] sm:$0xff] %vm205, %v3191
      %3224 = vst.msk [vmem:[#allocation4 + $0x50] sm:$0xff] %vm205, %v3192
      %3225 = vst.msk [vmem:[#allocation4 + $0x58] sm:$0xff] %vm205, %v3193
      %3226 = vst.msk [vmem:[#allocation4 + $0x60] sm:$0xff] %vm205, %v3194
      %3227 = vst.msk [vmem:[#allocation4 + $0x68] sm:$0xff] %vm205, %v3195
      %3228 = vst.msk [vmem:[#allocation4 + $0x70] sm:$0xff] %vm205, %v3196
      %3229 = vst.msk [vmem:[#allocation4 + $0x78] sm:$0xff] %vm205, %v3197
      %3230 = vst.msk [vmem:[#allocation4 + $0x80] sm:$0xff] %vm205, %v3198
      %3231 = vst.msk [vmem:[#allocation4 + $0x88] sm:$0xff] %vm205, %v3199
      %3232 = vst.msk [vmem:[#allocation4 + $0x90] sm:$0xff] %vm205, %v3200
      %3233 = vst.msk [vmem:[#allocation4 + $0x98] sm:$0xff] %vm205, %v3201
      %3234 = vst.msk [vmem:[#allocation4 + $0xa0] sm:$0xff] %vm205, %v3202
      %3235 = vst.msk [vmem:[#allocation4 + $0xa8] sm:$0xff] %vm205, %v3203
      %3236 = vst.msk [vmem:[#allocation4 + $0xb0] sm:$0xff] %vm205, %v3204
      %3237 = vst.msk [vmem:[#allocation4 + $0xb8] sm:$0xff] %vm205, %v3205
      %3238 = vst.msk [vmem:[#allocation4 + $0xc0] sm:$0xff] %vm205, %v3206
      %3239 = vst.msk [vmem:[#allocation4 + $0xc8] sm:$0xff] %vm205, %v3207
      %3240 = vst.msk [vmem:[#allocation4 + $0xd0] sm:$0xff] %vm205, %v3208
      %3241 = vst.msk [vmem:[#allocation4 + $0xd8] sm:$0xff] %vm205, %v3209
      %3242 = vst.msk [vmem:[#allocation4 + $0xe0] sm:$0xff] %vm205, %v3210
      %3243 = vst.msk [vmem:[#allocation4 + $0xe8] sm:$0xff] %vm205, %v3211
      %3244 = vst.msk [vmem:[#allocation4 + $0xf0] sm:$0xff] %vm205, %v3212
      %3245 = vst.msk [vmem:[#allocation4 + $0xf8] sm:$0xff] %vm205, %v3213
      %v3246 = vld [vmem:[#allocation4] sm:$0xff]
      %v3247 = vld [vmem:[#allocation4 + $0x8] sm:$0xff]
      %v3248 = vld [vmem:[#allocation4 + $0x10] sm:$0xff]
      %v3249 = vld [vmem:[#allocation4 + $0x18] sm:$0xff]
      %v3250 = vld [vmem:[#allocation4 + $0x20] sm:$0xff]
      %v3251 = vld [vmem:[#allocation4 + $0x28] sm:$0xff]
      %v3252 = vld [vmem:[#allocation4 + $0x30] sm:$0xff]
      %v3253 = vld [vmem:[#allocation4 + $0x38] sm:$0xff]
      %v3254 = vld [vmem:[#allocation4 + $0x40] sm:$0xff]
      %v3255 = vld [vmem:[#allocation4 + $0x48] sm:$0xff]
      %v3256 = vld [vmem:[#allocation4 + $0x50] sm:$0xff]
      %v3257 = vld [vmem:[#allocation4 + $0x58] sm:$0xff]
      %v3258 = vld [vmem:[#allocation4 + $0x60] sm:$0xff]
      %v3259 = vld [vmem:[#allocation4 + $0x68] sm:$0xff]
      %v3260 = vld [vmem:[#allocation4 + $0x70] sm:$0xff]
      %v3261 = vld [vmem:[#allocation4 + $0x78] sm:$0xff]
      %v3262 = vld [vmem:[#allocation4 + $0x80] sm:$0xff]
      %v3263 = vld [vmem:[#allocation4 + $0x88] sm:$0xff]
      %v3264 = vld [vmem:[#allocation4 + $0x90] sm:$0xff]
      %v3265 = vld [vmem:[#allocation4 + $0x98] sm:$0xff]
      %v3266 = vld [vmem:[#allocation4 + $0xa0] sm:$0xff]
      %v3267 = vld [vmem:[#allocation4 + $0xa8] sm:$0xff]
      %v3268 = vld [vmem:[#allocation4 + $0xb0] sm:$0xff]
      %v3269 = vld [vmem:[#allocation4 + $0xb8] sm:$0xff]
      %v3270 = vld [vmem:[#allocation4 + $0xc0] sm:$0xff]
      %v3271 = vld [vmem:[#allocation4 + $0xc8] sm:$0xff]
      %v3272 = vld [vmem:[#allocation4 + $0xd0] sm:$0xff]
      %v3273 = vld [vmem:[#allocation4 + $0xd8] sm:$0xff]
      %v3274 = vld [vmem:[#allocation4 + $0xe0] sm:$0xff]
      %v3275 = vld [vmem:[#allocation4 + $0xe8] sm:$0xff]
      %v3276 = vld [vmem:[#allocation4 + $0xf0] sm:$0xff]
      %v3277 = vld [vmem:[#allocation4 + $0xf8] sm:$0xff]
      %v3278 = vsel %vm205, %v3246, 0.0
      %v3279 = vsel %vm205, %v3247, 0.0
      %v3280 = vadd.f32 %v3278, %v3279
      %v3281 = vsel %vm205, %v3248, 0.0
      %v3282 = vadd.f32 %v3280, %v3281
      %v3283 = vsel %vm205, %v3249, 0.0
      %v3284 = vadd.f32 %v3282, %v3283
      %v3285 = vsel %vm205, %v3250, 0.0
      %v3286 = vadd.f32 %v3284, %v3285
      %v3287 = vsel %vm205, %v3251, 0.0
      %v3288 = vadd.f32 %v3286, %v3287
      %v3289 = vsel %vm205, %v3252, 0.0
      %v3290 = vadd.f32 %v3288, %v3289
      %v3291 = vsel %vm205, %v3253, 0.0
      %v3292 = vadd.f32 %v3290, %v3291
      %v3293 = vsel %vm205, %v3254, 0.0
      %v3294 = vadd.f32 %v3292, %v3293
      %v3295 = vsel %vm205, %v3255, 0.0
      %v3296 = vadd.f32 %v3294, %v3295
      %v3297 = vsel %vm205, %v3256, 0.0
      %v3298 = vadd.f32 %v3296, %v3297
      %v3299 = vsel %vm205, %v3257, 0.0
      %v3300 = vadd.f32 %v3298, %v3299
      %v3301 = vsel %vm205, %v3258, 0.0
      %v3302 = vadd.f32 %v3300, %v3301
      %v3303 = vsel %vm205, %v3259, 0.0
      %v3304 = vadd.f32 %v3302, %v3303
      %v3305 = vsel %vm205, %v3260, 0.0
      %v3306 = vadd.f32 %v3304, %v3305
      %v3307 = vsel %vm205, %v3261, 0.0
      %v3308 = vadd.f32 %v3306, %v3307
      %v3309 = vsel %vm205, %v3262, 0.0
      %v3310 = vadd.f32 %v3308, %v3309
      %v3311 = vsel %vm205, %v3263, 0.0
      %v3312 = vadd.f32 %v3310, %v3311
      %v3313 = vsel %vm205, %v3264, 0.0
      %v3314 = vadd.f32 %v3312, %v3313
      %v3315 = vsel %vm205, %v3265, 0.0
      %v3316 = vadd.f32 %v3314, %v3315
      %v3317 = vsel %vm205, %v3266, 0.0
      %v3318 = vadd.f32 %v3316, %v3317
      %v3319 = vsel %vm205, %v3267, 0.0
      %v3320 = vadd.f32 %v3318, %v3319
      %v3321 = vsel %vm205, %v3268, 0.0
      %v3322 = vadd.f32 %v3320, %v3321
      %v3323 = vsel %vm205, %v3269, 0.0
      %v3324 = vadd.f32 %v3322, %v3323
      %v3325 = vsel %vm205, %v3270, 0.0
      %v3326 = vadd.f32 %v3324, %v3325
      %v3327 = vsel %vm205, %v3271, 0.0
      %v3328 = vadd.f32 %v3326, %v3327
      %v3329 = vsel %vm205, %v3272, 0.0
      %v3330 = vadd.f32 %v3328, %v3329
      %v3331 = vsel %vm205, %v3273, 0.0
      %v3332 = vadd.f32 %v3330, %v3331
      %v3333 = vsel %vm205, %v3274, 0.0
      %v3334 = vadd.f32 %v3332, %v3333
      %v3335 = vsel %vm205, %v3275, 0.0
      %v3336 = vadd.f32 %v3334, %v3335
      %v3337 = vsel %vm205, %v3276, 0.0
      %v3338 = vadd.f32 %v3336, %v3337
      %v3339 = vsel %vm205, %v3277, 0.0
      %v3340 = vadd.f32 %v3338, %v3339
      %v3341 = vrot.slane %v3340, 4
      %v3342 = vadd.f32 %v3340, %v3341
      %v3343 = vrot.slane %v3342, 2
      %v3344 = vadd.f32 %v3342, %v3343
      %v3345 = vrot.slane %v3344, 1
      %v3346 = vadd.f32 %v3344, %v3345
      %v3347 = vmul.f32 %v3246, %v3246
      %v3348 = vmul.f32 %v3247, %v3247
      %v3349 = vmul.f32 %v3248, %v3248
      %v3350 = vmul.f32 %v3249, %v3249
      %v3351 = vmul.f32 %v3250, %v3250
      %v3352 = vmul.f32 %v3251, %v3251
      %v3353 = vmul.f32 %v3252, %v3252
      %v3354 = vmul.f32 %v3253, %v3253
      %v3355 = vmul.f32 %v3254, %v3254
      %v3356 = vmul.f32 %v3255, %v3255
      %v3357 = vmul.f32 %v3256, %v3256
      %v3358 = vmul.f32 %v3257, %v3257
      %v3359 = vmul.f32 %v3258, %v3258
      %v3360 = vmul.f32 %v3259, %v3259
      %v3361 = vmul.f32 %v3260, %v3260
      %v3362 = vmul.f32 %v3261, %v3261
      %v3363 = vmul.f32 %v3262, %v3262
      %v3364 = vmul.f32 %v3263, %v3263
      %v3365 = vmul.f32 %v3264, %v3264
      %v3366 = vmul.f32 %v3265, %v3265
      %v3367 = vmul.f32 %v3266, %v3266
      %v3368 = vmul.f32 %v3267, %v3267
      %v3369 = vmul.f32 %v3268, %v3268
      %v3370 = vmul.f32 %v3269, %v3269
      %v3371 = vmul.f32 %v3270, %v3270
      %v3372 = vmul.f32 %v3271, %v3271
      %v3373 = vmul.f32 %v3272, %v3272
      %v3374 = vmul.f32 %v3273, %v3273
      %v3375 = vmul.f32 %v3274, %v3274
      %v3376 = vmul.f32 %v3275, %v3275
      %v3377 = vmul.f32 %v3276, %v3276
      %v3378 = vmul.f32 %v3277, %v3277
      %v3379 = vsel %vm205, %v3347, 0.0
      %v3380 = vsel %vm205, %v3348, 0.0
      %v3381 = vadd.f32 %v3379, %v3380
      %v3382 = vsel %vm205, %v3349, 0.0
      %v3383 = vadd.f32 %v3381, %v3382
      %v3384 = vsel %vm205, %v3350, 0.0
      %v3385 = vadd.f32 %v3383, %v3384
      %v3386 = vsel %vm205, %v3351, 0.0
      %v3387 = vadd.f32 %v3385, %v3386
      %v3388 = vsel %vm205, %v3352, 0.0
      %v3389 = vadd.f32 %v3387, %v3388
      %v3390 = vsel %vm205, %v3353, 0.0
      %v3391 = vadd.f32 %v3389, %v3390
      %v3392 = vsel %vm205, %v3354, 0.0
      %v3393 = vadd.f32 %v3391, %v3392
      %v3394 = vsel %vm205, %v3355, 0.0
      %v3395 = vadd.f32 %v3393, %v3394
      %v3396 = vsel %vm205, %v3356, 0.0
      %v3397 = vadd.f32 %v3395, %v3396
      %v3398 = vsel %vm205, %v3357, 0.0
      %v3399 = vadd.f32 %v3397, %v3398
      %v3400 = vsel %vm205, %v3358, 0.0
      %v3401 = vadd.f32 %v3399, %v3400
      %v3402 = vsel %vm205, %v3359, 0.0
      %v3403 = vadd.f32 %v3401, %v3402
      %v3404 = vsel %vm205, %v3360, 0.0
      %v3405 = vadd.f32 %v3403, %v3404
      %v3406 = vsel %vm205, %v3361, 0.0
      %v3407 = vadd.f32 %v3405, %v3406
      %v3408 = vsel %vm205, %v3362, 0.0
      %v3409 = vadd.f32 %v3407, %v3408
      %v3410 = vsel %vm205, %v3363, 0.0
      %v3411 = vadd.f32 %v3409, %v3410
      %v3412 = vsel %vm205, %v3364, 0.0
      %v3413 = vadd.f32 %v3411, %v3412
      %v3414 = vsel %vm205, %v3365, 0.0
      %v3415 = vadd.f32 %v3413, %v3414
      %v3416 = vsel %vm205, %v3366, 0.0
      %v3417 = vadd.f32 %v3415, %v3416
      %v3418 = vsel %vm205, %v3367, 0.0
      %v3419 = vadd.f32 %v3417, %v3418
      %v3420 = vsel %vm205, %v3368, 0.0
      %v3421 = vadd.f32 %v3419, %v3420
      %v3422 = vsel %vm205, %v3369, 0.0
      %v3423 = vadd.f32 %v3421, %v3422
      %v3424 = vsel %vm205, %v3370, 0.0
      %v3425 = vadd.f32 %v3423, %v3424
      %v3426 = vsel %vm205, %v3371, 0.0
      %v3427 = vadd.f32 %v3425, %v3426
      %v3428 = vsel %vm205, %v3372, 0.0
      %v3429 = vadd.f32 %v3427, %v3428
      %v3430 = vsel %vm205, %v3373, 0.0
      %v3431 = vadd.f32 %v3429, %v3430
      %v3432 = vsel %vm205, %v3374, 0.0
      %v3433 = vadd.f32 %v3431, %v3432
      %v3434 = vsel %vm205, %v3375, 0.0
      %v3435 = vadd.f32 %v3433, %v3434
      %v3436 = vsel %vm205, %v3376, 0.0
      %v3437 = vadd.f32 %v3435, %v3436
      %v3438 = vsel %vm205, %v3377, 0.0
      %v3439 = vadd.f32 %v3437, %v3438
      %v3440 = vsel %vm205, %v3378, 0.0
      %v3441 = vadd.f32 %v3439, %v3440
      %v3442 = vrot.slane %v3441, 4
      %v3443 = vadd.f32 %v3441, %v3442
      %v3444 = vrot.slane %v3443, 2
      %v3445 = vadd.f32 %v3443, %v3444
      %v3446 = vrot.slane %v3445, 1
      %v3447 = vadd.f32 %v3445, %v3446
      %v3448 = vmul.f32 %v3346, 0.00390625
      %v3449 = vmul.f32 %v3447, 0.00390625
      %v3450 = vmul.f32 %v3448, %v3448
      %v3451 = vsub.f32 %v3449, %v3450
      %v3452 = vmax.f32 %v3451, 0.0
      %v3453 = vsub.f32 %v3246, %v3448
      %v3454 = vsub.f32 %v3247, %v3448
      %v3455 = vsub.f32 %v3248, %v3448
      %v3456 = vsub.f32 %v3249, %v3448
      %v3457 = vsub.f32 %v3250, %v3448
      %v3458 = vsub.f32 %v3251, %v3448
      %v3459 = vsub.f32 %v3252, %v3448
      %v3460 = vsub.f32 %v3253, %v3448
      %v3461 = vsub.f32 %v3254, %v3448
      %v3462 = vsub.f32 %v3255, %v3448
      %v3463 = vsub.f32 %v3256, %v3448
      %v3464 = vsub.f32 %v3257, %v3448
      %v3465 = vsub.f32 %v3258, %v3448
      %v3466 = vsub.f32 %v3259, %v3448
      %v3467 = vsub.f32 %v3260, %v3448
      %v3468 = vsub.f32 %v3261, %v3448
      %v3469 = vsub.f32 %v3262, %v3448
      %v3470 = vsub.f32 %v3263, %v3448
      %v3471 = vsub.f32 %v3264, %v3448
      %v3472 = vsub.f32 %v3265, %v3448
      %v3473 = vsub.f32 %v3266, %v3448
      %v3474 = vsub.f32 %v3267, %v3448
      %v3475 = vsub.f32 %v3268, %v3448
      %v3476 = vsub.f32 %v3269, %v3448
      %v3477 = vsub.f32 %v3270, %v3448
      %v3478 = vsub.f32 %v3271, %v3448
      %v3479 = vsub.f32 %v3272, %v3448
      %v3480 = vsub.f32 %v3273, %v3448
      %v3481 = vsub.f32 %v3274, %v3448
      %v3482 = vsub.f32 %v3275, %v3448
      %v3483 = vsub.f32 %v3276, %v3448
      %v3484 = vsub.f32 %v3277, %v3448
      %v3485 = vadd.f32 %v3452, 1e-05
      %v3486 = vrsqrt.pop %v3485
      %v3487 = vmul.f32 %v3453, %v3486
      %v3488 = vmul.f32 %v3454, %v3486
      %v3489 = vmul.f32 %v3455, %v3486
      %v3490 = vmul.f32 %v3456, %v3486
      %v3491 = vmul.f32 %v3457, %v3486
      %v3492 = vmul.f32 %v3458, %v3486
      %v3493 = vmul.f32 %v3459, %v3486
      %v3494 = vmul.f32 %v3460, %v3486
      %v3495 = vmul.f32 %v3461, %v3486
      %v3496 = vmul.f32 %v3462, %v3486
      %v3497 = vmul.f32 %v3463, %v3486
      %v3498 = vmul.f32 %v3464, %v3486
      %v3499 = vmul.f32 %v3465, %v3486
      %v3500 = vmul.f32 %v3466, %v3486
      %v3501 = vmul.f32 %v3467, %v3486
      %v3502 = vmul.f32 %v3468, %v3486
      %v3503 = vmul.f32 %v3469, %v3486
      %v3504 = vmul.f32 %v3470, %v3486
      %v3505 = vmul.f32 %v3471, %v3486
      %v3506 = vmul.f32 %v3472, %v3486
      %v3507 = vmul.f32 %v3473, %v3486
      %v3508 = vmul.f32 %v3474, %v3486
      %v3509 = vmul.f32 %v3475, %v3486
      %v3510 = vmul.f32 %v3476, %v3486
      %v3511 = vmul.f32 %v3477, %v3486
      %v3512 = vmul.f32 %v3478, %v3486
      %v3513 = vmul.f32 %v3479, %v3486
      %v3514 = vmul.f32 %v3480, %v3486
      %v3515 = vmul.f32 %v3481, %v3486
      %v3516 = vmul.f32 %v3482, %v3486
      %v3517 = vmul.f32 %v3483, %v3486
      %v3518 = vmul.f32 %v3484, %v3486
      %v3519 = vld [vmem:[%s165] sm:$0xff]
      %v3520 = vld [vmem:[%s165 + $0x8] sm:$0xff]
      %v3521 = vld [vmem:[%s165 + $0x10] sm:$0xff]
      %v3522 = vld [vmem:[%s165 + $0x18] sm:$0xff]
      %v3523 = vld [vmem:[%s165 + $0x20] sm:$0xff]
      %v3524 = vld [vmem:[%s165 + $0x28] sm:$0xff]
      %v3525 = vld [vmem:[%s165 + $0x30] sm:$0xff]
      %v3526 = vld [vmem:[%s165 + $0x38] sm:$0xff]
      %v3527 = vld [vmem:[%s165 + $0x40] sm:$0xff]
      %v3528 = vld [vmem:[%s165 + $0x48] sm:$0xff]
      %v3529 = vld [vmem:[%s165 + $0x50] sm:$0xff]
      %v3530 = vld [vmem:[%s165 + $0x58] sm:$0xff]
      %v3531 = vld [vmem:[%s165 + $0x60] sm:$0xff]
      %v3532 = vld [vmem:[%s165 + $0x68] sm:$0xff]
      %v3533 = vld [vmem:[%s165 + $0x70] sm:$0xff]
      %v3534 = vld [vmem:[%s165 + $0x78] sm:$0xff]
      %v3535 = vld [vmem:[%s165 + $0x80] sm:$0xff]
      %v3536 = vld [vmem:[%s165 + $0x88] sm:$0xff]
      %v3537 = vld [vmem:[%s165 + $0x90] sm:$0xff]
      %v3538 = vld [vmem:[%s165 + $0x98] sm:$0xff]
      %v3539 = vld [vmem:[%s165 + $0xa0] sm:$0xff]
      %v3540 = vld [vmem:[%s165 + $0xa8] sm:$0xff]
      %v3541 = vld [vmem:[%s165 + $0xb0] sm:$0xff]
      %v3542 = vld [vmem:[%s165 + $0xb8] sm:$0xff]
      %v3543 = vld [vmem:[%s165 + $0xc0] sm:$0xff]
      %v3544 = vld [vmem:[%s165 + $0xc8] sm:$0xff]
      %v3545 = vld [vmem:[%s165 + $0xd0] sm:$0xff]
      %v3546 = vld [vmem:[%s165 + $0xd8] sm:$0xff]
      %v3547 = vld [vmem:[%s165 + $0xe0] sm:$0xff]
      %v3548 = vld [vmem:[%s165 + $0xe8] sm:$0xff]
      %v3549 = vld [vmem:[%s165 + $0xf0] sm:$0xff]
      %v3550 = vld [vmem:[%s165 + $0xf8] sm:$0xff]
      %v3551 = vadd.f32 %v3519, %v3487
      %v3552 = vadd.f32 %v3520, %v3488
      %v3553 = vadd.f32 %v3521, %v3489
      %v3554 = vadd.f32 %v3522, %v3490
      %v3555 = vadd.f32 %v3523, %v3491
      %v3556 = vadd.f32 %v3524, %v3492
      %v3557 = vadd.f32 %v3525, %v3493
      %v3558 = vadd.f32 %v3526, %v3494
      %v3559 = vadd.f32 %v3527, %v3495
      %v3560 = vadd.f32 %v3528, %v3496
      %v3561 = vadd.f32 %v3529, %v3497
      %v3562 = vadd.f32 %v3530, %v3498
      %v3563 = vadd.f32 %v3531, %v3499
      %v3564 = vadd.f32 %v3532, %v3500
      %v3565 = vadd.f32 %v3533, %v3501
      %v3566 = vadd.f32 %v3534, %v3502
      %v3567 = vadd.f32 %v3535, %v3503
      %v3568 = vadd.f32 %v3536, %v3504
      %v3569 = vadd.f32 %v3537, %v3505
      %v3570 = vadd.f32 %v3538, %v3506
      %v3571 = vadd.f32 %v3539, %v3507
      %v3572 = vadd.f32 %v3540, %v3508
      %v3573 = vadd.f32 %v3541, %v3509
      %v3574 = vadd.f32 %v3542, %v3510
      %v3575 = vadd.f32 %v3543, %v3511
      %v3576 = vadd.f32 %v3544, %v3512
      %v3577 = vadd.f32 %v3545, %v3513
      %v3578 = vadd.f32 %v3546, %v3514
      %v3579 = vadd.f32 %v3547, %v3515
      %v3580 = vadd.f32 %v3548, %v3516
      %v3581 = vadd.f32 %v3549, %v3517
      %v3582 = vadd.f32 %v3550, %v3518
      %3583 = vst.msk [vmem:[%s170] sm:$0xff] %vm205, %v3551
      %3584 = vst.msk [vmem:[%s170 + $0x8] sm:$0xff] %vm205, %v3552
      %3585 = vst.msk [vmem:[%s170 + $0x10] sm:$0xff] %vm205, %v3553
      %3586 = vst.msk [vmem:[%s170 + $0x18] sm:$0xff] %vm205, %v3554
      %3587 = vst.msk [vmem:[%s170 + $0x20] sm:$0xff] %vm205, %v3555
      %3588 = vst.msk [vmem:[%s170 + $0x28] sm:$0xff] %vm205, %v3556
      %3589 = vst.msk [vmem:[%s170 + $0x30] sm:$0xff] %vm205, %v3557
      %3590 = vst.msk [vmem:[%s170 + $0x38] sm:$0xff] %vm205, %v3558
      %3591 = vst.msk [vmem:[%s170 + $0x40] sm:$0xff] %vm205, %v3559
      %3592 = vst.msk [vmem:[%s170 + $0x48] sm:$0xff] %vm205, %v3560
      %3593 = vst.msk [vmem:[%s170 + $0x50] sm:$0xff] %vm205, %v3561
      %3594 = vst.msk [vmem:[%s170 + $0x58] sm:$0xff] %vm205, %v3562
      %3595 = vst.msk [vmem:[%s170 + $0x60] sm:$0xff] %vm205, %v3563
      %3596 = vst.msk [vmem:[%s170 + $0x68] sm:$0xff] %vm205, %v3564
      %3597 = vst.msk [vmem:[%s170 + $0x70] sm:$0xff] %vm205, %v3565
      %3598 = vst.msk [vmem:[%s170 + $0x78] sm:$0xff] %vm205, %v3566
      %3599 = vst.msk [vmem:[%s170 + $0x80] sm:$0xff] %vm205, %v3567
      %3600 = vst.msk [vmem:[%s170 + $0x88] sm:$0xff] %vm205, %v3568
      %3601 = vst.msk [vmem:[%s170 + $0x90] sm:$0xff] %vm205, %v3569
      %3602 = vst.msk [vmem:[%s170 + $0x98] sm:$0xff] %vm205, %v3570
      %3603 = vst.msk [vmem:[%s170 + $0xa0] sm:$0xff] %vm205, %v3571
      %3604 = vst.msk [vmem:[%s170 + $0xa8] sm:$0xff] %vm205, %v3572
      %3605 = vst.msk [vmem:[%s170 + $0xb0] sm:$0xff] %vm205, %v3573
      %3606 = vst.msk [vmem:[%s170 + $0xb8] sm:$0xff] %vm205, %v3574
      %3607 = vst.msk [vmem:[%s170 + $0xc0] sm:$0xff] %vm205, %v3575
      %3608 = vst.msk [vmem:[%s170 + $0xc8] sm:$0xff] %vm205, %v3576
      %3609 = vst.msk [vmem:[%s170 + $0xd0] sm:$0xff] %vm205, %v3577
      %3610 = vst.msk [vmem:[%s170 + $0xd8] sm:$0xff] %vm205, %v3578
      %3611 = vst.msk [vmem:[%s170 + $0xe0] sm:$0xff] %vm205, %v3579
      %3612 = vst.msk [vmem:[%s170 + $0xe8] sm:$0xff] %vm205, %v3580
      %3613 = vst.msk [vmem:[%s170 + $0xf0] sm:$0xff] %vm205, %v3581
      %3614 = vst.msk [vmem:[%s170 + $0xf8] sm:$0xff] %vm205, %v3582
      %p3615 = scmp.lt.s32.totalorder %s14, 1
      %s3616 = scalar_select %p3615, %s14, 1
      %s3617 = smul.addr %s3616, 32
      %s3618 = smul.addr %s3617, 8
      %s3619 = scalar_lea.vmem %s3, %s3618
      // Predicated region
      $region33: #{tpu_custom_call.1} parent=31 // pred_check
        %p3620 = pneg %p100
      $region34: #{tpu_custom_call.1} parent=31 // pred_check_branch
        %3622 = sbr.rel (%p3620) target = $region36
      $region35: #{tpu_custom_call.1} parent=31 // pred_region
        _
      $region36: #{tpu_custom_call.1} parent=31 // pred_fallthru
        _
    $region32: #{tpu_custom_call.1} parent=5 // pred_fallthru
      _
    %p3623 = scmp.le.s32.totalorder 2, %s9
    // Predicated region
    $region37: #{tpu_custom_call.1} parent=5 // pred_check
      %p3624 = pneg %p3623
    $region38: #{tpu_custom_call.1} parent=5 // pred_check_branch
      %3626 = sbr.rel (%p3624) target = $region40
    $region39: #{tpu_custom_call.1} parent=5 // pred_region
      %s3627 = ssub.s32 %s9, 2
      // Predicated region
      $region41: #{tpu_custom_call.1} parent=39 // pred_check
        %p3628 = pneg %p106
      $region42: #{tpu_custom_call.1} parent=39 // pred_check_branch
        %3630 = sbr.rel (%p3628) target = $region44
      $region43: #{tpu_custom_call.1} parent=39 // pred_region
        %p3631 = scmp.lt.s32.totalorder %s15, 1
        %s3632 = scalar_select %p3631, %s15, 1
        %s3633 = smul.addr %s3632, 32
        %s3634 = smul.addr %s3633, 8
        %s3635 = scalar_lea.vmem %s3, %s3634
      $region44: #{tpu_custom_call.1} parent=39 // pred_fallthru
        _
    $region40: #{tpu_custom_call.1} parent=5 // pred_fallthru
      _
  $region6: #{tpu_custom_call.1} parent=0 // loop_footer
    %s13 = sadd.s32 1, %s9
  $region7: #{tpu_custom_call.1} parent=0 // loop_footer_branch
    %8 = sbr.rel target = $region3
  $region8: #{tpu_custom_call.1} parent=0 // loop_exit
    _

</llo_original>
